<compile_context>
chip_gen: v7x
topology: tpu7x:2x2x1
jax: 0.10.0
libtpu: 0.0.40
codegen_flags: <defaults>
</compile_context>

<pallas_src>
import jax
import jax.numpy as jnp
from jax import lax
from jax.experimental import pallas as pl
from jax.experimental.pallas import tpu as pltpu


_LANE_TARGET = 128          # fold rows into lanes up to this many input lanes
_TARGET_OUT_BYTES = 3 << 20  # ~3 MiB of output per part per grid step
_MIN_GRID_STEPS = 8          # keep >= 8 steps for big tensors (v7x megacore)


def _cdiv(a, b):
    return -(-a // b)


# --------------------------------------------------------------------------
# One-hot replication matrices (built once in the wrapper, resident in VMEM).
# --------------------------------------------------------------------------

def _folded_repeat_matrix(w, s, g):
    """(g*w, g*s*s*w) block-diagonal one-hot.

    Folded input row = g original rows of width w back-to-back.  Folded output
    row = for each original row k: its s replicated output rows of width s*w
    back-to-back.  R[p, q] = 1 iff input lane p feeds output lane q, i.e.
      q // (s*s*w) == p // w        (same original row k)
      (q % (s*w)) // s == p % w     (column interleave, any copy a)
    """
    k_lanes = g * w
    m_lanes = g * s * s * w
    p = jnp.arange(k_lanes, dtype=jnp.int32)
    q = jnp.arange(m_lanes, dtype=jnp.int32)
    same_row = (q[None, :] // (s * s * w)) == (p[:, None] // w)
    same_col = ((q[None, :] % (s * w)) // s) == (p[:, None] % w)
    return (same_row & same_col).astype(jnp.float32)


def _col_repeat_matrix(w, s):
    """(w, s*w) one-hot: R[k, j] = 1 iff j // s == k (pure lane interleave)."""
    k = jnp.arange(w, dtype=jnp.int32)
    j = jnp.arange(s * w, dtype=jnp.int32)
    return (j[None, :] // s == k[:, None]).astype(jnp.float32)


# --------------------------------------------------------------------------
# Block sizing helpers.
# --------------------------------------------------------------------------

def _choose_fold(total_rows, w):
    """Largest g dividing total_rows with g*w <= _LANE_TARGET."""
    g_max = max(1, _LANE_TARGET // w)
    for g in range(min(g_max, total_rows), 0, -1):
        if total_rows % g == 0:
            return g
    return 1


def _choose_block_rows(total_rows, out_row_bytes,
                       target_out_bytes=_TARGET_OUT_BYTES,
                       min_steps=_MIN_GRID_STEPS):
    """(block_rows, grid_len): ~target bytes/step, >=8 steps for big inputs,
    never a whole-array block for large tensors (ragged last block instead)."""
    cap = max(1, target_out_bytes // out_row_bytes)
    if total_rows >= min_steps * 8:
        cap = min(cap, _cdiv(total_rows, min_steps))
    if cap >= total_rows:
        return total_rows, 1
    best = 0
    for br in range(min(cap, total_rows), 7, -1):
        if total_rows % br == 0 and br % 8 == 0:
            best = br
            break
    if best >= max(8, cap // 2):
        return best, total_rows // best
    # Ragged fallback: Pallas masks the partial last block.
    br = min(max(8, (cap // 8) * 8), total_rows)
    return br, _cdiv(total_rows, br)


# --------------------------------------------------------------------------
# Kernels.
# --------------------------------------------------------------------------

def _folded_kernel(r_ref, xr_ref, xi_ref, or_ref, oi_ref):
    # r_ref : (K, M)  resident block-diagonal one-hot (K = g*W, M = g*s*s*W)
    # x*_ref: (BR, K) lane-dense folded input rows
    # o*_ref: (BR, M) lane-dense folded output rows — single unmasked store.
    r = r_ref[...]
    or_ref[...] = jnp.dot(xr_ref[...], r,
                          precision=lax.Precision.HIGHEST,
                          preferred_element_type=jnp.float32)
    oi_ref[...] = jnp.dot(xi_ref[...], r,
                          precision=lax.Precision.HIGHEST,
                          preferred_element_type=jnp.float32)


def _wide_kernel(r_ref, xr_ref, xi_ref, or_ref, oi_ref):
    # W > 128 path: r_ref (Wc, s*Wc); x*_ref (BR, Wc); o*_ref (BR, s, s*Wc).
    r = r_ref[...]
    for x_ref, o_ref in ((xr_ref, or_ref), (xi_ref, oi_ref)):
        xc = jnp.dot(x_ref[...], r,
                     precision=lax.Precision.HIGHEST,
                     preferred_element_type=jnp.float32)      # (BR, s*Wc)
        # Row replication is a free sublane broadcast into the 3-D block.
        o_ref[...] = jnp.broadcast_to(xc[:, None, :], o_ref.shape)


# --------------------------------------------------------------------------
# pallas_call wrappers.
# --------------------------------------------------------------------------

def _upsample_folded(rg, xr_f, xi_f):
    """xr_f, xi_f: (T/g, g*W) f32 -> two (T/g, g*s*s*W) f32 arrays."""
    tf, k = xr_f.shape
    m = rg.shape[1]
    br, nrow = _choose_block_rows(tf, m * 4)

    in_spec = pl.BlockSpec((br, k), lambda i: (i, 0))
    out_spec = pl.BlockSpec((br, m), lambda i: (i, 0))
    r_spec = pl.BlockSpec((k, m), lambda i: (0, 0))          # resident constant

    out_sds = jax.ShapeDtypeStruct((tf, m), jnp.float32)
    flops = 2 * 2 * tf * k * m
    bytes_accessed = 4 * (2 * tf * k + 2 * tf * m + k * m)

    return pl.pallas_call(
        _folded_kernel,
        out_shape=(out_sds, out_sds),
        grid_spec=pltpu.PrefetchScalarGridSpec(
            num_scalar_prefetch=0,
            grid=(nrow,),
            in_specs=[r_spec, in_spec, in_spec],
            out_specs=(out_spec, out_spec),
        ),
        compiler_params=pltpu.CompilerParams(
            dimension_semantics=("parallel",)),
        cost_estimate=pl.CostEstimate(
            flops=flops, transcendentals=0, bytes_accessed=bytes_accessed),
    )(rg, xr_f, xi_f)


def _upsample_wide(rc, xr2d, xi2d, s, w):
    """W > 128: xr2d, xi2d (T, W) f32 -> two (T, s, s*W) f32 arrays."""
    t = xr2d.shape[0]
    wc = rc.shape[0]
    ncol = _cdiv(w, wc)
    br, nrow = _choose_block_rows(t, s * s * wc * 4)

    in_spec = pl.BlockSpec((br, wc), lambda i, c: (i, c))
    out_spec = pl.BlockSpec((br, s, s * wc), lambda i, c: (i, 0, c))
    r_spec = pl.BlockSpec((wc, s * wc), lambda i, c: (0, 0))

    out_sds = jax.ShapeDtypeStruct((t, s, s * w), jnp.float32)
    flops = 2 * 2 * t * ncol * wc * (s * wc)
    bytes_accessed = 4 * (2 * t * w + 2 * t * s * s * w + wc * s * wc)

    return pl.pallas_call(
        _wide_kernel,
        out_shape=(out_sds, out_sds),
        grid_spec=pltpu.PrefetchScalarGridSpec(
            num_scalar_prefetch=0,
            grid=(nrow, ncol),
            in_specs=[r_spec, in_spec, in_spec],
            out_specs=(out_spec, out_spec),
        ),
        compiler_params=pltpu.CompilerParams(
            dimension_semantics=("parallel", "parallel")),
        cost_estimate=pl.CostEstimate(
            flops=flops, transcendentals=0, bytes_accessed=bytes_accessed),
    )(rc, xr2d, xi2d)


# --------------------------------------------------------------------------
# Public op (matches torch ComplexUpsample.forward).
# --------------------------------------------------------------------------

def complex_upsample(x, scale_factor=2):
    """x: complex64 (N, C, H, W) -> complex64 (N, C, H*s, W*s), nearest."""
    n, c, h, w = x.shape
    s = int(scale_factor)
    t = n * c * h

    # TODO(synk): no complex64<->float32 bitcast exists in JAX/XLA and Mosaic
    # has no complex dtype, so the planar split and the lax.complex recombine
    # stay as plain-JAX HBM passes.  Return (yr, yi) planar if the consumer
    # allows, to drop these passes entirely.
    xr = jnp.real(x).astype(jnp.float32).reshape(t, w)
    xi = jnp.imag(x).astype(jnp.float32).reshape(t, w)

    if w <= _LANE_TARGET:
        g = _choose_fold(t, w)
        rg = _folded_repeat_matrix(w, s, g)
        yr, yi = _upsample_folded(rg,
                                  xr.reshape(t // g, g * w),
                                  xi.reshape(t // g, g * w))
    else:
        rc = _col_repeat_matrix(_LANE_TARGET, s)
        yr, yi = _upsample_wide(rc, xr, xi, s, w)

    yr = yr.reshape(n, c, h * s, w * s)
    yi = yi.reshape(n, c, h * s, w * s)
    return lax.complex(yr, yi)


def _reference(x, scale_factor=2):
    s = int(scale_factor)
    yr = jnp.repeat(jnp.repeat(jnp.real(x), s, axis=-2), s, axis=-1)
    yi = jnp.repeat(jnp.repeat(jnp.imag(x), s, axis=-2), s, axis=-1)
    return lax.complex(yr, yi)


if __name__ == "__main__":
    key = jax.random.PRNGKey(0)
    kr, ki = jax.random.split(key)
    N, C, H, W = 2, 4, 16, 16
    x = lax.complex(
        jax.random.normal(kr, (N, C, H, W), dtype=jnp.float32),
        jax.random.normal(ki, (N, C, H, W), dtype=jnp.float32),
    )

    out = complex_upsample(x, scale_factor=2)
    out = jax.block_until_ready(out)

    ref = _reference(x, scale_factor=2)
    assert out.shape == (N, C, 2 * H, 2 * W), out.shape
    assert out.dtype == jnp.complex64, out.dtype
    assert jnp.allclose(out, ref), "mismatch vs reference nearest upsample"

    print("KERNEL_OK")
</pallas_src>

<mosaic_0001>
module attributes {stable_mosaic.version = 11 : i64} {
  func.func @_folded_kernel(%arg0: i32, %arg1: memref<128x512xf32, #tpu.memory_space<vmem>>, %arg2: memref<16x128xf32, #tpu.memory_space<vmem>>, %arg3: memref<16x128xf32, #tpu.memory_space<vmem>>, %arg4: memref<16x512xf32, #tpu.memory_space<vmem>>, %arg5: memref<16x512xf32, #tpu.memory_space<vmem>>) attributes {dimension_semantics = [#tpu.dimension_semantics<parallel>], iteration_bounds = array<i64: 1>, scalar_prefetch = 0 : i64, scratch_operands = 0 : i64, tpu.core_type = #tpu.core_type<tc>, window_params = [{pipeline_mode = #tpu.pipeline_mode<synchronous>, transform_indices = @transform_0, window_bounds = array<i64: 128, 512>}, {transform_indices = @transform_1, window_bounds = array<i64: 16, 128>}, {transform_indices = @transform_2, window_bounds = array<i64: 16, 128>}, {transform_indices = @transform_3, window_bounds = array<i64: 16, 512>}, {transform_indices = @transform_4, window_bounds = array<i64: 16, 512>}]} {
    %c0 = arith.constant 0 : index
    %c0_0 = arith.constant 0 : index
    %0 = vector.load %arg1[%c0, %c0_0] : memref<128x512xf32, #tpu.memory_space<vmem>>, vector<128x512xf32>
    %c0_1 = arith.constant 0 : index
    %c0_2 = arith.constant 0 : index
    %1 = vector.load %arg2[%c0_1, %c0_2] : memref<16x128xf32, #tpu.memory_space<vmem>>, vector<16x128xf32>
    %cst = arith.constant dense<0.000000e+00> : vector<16x512xf32>
    %2 = tpu.matmul %1, %0, %cst {dimension_numbers = #tpu.dot_dimension_numbers<[1], [0], [0], [1], [0, 0, 1, 1], [], []>, precision = #tpu.contract_precision<fp32>} : vector<16x128xf32>, vector<128x512xf32>, vector<16x512xf32> -> vector<16x512xf32>
    %c0_3 = arith.constant 0 : index
    %c0_4 = arith.constant 0 : index
    %3 = vector.load %arg4[%c0_3, %c0_4] : memref<16x512xf32, #tpu.memory_space<vmem>>, vector<16x512xf32>
    tpu.vector_store %arg4[%c0_3, %c0_4], %2 {strides = array<i32>} : memref<16x512xf32, #tpu.memory_space<vmem>>, vector<16x512xf32>,
    %c0_5 = arith.constant 0 : index
    %c0_6 = arith.constant 0 : index
    %4 = vector.load %arg3[%c0_5, %c0_6] : memref<16x128xf32, #tpu.memory_space<vmem>>, vector<16x128xf32>
    %cst_7 = arith.constant dense<0.000000e+00> : vector<16x512xf32>
    %5 = tpu.matmul %4, %0, %cst_7 {dimension_numbers = #tpu.dot_dimension_numbers<[1], [0], [0], [1], [0, 0, 1, 1], [], []>, precision = #tpu.contract_precision<fp32>} : vector<16x128xf32>, vector<128x512xf32>, vector<16x512xf32> -> vector<16x512xf32>
    %c0_8 = arith.constant 0 : index
    %c0_9 = arith.constant 0 : index
    %6 = vector.load %arg5[%c0_8, %c0_9] : memref<16x512xf32, #tpu.memory_space<vmem>>, vector<16x512xf32>
    tpu.vector_store %arg5[%c0_8, %c0_9], %5 {strides = array<i32>} : memref<16x512xf32, #tpu.memory_space<vmem>>, vector<16x512xf32>,
    return
  }
  func.func @transform_0(%arg0: i32) -> (i32, i32) {
    %c0_i32 = arith.constant 0 : i32
    %c0_i32_0 = arith.constant 0 : i32
    %c0_i32_1 = arith.constant 0 : i32
    return %c0_i32, %c0_i32_0 : i32, i32
  }
  func.func @transform_1(%arg0: i32) -> (i32, i32) {
    %c0_i32 = arith.constant 0 : i32
    %c0_i32_0 = arith.constant 0 : i32
    return %arg0, %c0_i32 : i32, i32
  }
  func.func @transform_2(%arg0: i32) -> (i32, i32) {
    %c0_i32 = arith.constant 0 : i32
    %c0_i32_0 = arith.constant 0 : i32
    return %arg0, %c0_i32 : i32, i32
  }
  func.func @transform_3(%arg0: i32) -> (i32, i32) {
    %c0_i32 = arith.constant 0 : i32
    %c0_i32_0 = arith.constant 0 : i32
    return %arg0, %c0_i32 : i32, i32
  }
  func.func @transform_4(%arg0: i32) -> (i32, i32) {
    %c0_i32 = arith.constant 0 : i32
    %c0_i32_0 = arith.constant 0 : i32
    return %arg0, %c0_i32 : i32, i32
  }
}

</mosaic_0001>

<llo_original>
// kernel: tpu_custom_call.1
$region0: #{tpu_custom_call.1}
  #allocation0 [shape = 'u32[]', space=smem, size = 0x4, offset = 0x4, fixed_abs, tag = 'smem constant byte address 0x4 - core index']
  #allocation1 [shape = 'u32[144,128]{1,0:T(1,128)}', space=vmem, size = 0x12000, scoped, tag = 'internal scratch']
  %s0 = inlined_call_operand.hbm [shape: f32[128,512], index: 0, kind: input, shape index: {}]
  %s1 = inlined_call_operand.hbm [shape: f32[16,128], index: 1, kind: input, shape index: {}]
  %s2 = inlined_call_operand.hbm [shape: f32[16,128], index: 2, kind: input, shape index: {}]
  %s3 = inlined_call_operand.hbm [shape: f32[16,512], index: 3, kind: output, shape index: {0}]
  %s4 = inlined_call_operand.hbm [shape: f32[16,512], index: 4, kind: output, shape index: {1}]
  %5 = xla_tuple %s3, %s4
  %s6 = sld [smem:[#allocation0]]
  $region42: #{tpu_custom_call.1} parent=0
    _
  %s8 = ssub.s32 1, %s6
  %s9 = scalar_select 0, %s8, %s6
  $region1: #{tpu_custom_call.1} parent=0
    #allocation2 [shape = 'u8[262144]{0}', space=vmem, size = 0x40000, scoped, tag = 'input window, operand 0, single buffered']
    #allocation3 [shape = 's32[1]{0}', space=sflag, size = 0x4, scoped, tag = 'scoped memory for tpu_custom_call.1']
    #allocation4 [shape = 's32[1]{0}', space=sflag, size = 0x4, scoped, tag = 'scoped memory for tpu_custom_call.1']
    #allocation5 [shape = 'u8[8192]{0}', space=vmem, size = 0x2000, scoped, tag = 'input window, operand 1, single buffered']
    #allocation6 [shape = 's32[1]{0}', space=sflag, size = 0x4, scoped, tag = 'scoped memory for tpu_custom_call.1']
    #allocation7 [shape = 'u8[8192]{0}', space=vmem, size = 0x2000, scoped, tag = 'input window, operand 2, single buffered']
    #allocation8 [shape = 'u8[32768]{0}', space=vmem, size = 0x8000, scoped, tag = 'output window, operand 0, single buffered']
    #allocation9 [shape = 'u8[32768]{0}', space=vmem, size = 0x8000, scoped, tag = 'output window, operand 1, single buffered']
    #allocation10 [shape = 's32[1]{0}', space=sflag, size = 0x4, scoped, tag = 'scoped memory for tpu_custom_call.1']
    %10 = vsyncpa [#allocation3], 0
    %11 = vsyncpa [#allocation6], 0
    %12 = vsyncpa [#allocation4], 0
    %13 = vsyncpa [#allocation10], 0
    // Predicated region
    $region2: #{tpu_custom_call.1} parent=1 // pred_check
      _
    $region3: #{tpu_custom_call.1} parent=1 // pred_check_branch
      %15 = sbr.rel (0) target = $region5
    $region4: #{tpu_custom_call.1} parent=1 // pred_region
      %s17 = ssub.s32 8192, 8192
      %18 = vsyncadd [#allocation3], %s17
      %s19 = sshll.u32 [#allocation2], 4
      %s20 = int_to_ptr.vmem [resolvable:$true] %s19
      %25 = dma.hbm_to_vmem [thread:$0]  %s0, 8192, %s20, [#allocation3], 512, 512, 32
    $region5: #{tpu_custom_call.1} parent=1 // pred_fallthru
      _
    // Predicated region
    $region6: #{tpu_custom_call.1} parent=1 // pred_check
      _
    $region7: #{tpu_custom_call.1} parent=1 // pred_check_branch
      %27 = sbr.rel (0) target = $region9
    $region8: #{tpu_custom_call.1} parent=1 // pred_region
      %s29 = ssub.s32 256, 256
      %30 = vsyncadd [#allocation6], %s29
      %s31 = sshll.u32 [#allocation5], 4
      %s32 = int_to_ptr.vmem [resolvable:$true] %s31
      %37 = dma.hbm_to_vmem [thread:$0]  %s1, 256, %s32, [#allocation6], 128, 128, 8
    $region9: #{tpu_custom_call.1} parent=1 // pred_fallthru
      _
    // Predicated region
    $region10: #{tpu_custom_call.1} parent=1 // pred_check
      _
    $region11: #{tpu_custom_call.1} parent=1 // pred_check_branch
      %39 = sbr.rel (0) target = $region13
    $region12: #{tpu_custom_call.1} parent=1 // pred_region
      %s41 = ssub.s32 256, 256
      %42 = vsyncadd [#allocation6], %s41
      %s43 = sshll.u32 [#allocation7], 4
      %s44 = int_to_ptr.vmem [resolvable:$true] %s43
      %49 = dma.hbm_to_vmem [thread:$0]  %s2, 256, %s44, [#allocation6], 128, 128, 8
    $region13: #{tpu_custom_call.1} parent=1 // pred_fallthru
      _
    // Predicated region
    $region14: #{tpu_custom_call.1} parent=1 // pred_check
      _
    $region15: #{tpu_custom_call.1} parent=1 // pred_check_branch
      %51 = sbr.rel (0) target = $region17
    $region16: #{tpu_custom_call.1} parent=1 // pred_region
      %52 = dma.done [#allocation3], 8192
    $region17: #{tpu_custom_call.1} parent=1 // pred_fallthru
      _
    // Predicated region
    $region18: #{tpu_custom_call.1} parent=1 // pred_check
      _
    $region19: #{tpu_custom_call.1} parent=1 // pred_check_branch
      %54 = sbr.rel (0) target = $region21
    $region20: #{tpu_custom_call.1} parent=1 // pred_region
      %55 = dma.done [#allocation6], 256
    $region21: #{tpu_custom_call.1} parent=1 // pred_fallthru
      _
    // Predicated region
    $region22: #{tpu_custom_call.1} parent=1 // pred_check
      _
    $region23: #{tpu_custom_call.1} parent=1 // pred_check_branch
      %57 = sbr.rel (0) target = $region25
    $region24: #{tpu_custom_call.1} parent=1 // pred_region
      %58 = dma.done [#allocation6], 256
    $region25: #{tpu_custom_call.1} parent=1 // pred_fallthru
      _
    %v59 = vld [vmem:[#allocation2] sm:$0xff]
    %v60 = vld [vmem:[#allocation2 + $0x8] sm:$0xff]
    %v61 = vld [vmem:[#allocation2 + $0x10] sm:$0xff]
    %v62 = vld [vmem:[#allocation2 + $0x18] sm:$0xff]
    %v63 = vld [vmem:[#allocation2 + $0x20] sm:$0xff]
    %v64 = vld [vmem:[#allocation2 + $0x28] sm:$0xff]
    %v65 = vld [vmem:[#allocation2 + $0x30] sm:$0xff]
    %v66 = vld [vmem:[#allocation2 + $0x38] sm:$0xff]
    %v67 = vld [vmem:[#allocation2 + $0x40] sm:$0xff]
    %v68 = vld [vmem:[#allocation2 + $0x48] sm:$0xff]
    %v69 = vld [vmem:[#allocation2 + $0x50] sm:$0xff]
    %v70 = vld [vmem:[#allocation2 + $0x58] sm:$0xff]
    %v71 = vld [vmem:[#allocation2 + $0x60] sm:$0xff]
    %v72 = vld [vmem:[#allocation2 + $0x68] sm:$0xff]
    %v73 = vld [vmem:[#allocation2 + $0x70] sm:$0xff]
    %v74 = vld [vmem:[#allocation2 + $0x78] sm:$0xff]
    %v75 = vld [vmem:[#allocation2 + $0x80] sm:$0xff]
    %v76 = vld [vmem:[#allocation2 + $0x88] sm:$0xff]
    %v77 = vld [vmem:[#allocation2 + $0x90] sm:$0xff]
    %v78 = vld [vmem:[#allocation2 + $0x98] sm:$0xff]
    %v79 = vld [vmem:[#allocation2 + $0xa0] sm:$0xff]
    %v80 = vld [vmem:[#allocation2 + $0xa8] sm:$0xff]
    %v81 = vld [vmem:[#allocation2 + $0xb0] sm:$0xff]
    %v82 = vld [vmem:[#allocation2 + $0xb8] sm:$0xff]
    %v83 = vld [vmem:[#allocation2 + $0xc0] sm:$0xff]
    %v84 = vld [vmem:[#allocation2 + $0xc8] sm:$0xff]
    %v85 = vld [vmem:[#allocation2 + $0xd0] sm:$0xff]
    %v86 = vld [vmem:[#allocation2 + $0xd8] sm:$0xff]
    %v87 = vld [vmem:[#allocation2 + $0xe0] sm:$0xff]
    %v88 = vld [vmem:[#allocation2 + $0xe8] sm:$0xff]
    %v89 = vld [vmem:[#allocation2 + $0xf0] sm:$0xff]
    %v90 = vld [vmem:[#allocation2 + $0xf8] sm:$0xff]
    %v91 = vld [vmem:[#allocation2 + $0x100] sm:$0xff]
    %v92 = vld [vmem:[#allocation2 + $0x108] sm:$0xff]
    %v93 = vld [vmem:[#allocation2 + $0x110] sm:$0xff]
    %v94 = vld [vmem:[#allocation2 + $0x118] sm:$0xff]
    %v95 = vld [vmem:[#allocation2 + $0x120] sm:$0xff]
    %v96 = vld [vmem:[#allocation2 + $0x128] sm:$0xff]
    %v97 = vld [vmem:[#allocation2 + $0x130] sm:$0xff]
    %v98 = vld [vmem:[#allocation2 + $0x138] sm:$0xff]
    %v99 = vld [vmem:[#allocation2 + $0x140] sm:$0xff]
    %v100 = vld [vmem:[#allocation2 + $0x148] sm:$0xff]
    %v101 = vld [vmem:[#allocation2 + $0x150] sm:$0xff]
    %v102 = vld [vmem:[#allocation2 + $0x158] sm:$0xff]
    %v103 = vld [vmem:[#allocation2 + $0x160] sm:$0xff]
    %v104 = vld [vmem:[#allocation2 + $0x168] sm:$0xff]
    %v105 = vld [vmem:[#allocation2 + $0x170] sm:$0xff]
    %v106 = vld [vmem:[#allocation2 + $0x178] sm:$0xff]
    %v107 = vld [vmem:[#allocation2 + $0x180] sm:$0xff]
    %v108 = vld [vmem:[#allocation2 + $0x188] sm:$0xff]
    %v109 = vld [vmem:[#allocation2 + $0x190] sm:$0xff]
    %v110 = vld [vmem:[#allocation2 + $0x198] sm:$0xff]
    %v111 = vld [vmem:[#allocation2 + $0x1a0] sm:$0xff]
    %v112 = vld [vmem:[#allocation2 + $0x1a8] sm:$0xff]
    %v113 = vld [vmem:[#allocation2 + $0x1b0] sm:$0xff]
    %v114 = vld [vmem:[#allocation2 + $0x1b8] sm:$0xff]
    %v115 = vld [vmem:[#allocation2 + $0x1c0] sm:$0xff]
    %v116 = vld [vmem:[#allocation2 + $0x1c8] sm:$0xff]
    %v117 = vld [vmem:[#allocation2 + $0x1d0] sm:$0xff]
    %v118 = vld [vmem:[#allocation2 + $0x1d8] sm:$0xff]
    %v119 = vld [vmem:[#allocation2 + $0x1e0] sm:$0xff]
    %v120 = vld [vmem:[#allocation2 + $0x1e8] sm:$0xff]
    %v121 = vld [vmem:[#allocation2 + $0x1f0] sm:$0xff]
    %v122 = vld [vmem:[#allocation2 + $0x1f8] sm:$0xff]
    %v123 = vld [vmem:[#allocation5] sm:$0xff]
    %v124 = vld [vmem:[#allocation5 + $0x8] sm:$0xff]
    %v125 = vand.u32 %v60, 4294901760
    %126 = vmatprep.subr.mxu0 %v125
    %v127 = vand.u32 %v59, 4294901760
    %128 = vmatpush1.msra.mxu0 %v127
    %v129 = vand.u32 %v64, 4294901760
    %130 = vmatprep.subr.mxu0 %v129
    %v131 = vand.u32 %v63, 4294901760
    %132 = vmatpush1.msra.mxu0 %v131
    %v133 = vand.u32 %v68, 4294901760
    %134 = vmatprep.subr.mxu0 %v133
    %v135 = vand.u32 %v67, 4294901760
    %136 = vmatpush1.msra.mxu0 %v135
    %v137 = vand.u32 %v72, 4294901760
    %138 = vmatprep.subr.mxu0 %v137
    %v139 = vand.u32 %v71, 4294901760
    %140 = vmatpush1.msra.mxu0 %v139
    %v141 = vand.u32 %v76, 4294901760
    %142 = vmatprep.subr.mxu0 %v141
    %v143 = vand.u32 %v75, 4294901760
    %144 = vmatpush1.msra.mxu0 %v143
    %v145 = vand.u32 %v80, 4294901760
    %146 = vmatprep.subr.mxu0 %v145
    %v147 = vand.u32 %v79, 4294901760
    %148 = vmatpush1.msra.mxu0 %v147
    %v149 = vand.u32 %v84, 4294901760
    %150 = vmatprep.subr.mxu0 %v149
    %v151 = vand.u32 %v83, 4294901760
    %152 = vmatpush1.msra.mxu0 %v151
    %v153 = vand.u32 %v88, 4294901760
    %154 = vmatprep.subr.mxu0 %v153
    %v155 = vand.u32 %v87, 4294901760
    %156 = vmatpush1.msra.mxu0 %v155
    %v157 = vand.u32 %v92, 4294901760
    %158 = vmatprep.subr.mxu0 %v157
    %v159 = vand.u32 %v91, 4294901760
    %160 = vmatpush1.msra.mxu0 %v159
    %v161 = vand.u32 %v96, 4294901760
    %162 = vmatprep.subr.mxu0 %v161
    %v163 = vand.u32 %v95, 4294901760
    %164 = vmatpush1.msra.mxu0 %v163
    %v165 = vand.u32 %v100, 4294901760
    %166 = vmatprep.subr.mxu0 %v165
    %v167 = vand.u32 %v99, 4294901760
    %168 = vmatpush1.msra.mxu0 %v167
    %v169 = vand.u32 %v104, 4294901760
    %170 = vmatprep.subr.mxu0 %v169
    %v171 = vand.u32 %v103, 4294901760
    %172 = vmatpush1.msra.mxu0 %v171
    %v173 = vand.u32 %v108, 4294901760
    %174 = vmatprep.subr.mxu0 %v173
    %v175 = vand.u32 %v107, 4294901760
    %176 = vmatpush1.msra.mxu0 %v175
    %v177 = vand.u32 %v112, 4294901760
    %178 = vmatprep.subr.mxu0 %v177
    %v179 = vand.u32 %v111, 4294901760
    %180 = vmatpush1.msra.mxu0 %v179
    %v181 = vand.u32 %v116, 4294901760
    %182 = vmatprep.subr.mxu0 %v181
    %v183 = vand.u32 %v115, 4294901760
    %184 = vmatpush1.msra.mxu0 %v183
    %v185 = vand.u32 %v120, 4294901760
    %186 = vmatprep.subr.mxu0 %v185
    %v187 = vand.u32 %v119, 4294901760
    %188 = vmatpush1.msra.mxu0 %v187
    %189 = vmatprep.subr.mxu0 0.0
    %190 = vmatpush1.msra.mxu0 0.0
    %191 = vmatprep.subr.mxu0 0.0
    %192 = vmatpush1.msra.mxu0 0.0
    %193 = vmatprep.subr.mxu0 0.0
    %194 = vmatpush1.msra.mxu0 0.0
    %195 = vmatprep.subr.mxu0 0.0
    %196 = vmatpush1.msra.mxu0 0.0
    %197 = vmatprep.subr.mxu0 0.0
    %198 = vmatpush1.msra.mxu0 0.0
    %199 = vmatprep.subr.mxu0 0.0
    %200 = vmatpush1.msra.mxu0 0.0
    %201 = vmatprep.subr.mxu0 0.0
    %202 = vmatpush1.msra.mxu0 0.0
    %203 = vmatprep.subr.mxu0 0.0
    %204 = vmatpush1.msra.mxu0 0.0
    %205 = vmatprep.subr.mxu0 0.0
    %206 = vmatpush1.msra.mxu0 0.0
    %207 = vmatprep.subr.mxu0 0.0
    %208 = vmatpush1.msra.mxu0 0.0
    %209 = vmatprep.subr.mxu0 0.0
    %210 = vmatpush1.msra.mxu0 0.0
    %211 = vmatprep.subr.mxu0 0.0
    %212 = vmatpush1.msra.mxu0 0.0
    %213 = vmatprep.subr.mxu0 0.0
    %214 = vmatpush1.msra.mxu0 0.0
    %215 = vmatprep.subr.mxu0 0.0
    %216 = vmatpush1.msra.mxu0 0.0
    %217 = vmatprep.subr.mxu0 0.0
    %218 = vmatpush1.msra.mxu0 0.0
    %219 = vmatprep.subr.mxu0 0.0
    %220 = vmatpush1.msra.mxu0 0.0
    %221 = vmatprep.mubr.f32.mxu0 0.0
    %v222 = vand.u32 %v123, 4294901760
    %v223 = vsub.f32 %v123, %v222
    %v224 = vand.u32 %v223, 4294901760
    %v225 = vsub.f32 %v223, %v224
    %v226 = vand.u32 %v225, 4294901760
    %227 = vmatmul.mubr.f32.gmra.mrb[0].mxu0 %v226
    %v228 = vpop.f32.mrb[0].mxu0
    %v229 = vadd.f32 0.0, %v228
    %v230 = vpop.f32.mrb[0].mxu0
    %v231 = vadd.f32 0.0, %v230
    %232 = vmatprep.mubr.f32.mxu0 0.0
    %v233 = vand.u32 %v124, 4294901760
    %v234 = vsub.f32 %v124, %v233
    %v235 = vand.u32 %v234, 4294901760
    %v236 = vsub.f32 %v234, %v235
    %v237 = vand.u32 %v236, 4294901760
    %238 = vmatmul.mubr.f32.gmra.mrb[0].mxu0 %v237
    %v239 = vpop.f32.mrb[0].mxu0
    %v240 = vadd.f32 0.0, %v239
    %v241 = vpop.f32.mrb[0].mxu0
    %v242 = vadd.f32 0.0, %v241
    %243 = vdwg.mxu0
    %v244 = vand.u32 %v60, 4294901760
    %v245 = vsub.f32 %v60, %v244
    %v246 = vand.u32 %v245, 4294901760
    %v247 = vsub.f32 %v245, %v246
    %v248 = vand.u32 %v247, 4294901760
    %249 = vmatprep.subr.mxu0 %v248
    %v250 = vand.u32 %v59, 4294901760
    %v251 = vsub.f32 %v59, %v250
    %v252 = vand.u32 %v251, 4294901760
    %v253 = vsub.f32 %v251, %v252
    %v254 = vand.u32 %v253, 4294901760
    %255 = vmatpush1.msra.mxu0 %v254
    %v256 = vand.u32 %v64, 4294901760
    %v257 = vsub.f32 %v64, %v256
    %v258 = vand.u32 %v257, 4294901760
    %v259 = vsub.f32 %v257, %v258
    %v260 = vand.u32 %v259, 4294901760
    %261 = vmatprep.subr.mxu0 %v260
    %v262 = vand.u32 %v63, 4294901760
    %v263 = vsub.f32 %v63, %v262
    %v264 = vand.u32 %v263, 4294901760
    %v265 = vsub.f32 %v263, %v264
    %v266 = vand.u32 %v265, 4294901760
    %267 = vmatpush1.msra.mxu0 %v266
    %v268 = vand.u32 %v68, 4294901760
    %v269 = vsub.f32 %v68, %v268
    %v270 = vand.u32 %v269, 4294901760
    %v271 = vsub.f32 %v269, %v270
    %v272 = vand.u32 %v271, 4294901760
    %273 = vmatprep.subr.mxu0 %v272
    %v274 = vand.u32 %v67, 4294901760
    %v275 = vsub.f32 %v67, %v274
    %v276 = vand.u32 %v275, 4294901760
    %v277 = vsub.f32 %v275, %v276
    %v278 = vand.u32 %v277, 4294901760
    %279 = vmatpush1.msra.mxu0 %v278
    %v280 = vand.u32 %v72, 4294901760
    %v281 = vsub.f32 %v72, %v280
    %v282 = vand.u32 %v281, 4294901760
    %v283 = vsub.f32 %v281, %v282
    %v284 = vand.u32 %v283, 4294901760
    %285 = vmatprep.subr.mxu0 %v284
    %v286 = vand.u32 %v71, 4294901760
    %v287 = vsub.f32 %v71, %v286
    %v288 = vand.u32 %v287, 4294901760
    %v289 = vsub.f32 %v287, %v288
    %v290 = vand.u32 %v289, 4294901760
    %291 = vmatpush1.msra.mxu0 %v290
    %v292 = vand.u32 %v76, 4294901760
    %v293 = vsub.f32 %v76, %v292
    %v294 = vand.u32 %v293, 4294901760
    %v295 = vsub.f32 %v293, %v294
    %v296 = vand.u32 %v295, 4294901760
    %297 = vmatprep.subr.mxu0 %v296
    %v298 = vand.u32 %v75, 4294901760
    %v299 = vsub.f32 %v75, %v298
    %v300 = vand.u32 %v299, 4294901760
    %v301 = vsub.f32 %v299, %v300
    %v302 = vand.u32 %v301, 4294901760
    %303 = vmatpush1.msra.mxu0 %v302
    %v304 = vand.u32 %v80, 4294901760
    %v305 = vsub.f32 %v80, %v304
    %v306 = vand.u32 %v305, 4294901760
    %v307 = vsub.f32 %v305, %v306
    %v308 = vand.u32 %v307, 4294901760
    %309 = vmatprep.subr.mxu0 %v308
    %v310 = vand.u32 %v79, 4294901760
    %v311 = vsub.f32 %v79, %v310
    %v312 = vand.u32 %v311, 4294901760
    %v313 = vsub.f32 %v311, %v312
    %v314 = vand.u32 %v313, 4294901760
    %315 = vmatpush1.msra.mxu0 %v314
    %v316 = vand.u32 %v84, 4294901760
    %v317 = vsub.f32 %v84, %v316
    %v318 = vand.u32 %v317, 4294901760
    %v319 = vsub.f32 %v317, %v318
    %v320 = vand.u32 %v319, 4294901760
    %321 = vmatprep.subr.mxu0 %v320
    %v322 = vand.u32 %v83, 4294901760
    %v323 = vsub.f32 %v83, %v322
    %v324 = vand.u32 %v323, 4294901760
    %v325 = vsub.f32 %v323, %v324
    %v326 = vand.u32 %v325, 4294901760
    %327 = vmatpush1.msra.mxu0 %v326
    %v328 = vand.u32 %v88, 4294901760
    %v329 = vsub.f32 %v88, %v328
    %v330 = vand.u32 %v329, 4294901760
    %v331 = vsub.f32 %v329, %v330
    %v332 = vand.u32 %v331, 4294901760
    %333 = vmatprep.subr.mxu0 %v332
    %v334 = vand.u32 %v87, 4294901760
    %v335 = vsub.f32 %v87, %v334
    %v336 = vand.u32 %v335, 4294901760
    %v337 = vsub.f32 %v335, %v336
    %v338 = vand.u32 %v337, 4294901760
    %339 = vmatpush1.msra.mxu0 %v338
    %v340 = vand.u32 %v92, 4294901760
    %v341 = vsub.f32 %v92, %v340
    %v342 = vand.u32 %v341, 4294901760
    %v343 = vsub.f32 %v341, %v342
    %v344 = vand.u32 %v343, 4294901760
    %345 = vmatprep.subr.mxu0 %v344
    %v346 = vand.u32 %v91, 4294901760
    %v347 = vsub.f32 %v91, %v346
    %v348 = vand.u32 %v347, 4294901760
    %v349 = vsub.f32 %v347, %v348
    %v350 = vand.u32 %v349, 4294901760
    %351 = vmatpush1.msra.mxu0 %v350
    %v352 = vand.u32 %v96, 4294901760
    %v353 = vsub.f32 %v96, %v352
    %v354 = vand.u32 %v353, 4294901760
    %v355 = vsub.f32 %v353, %v354
    %v356 = vand.u32 %v355, 4294901760
    %357 = vmatprep.subr.mxu0 %v356
    %v358 = vand.u32 %v95, 4294901760
    %v359 = vsub.f32 %v95, %v358
    %v360 = vand.u32 %v359, 4294901760
    %v361 = vsub.f32 %v359, %v360
    %v362 = vand.u32 %v361, 4294901760
    %363 = vmatpush1.msra.mxu0 %v362
    %v364 = vand.u32 %v100, 4294901760
    %v365 = vsub.f32 %v100, %v364
    %v366 = vand.u32 %v365, 4294901760
    %v367 = vsub.f32 %v365, %v366
    %v368 = vand.u32 %v367, 4294901760
    %369 = vmatprep.subr.mxu0 %v368
    %v370 = vand.u32 %v99, 4294901760
    %v371 = vsub.f32 %v99, %v370
    %v372 = vand.u32 %v371, 4294901760
    %v373 = vsub.f32 %v371, %v372
    %v374 = vand.u32 %v373, 4294901760
    %375 = vmatpush1.msra.mxu0 %v374
    %v376 = vand.u32 %v104, 4294901760
    %v377 = vsub.f32 %v104, %v376
    %v378 = vand.u32 %v377, 4294901760
    %v379 = vsub.f32 %v377, %v378
    %v380 = vand.u32 %v379, 4294901760
    %381 = vmatprep.subr.mxu0 %v380
    %v382 = vand.u32 %v103, 4294901760
    %v383 = vsub.f32 %v103, %v382
    %v384 = vand.u32 %v383, 4294901760
    %v385 = vsub.f32 %v383, %v384
    %v386 = vand.u32 %v385, 4294901760
    %387 = vmatpush1.msra.mxu0 %v386
    %v388 = vand.u32 %v108, 4294901760
    %v389 = vsub.f32 %v108, %v388
    %v390 = vand.u32 %v389, 4294901760
    %v391 = vsub.f32 %v389, %v390
    %v392 = vand.u32 %v391, 4294901760
    %393 = vmatprep.subr.mxu0 %v392
    %v394 = vand.u32 %v107, 4294901760
    %v395 = vsub.f32 %v107, %v394
    %v396 = vand.u32 %v395, 4294901760
    %v397 = vsub.f32 %v395, %v396
    %v398 = vand.u32 %v397, 4294901760
    %399 = vmatpush1.msra.mxu0 %v398
    %v400 = vand.u32 %v112, 4294901760
    %v401 = vsub.f32 %v112, %v400
    %v402 = vand.u32 %v401, 4294901760
    %v403 = vsub.f32 %v401, %v402
    %v404 = vand.u32 %v403, 4294901760
    %405 = vmatprep.subr.mxu0 %v404
    %v406 = vand.u32 %v111, 4294901760
    %v407 = vsub.f32 %v111, %v406
    %v408 = vand.u32 %v407, 4294901760
    %v409 = vsub.f32 %v407, %v408
    %v410 = vand.u32 %v409, 4294901760
    %411 = vmatpush1.msra.mxu0 %v410
    %v412 = vand.u32 %v116, 4294901760
    %v413 = vsub.f32 %v116, %v412
    %v414 = vand.u32 %v413, 4294901760
    %v415 = vsub.f32 %v413, %v414
    %v416 = vand.u32 %v415, 4294901760
    %417 = vmatprep.subr.mxu0 %v416
    %v418 = vand.u32 %v115, 4294901760
    %v419 = vsub.f32 %v115, %v418
    %v420 = vand.u32 %v419, 4294901760
    %v421 = vsub.f32 %v419, %v420
    %v422 = vand.u32 %v421, 4294901760
    %423 = vmatpush1.msra.mxu0 %v422
    %v424 = vand.u32 %v120, 4294901760
    %v425 = vsub.f32 %v120, %v424
    %v426 = vand.u32 %v425, 4294901760
    %v427 = vsub.f32 %v425, %v426
    %v428 = vand.u32 %v427, 4294901760
    %429 = vmatprep.subr.mxu0 %v428
    %v430 = vand.u32 %v119, 4294901760
    %v431 = vsub.f32 %v119, %v430
    %v432 = vand.u32 %v431, 4294901760
    %v433 = vsub.f32 %v431, %v432
    %v434 = vand.u32 %v433, 4294901760
    %435 = vmatpush1.msra.mxu0 %v434
    %436 = vmatprep.subr.mxu0 0.0
    %437 = vmatpush1.msra.mxu0 0.0
    %438 = vmatprep.subr.mxu0 0.0
    %439 = vmatpush1.msra.mxu0 0.0
    %440 = vmatprep.subr.mxu0 0.0
    %441 = vmatpush1.msra.mxu0 0.0
    %442 = vmatprep.subr.mxu0 0.0
    %443 = vmatpush1.msra.mxu0 0.0
    %444 = vmatprep.subr.mxu0 0.0
    %445 = vmatpush1.msra.mxu0 0.0
    %446 = vmatprep.subr.mxu0 0.0
    %447 = vmatpush1.msra.mxu0 0.0
    %448 = vmatprep.subr.mxu0 0.0
    %449 = vmatpush1.msra.mxu0 0.0
    %450 = vmatprep.subr.mxu0 0.0
    %451 = vmatpush1.msra.mxu0 0.0
    %452 = vmatprep.subr.mxu0 0.0
    %453 = vmatpush1.msra.mxu0 0.0
    %454 = vmatprep.subr.mxu0 0.0
    %455 = vmatpush1.msra.mxu0 0.0
    %456 = vmatprep.subr.mxu0 0.0
    %457 = vmatpush1.msra.mxu0 0.0
    %458 = vmatprep.subr.mxu0 0.0
    %459 = vmatpush1.msra.mxu0 0.0
    %460 = vmatprep.subr.mxu0 0.0
    %461 = vmatpush1.msra.mxu0 0.0
    %462 = vmatprep.subr.mxu0 0.0
    %463 = vmatpush1.msra.mxu0 0.0
    %464 = vmatprep.subr.mxu0 0.0
    %465 = vmatpush1.msra.mxu0 0.0
    %466 = vmatprep.subr.mxu0 0.0
    %467 = vmatpush1.msra.mxu0 0.0
    %468 = vmatprep.mubr.f32.mxu0 0.0
    %v469 = vand.u32 %v123, 4294901760
    %470 = vmatmul.mubr.f32.gmra.mrb[0].mxu0 %v469
    %v471 = vpop.f32.mrb[0].mxu0
    %v472 = vadd.f32 %v229, %v471
    %v473 = vpop.f32.mrb[0].mxu0
    %v474 = vadd.f32 %v231, %v473
    %475 = vmatprep.mubr.f32.mxu0 0.0
    %v476 = vand.u32 %v124, 4294901760
    %477 = vmatmul.mubr.f32.gmra.mrb[0].mxu0 %v476
    %v478 = vpop.f32.mrb[0].mxu0
    %v479 = vadd.f32 %v240, %v478
    %v480 = vpop.f32.mrb[0].mxu0
    %v481 = vadd.f32 %v242, %v480
    %482 = vdwg.mxu0
    %v483 = vand.u32 %v60, 4294901760
    %v484 = vsub.f32 %v60, %v483
    %485 = vmatprep.subr.mxu0 %v484
    %v486 = vand.u32 %v59, 4294901760
    %v487 = vsub.f32 %v59, %v486
    %488 = vmatpush1.msra.mxu0 %v487
    %v489 = vand.u32 %v64, 4294901760
    %v490 = vsub.f32 %v64, %v489
    %491 = vmatprep.subr.mxu0 %v490
    %v492 = vand.u32 %v63, 4294901760
    %v493 = vsub.f32 %v63, %v492
    %494 = vmatpush1.msra.mxu0 %v493
    %v495 = vand.u32 %v68, 4294901760
    %v496 = vsub.f32 %v68, %v495
    %497 = vmatprep.subr.mxu0 %v496
    %v498 = vand.u32 %v67, 4294901760
    %v499 = vsub.f32 %v67, %v498
    %500 = vmatpush1.msra.mxu0 %v499
    %v501 = vand.u32 %v72, 4294901760
    %v502 = vsub.f32 %v72, %v501
    %503 = vmatprep.subr.mxu0 %v502
    %v504 = vand.u32 %v71, 4294901760
    %v505 = vsub.f32 %v71, %v504
    %506 = vmatpush1.msra.mxu0 %v505
    %v507 = vand.u32 %v76, 4294901760
    %v508 = vsub.f32 %v76, %v507
    %509 = vmatprep.subr.mxu0 %v508
    %v510 = vand.u32 %v75, 4294901760
    %v511 = vsub.f32 %v75, %v510
    %512 = vmatpush1.msra.mxu0 %v511
    %v513 = vand.u32 %v80, 4294901760
    %v514 = vsub.f32 %v80, %v513
    %515 = vmatprep.subr.mxu0 %v514
    %v516 = vand.u32 %v79, 4294901760
    %v517 = vsub.f32 %v79, %v516
    %518 = vmatpush1.msra.mxu0 %v517
    %v519 = vand.u32 %v84, 4294901760
    %v520 = vsub.f32 %v84, %v519
    %521 = vmatprep.subr.mxu0 %v520
    %v522 = vand.u32 %v83, 4294901760
    %v523 = vsub.f32 %v83, %v522
    %524 = vmatpush1.msra.mxu0 %v523
    %v525 = vand.u32 %v88, 4294901760
    %v526 = vsub.f32 %v88, %v525
    %527 = vmatprep.subr.mxu0 %v526
    %v528 = vand.u32 %v87, 4294901760
    %v529 = vsub.f32 %v87, %v528
    %530 = vmatpush1.msra.mxu0 %v529
    %v531 = vand.u32 %v92, 4294901760
    %v532 = vsub.f32 %v92, %v531
    %533 = vmatprep.subr.mxu0 %v532
    %v534 = vand.u32 %v91, 4294901760
    %v535 = vsub.f32 %v91, %v534
    %536 = vmatpush1.msra.mxu0 %v535
    %v537 = vand.u32 %v96, 4294901760
    %v538 = vsub.f32 %v96, %v537
    %539 = vmatprep.subr.mxu0 %v538
    %v540 = vand.u32 %v95, 4294901760
    %v541 = vsub.f32 %v95, %v540
    %542 = vmatpush1.msra.mxu0 %v541
    %v543 = vand.u32 %v100, 4294901760
    %v544 = vsub.f32 %v100, %v543
    %545 = vmatprep.subr.mxu0 %v544
    %v546 = vand.u32 %v99, 4294901760
    %v547 = vsub.f32 %v99, %v546
    %548 = vmatpush1.msra.mxu0 %v547
    %v549 = vand.u32 %v104, 4294901760
    %v550 = vsub.f32 %v104, %v549
    %551 = vmatprep.subr.mxu0 %v550
    %v552 = vand.u32 %v103, 4294901760
    %v553 = vsub.f32 %v103, %v552
    %554 = vmatpush1.msra.mxu0 %v553
    %v555 = vand.u32 %v108, 4294901760
    %v556 = vsub.f32 %v108, %v555
    %557 = vmatprep.subr.mxu0 %v556
    %v558 = vand.u32 %v107, 4294901760
    %v559 = vsub.f32 %v107, %v558
    %560 = vmatpush1.msra.mxu0 %v559
    %v561 = vand.u32 %v112, 4294901760
    %v562 = vsub.f32 %v112, %v561
    %563 = vmatprep.subr.mxu0 %v562
    %v564 = vand.u32 %v111, 4294901760
    %v565 = vsub.f32 %v111, %v564
    %566 = vmatpush1.msra.mxu0 %v565
    %v567 = vand.u32 %v116, 4294901760
    %v568 = vsub.f32 %v116, %v567
    %569 = vmatprep.subr.mxu0 %v568
    %v570 = vand.u32 %v115, 4294901760
    %v571 = vsub.f32 %v115, %v570
    %572 = vmatpush1.msra.mxu0 %v571
    %v573 = vand.u32 %v120, 4294901760
    %v574 = vsub.f32 %v120, %v573
    %575 = vmatprep.subr.mxu0 %v574
    %v576 = vand.u32 %v119, 4294901760
    %v577 = vsub.f32 %v119, %v576
    %578 = vmatpush1.msra.mxu0 %v577
    %579 = vmatprep.subr.mxu0 0.0
    %580 = vmatpush1.msra.mxu0 0.0
    %581 = vmatprep.subr.mxu0 0.0
    %582 = vmatpush1.msra.mxu0 0.0
    %583 = vmatprep.subr.mxu0 0.0
    %584 = vmatpush1.msra.mxu0 0.0
    %585 = vmatprep.subr.mxu0 0.0
    %586 = vmatpush1.msra.mxu0 0.0
    %587 = vmatprep.subr.mxu0 0.0
    %588 = vmatpush1.msra.mxu0 0.0
    %589 = vmatprep.subr.mxu0 0.0
    %590 = vmatpush1.msra.mxu0 0.0
    %591 = vmatprep.subr.mxu0 0.0
    %592 = vmatpush1.msra.mxu0 0.0
    %593 = vmatprep.subr.mxu0 0.0
    %594 = vmatpush1.msra.mxu0 0.0
    %595 = vmatprep.subr.mxu0 0.0
    %596 = vmatpush1.msra.mxu0 0.0
    %597 = vmatprep.subr.mxu0 0.0
    %598 = vmatpush1.msra.mxu0 0.0
    %599 = vmatprep.subr.mxu0 0.0
    %600 = vmatpush1.msra.mxu0 0.0
    %601 = vmatprep.subr.mxu0 0.0
    %602 = vmatpush1.msra.mxu0 0.0
    %603 = vmatprep.subr.mxu0 0.0
    %604 = vmatpush1.msra.mxu0 0.0
    %605 = vmatprep.subr.mxu0 0.0
    %606 = vmatpush1.msra.mxu0 0.0
    %607 = vmatprep.subr.mxu0 0.0
    %608 = vmatpush1.msra.mxu0 0.0
    %609 = vmatprep.subr.mxu0 0.0
    %610 = vmatpush1.msra.mxu0 0.0
    %611 = vmatprep.mubr.f32.mxu0 0.0
    %v612 = vand.u32 %v123, 4294901760
    %v613 = vsub.f32 %v123, %v612
    %614 = vmatmul.mubr.f32.gmra.mrb[0].mxu0 %v613
    %v615 = vpop.f32.mrb[0].mxu0
    %v616 = vadd.f32 %v472, %v615
    %v617 = vpop.f32.mrb[0].mxu0
    %v618 = vadd.f32 %v474, %v617
    %619 = vmatprep.mubr.f32.mxu0 0.0
    %v620 = vand.u32 %v124, 4294901760
    %v621 = vsub.f32 %v124, %v620
    %622 = vmatmul.mubr.f32.gmra.mrb[0].mxu0 %v621
    %v623 = vpop.f32.mrb[0].mxu0
    %v624 = vadd.f32 %v479, %v623
    %v625 = vpop.f32.mrb[0].mxu0
    %v626 = vadd.f32 %v481, %v625
    %627 = vdwg.mxu0
    %v628 = vand.u32 %v60, 4294901760
    %629 = vmatprep.subr.mxu0 %v628
    %v630 = vand.u32 %v59, 4294901760
    %631 = vmatpush1.msra.mxu0 %v630
    %v632 = vand.u32 %v64, 4294901760
    %633 = vmatprep.subr.mxu0 %v632
    %v634 = vand.u32 %v63, 4294901760
    %635 = vmatpush1.msra.mxu0 %v634
    %v636 = vand.u32 %v68, 4294901760
    %637 = vmatprep.subr.mxu0 %v636
    %v638 = vand.u32 %v67, 4294901760
    %639 = vmatpush1.msra.mxu0 %v638
    %v640 = vand.u32 %v72, 4294901760
    %641 = vmatprep.subr.mxu0 %v640
    %v642 = vand.u32 %v71, 4294901760
    %643 = vmatpush1.msra.mxu0 %v642
    %v644 = vand.u32 %v76, 4294901760
    %645 = vmatprep.subr.mxu0 %v644
    %v646 = vand.u32 %v75, 4294901760
    %647 = vmatpush1.msra.mxu0 %v646
    %v648 = vand.u32 %v80, 4294901760
    %649 = vmatprep.subr.mxu0 %v648
    %v650 = vand.u32 %v79, 4294901760
    %651 = vmatpush1.msra.mxu0 %v650
    %v652 = vand.u32 %v84, 4294901760
    %653 = vmatprep.subr.mxu0 %v652
    %v654 = vand.u32 %v83, 4294901760
    %655 = vmatpush1.msra.mxu0 %v654
    %v656 = vand.u32 %v88, 4294901760
    %657 = vmatprep.subr.mxu0 %v656
    %v658 = vand.u32 %v87, 4294901760
    %659 = vmatpush1.msra.mxu0 %v658
    %v660 = vand.u32 %v92, 4294901760
    %661 = vmatprep.subr.mxu0 %v660
    %v662 = vand.u32 %v91, 4294901760
    %663 = vmatpush1.msra.mxu0 %v662
    %v664 = vand.u32 %v96, 4294901760
    %665 = vmatprep.subr.mxu0 %v664
    %v666 = vand.u32 %v95, 4294901760
    %667 = vmatpush1.msra.mxu0 %v666
    %v668 = vand.u32 %v100, 4294901760
    %669 = vmatprep.subr.mxu0 %v668
    %v670 = vand.u32 %v99, 4294901760
    %671 = vmatpush1.msra.mxu0 %v670
    %v672 = vand.u32 %v104, 4294901760
    %673 = vmatprep.subr.mxu0 %v672
    %v674 = vand.u32 %v103, 4294901760
    %675 = vmatpush1.msra.mxu0 %v674
    %v676 = vand.u32 %v108, 4294901760
    %677 = vmatprep.subr.mxu0 %v676
    %v678 = vand.u32 %v107, 4294901760
    %679 = vmatpush1.msra.mxu0 %v678
    %v680 = vand.u32 %v112, 4294901760
    %681 = vmatprep.subr.mxu0 %v680
    %v682 = vand.u32 %v111, 4294901760
    %683 = vmatpush1.msra.mxu0 %v682
    %v684 = vand.u32 %v116, 4294901760
    %685 = vmatprep.subr.mxu0 %v684
    %v686 = vand.u32 %v115, 4294901760
    %687 = vmatpush1.msra.mxu0 %v686
    %v688 = vand.u32 %v120, 4294901760
    %689 = vmatprep.subr.mxu0 %v688
    %v690 = vand.u32 %v119, 4294901760
    %691 = vmatpush1.msra.mxu0 %v690
    %692 = vmatprep.subr.mxu0 0.0
    %693 = vmatpush1.msra.mxu0 0.0
    %694 = vmatprep.subr.mxu0 0.0
    %695 = vmatpush1.msra.mxu0 0.0
    %696 = vmatprep.subr.mxu0 0.0
    %697 = vmatpush1.msra.mxu0 0.0
    %698 = vmatprep.subr.mxu0 0.0
    %699 = vmatpush1.msra.mxu0 0.0
    %700 = vmatprep.subr.mxu0 0.0
    %701 = vmatpush1.msra.mxu0 0.0
    %702 = vmatprep.subr.mxu0 0.0
    %703 = vmatpush1.msra.mxu0 0.0
    %704 = vmatprep.subr.mxu0 0.0
    %705 = vmatpush1.msra.mxu0 0.0
    %706 = vmatprep.subr.mxu0 0.0
    %707 = vmatpush1.msra.mxu0 0.0
    %708 = vmatprep.subr.mxu0 0.0
    %709 = vmatpush1.msra.mxu0 0.0
    %710 = vmatprep.subr.mxu0 0.0
    %711 = vmatpush1.msra.mxu0 0.0
    %712 = vmatprep.subr.mxu0 0.0
    %713 = vmatpush1.msra.mxu0 0.0
    %714 = vmatprep.subr.mxu0 0.0
    %715 = vmatpush1.msra.mxu0 0.0
    %716 = vmatprep.subr.mxu0 0.0
    %717 = vmatpush1.msra.mxu0 0.0
    %718 = vmatprep.subr.mxu0 0.0
    %719 = vmatpush1.msra.mxu0 0.0
    %720 = vmatprep.subr.mxu0 0.0
    %721 = vmatpush1.msra.mxu0 0.0
    %722 = vmatprep.subr.mxu0 0.0
    %723 = vmatpush1.msra.mxu0 0.0
    %724 = vmatprep.mubr.f32.mxu0 0.0
    %v725 = vand.u32 %v123, 4294901760
    %v726 = vsub.f32 %v123, %v725
    %v727 = vand.u32 %v726, 4294901760
    %728 = vmatmul.mubr.f32.gmra.mrb[0].mxu0 %v727
    %v729 = vpop.f32.mrb[0].mxu0
    %v730 = vadd.f32 %v616, %v729
    %v731 = vpop.f32.mrb[0].mxu0
    %v732 = vadd.f32 %v618, %v731
    %733 = vmatprep.mubr.f32.mxu0 0.0
    %v734 = vand.u32 %v124, 4294901760
    %v735 = vsub.f32 %v124, %v734
    %v736 = vand.u32 %v735, 4294901760
    %737 = vmatmul.mubr.f32.gmra.mrb[0].mxu0 %v736
    %v738 = vpop.f32.mrb[0].mxu0
    %v739 = vadd.f32 %v624, %v738
    %v740 = vpop.f32.mrb[0].mxu0
    %v741 = vadd.f32 %v626, %v740
    %742 = vdwg.mxu0
    %v743 = vand.u32 %v60, 4294901760
    %v744 = vsub.f32 %v60, %v743
    %v745 = vand.u32 %v744, 4294901760
    %746 = vmatprep.subr.mxu0 %v745
    %v747 = vand.u32 %v59, 4294901760
    %v748 = vsub.f32 %v59, %v747
    %v749 = vand.u32 %v748, 4294901760
    %750 = vmatpush1.msra.mxu0 %v749
    %v751 = vand.u32 %v64, 4294901760
    %v752 = vsub.f32 %v64, %v751
    %v753 = vand.u32 %v752, 4294901760
    %754 = vmatprep.subr.mxu0 %v753
    %v755 = vand.u32 %v63, 4294901760
    %v756 = vsub.f32 %v63, %v755
    %v757 = vand.u32 %v756, 4294901760
    %758 = vmatpush1.msra.mxu0 %v757
    %v759 = vand.u32 %v68, 4294901760
    %v760 = vsub.f32 %v68, %v759
    %v761 = vand.u32 %v760, 4294901760
    %762 = vmatprep.subr.mxu0 %v761
    %v763 = vand.u32 %v67, 4294901760
    %v764 = vsub.f32 %v67, %v763
    %v765 = vand.u32 %v764, 4294901760
    %766 = vmatpush1.msra.mxu0 %v765
    %v767 = vand.u32 %v72, 4294901760
    %v768 = vsub.f32 %v72, %v767
    %v769 = vand.u32 %v768, 4294901760
    %770 = vmatprep.subr.mxu0 %v769
    %v771 = vand.u32 %v71, 4294901760
    %v772 = vsub.f32 %v71, %v771
    %v773 = vand.u32 %v772, 4294901760
    %774 = vmatpush1.msra.mxu0 %v773
    %v775 = vand.u32 %v76, 4294901760
    %v776 = vsub.f32 %v76, %v775
    %v777 = vand.u32 %v776, 4294901760
    %778 = vmatprep.subr.mxu0 %v777
    %v779 = vand.u32 %v75, 4294901760
    %v780 = vsub.f32 %v75, %v779
    %v781 = vand.u32 %v780, 4294901760
    %782 = vmatpush1.msra.mxu0 %v781
    %v783 = vand.u32 %v80, 4294901760
    %v784 = vsub.f32 %v80, %v783
    %v785 = vand.u32 %v784, 4294901760
    %786 = vmatprep.subr.mxu0 %v785
    %v787 = vand.u32 %v79, 4294901760
    %v788 = vsub.f32 %v79, %v787
    %v789 = vand.u32 %v788, 4294901760
    %790 = vmatpush1.msra.mxu0 %v789
    %v791 = vand.u32 %v84, 4294901760
    %v792 = vsub.f32 %v84, %v791
    %v793 = vand.u32 %v792, 4294901760
    %794 = vmatprep.subr.mxu0 %v793
    %v795 = vand.u32 %v83, 4294901760
    %v796 = vsub.f32 %v83, %v795
    %v797 = vand.u32 %v796, 4294901760
    %798 = vmatpush1.msra.mxu0 %v797
    %v799 = vand.u32 %v88, 4294901760
    %v800 = vsub.f32 %v88, %v799
    %v801 = vand.u32 %v800, 4294901760
    %802 = vmatprep.subr.mxu0 %v801
    %v803 = vand.u32 %v87, 4294901760
    %v804 = vsub.f32 %v87, %v803
    %v805 = vand.u32 %v804, 4294901760
    %806 = vmatpush1.msra.mxu0 %v805
    %v807 = vand.u32 %v92, 4294901760
    %v808 = vsub.f32 %v92, %v807
    %v809 = vand.u32 %v808, 4294901760
    %810 = vmatprep.subr.mxu0 %v809
    %v811 = vand.u32 %v91, 4294901760
    %v812 = vsub.f32 %v91, %v811
    %v813 = vand.u32 %v812, 4294901760
    %814 = vmatpush1.msra.mxu0 %v813
    %v815 = vand.u32 %v96, 4294901760
    %v816 = vsub.f32 %v96, %v815
    %v817 = vand.u32 %v816, 4294901760
    %818 = vmatprep.subr.mxu0 %v817
    %v819 = vand.u32 %v95, 4294901760
    %v820 = vsub.f32 %v95, %v819
    %v821 = vand.u32 %v820, 4294901760
    %822 = vmatpush1.msra.mxu0 %v821
    %v823 = vand.u32 %v100, 4294901760
    %v824 = vsub.f32 %v100, %v823
    %v825 = vand.u32 %v824, 4294901760
    %826 = vmatprep.subr.mxu0 %v825
    %v827 = vand.u32 %v99, 4294901760
    %v828 = vsub.f32 %v99, %v827
    %v829 = vand.u32 %v828, 4294901760
    %830 = vmatpush1.msra.mxu0 %v829
    %v831 = vand.u32 %v104, 4294901760
    %v832 = vsub.f32 %v104, %v831
    %v833 = vand.u32 %v832, 4294901760
    %834 = vmatprep.subr.mxu0 %v833
    %v835 = vand.u32 %v103, 4294901760
    %v836 = vsub.f32 %v103, %v835
    %v837 = vand.u32 %v836, 4294901760
    %838 = vmatpush1.msra.mxu0 %v837
    %v839 = vand.u32 %v108, 4294901760
    %v840 = vsub.f32 %v108, %v839
    %v841 = vand.u32 %v840, 4294901760
    %842 = vmatprep.subr.mxu0 %v841
    %v843 = vand.u32 %v107, 4294901760
    %v844 = vsub.f32 %v107, %v843
    %v845 = vand.u32 %v844, 4294901760
    %846 = vmatpush1.msra.mxu0 %v845
    %v847 = vand.u32 %v112, 4294901760
    %v848 = vsub.f32 %v112, %v847
    %v849 = vand.u32 %v848, 4294901760
    %850 = vmatprep.subr.mxu0 %v849
    %v851 = vand.u32 %v111, 4294901760
    %v852 = vsub.f32 %v111, %v851
    %v853 = vand.u32 %v852, 4294901760
    %854 = vmatpush1.msra.mxu0 %v853
    %v855 = vand.u32 %v116, 4294901760
    %v856 = vsub.f32 %v116, %v855
    %v857 = vand.u32 %v856, 4294901760
    %858 = vmatprep.subr.mxu0 %v857
    %v859 = vand.u32 %v115, 4294901760
    %v860 = vsub.f32 %v115, %v859
    %v861 = vand.u32 %v860, 4294901760
    %862 = vmatpush1.msra.mxu0 %v861
    %v863 = vand.u32 %v120, 4294901760
    %v864 = vsub.f32 %v120, %v863
    %v865 = vand.u32 %v864, 4294901760
    %866 = vmatprep.subr.mxu0 %v865
    %v867 = vand.u32 %v119, 4294901760
    %v868 = vsub.f32 %v119, %v867
    %v869 = vand.u32 %v868, 4294901760
    %870 = vmatpush1.msra.mxu0 %v869
    %871 = vmatprep.subr.mxu0 0.0
    %872 = vmatpush1.msra.mxu0 0.0
    %873 = vmatprep.subr.mxu0 0.0
    %874 = vmatpush1.msra.mxu0 0.0
    %875 = vmatprep.subr.mxu0 0.0
    %876 = vmatpush1.msra.mxu0 0.0
    %877 = vmatprep.subr.mxu0 0.0
    %878 = vmatpush1.msra.mxu0 0.0
    %879 = vmatprep.subr.mxu0 0.0
    %880 = vmatpush1.msra.mxu0 0.0
    %881 = vmatprep.subr.mxu0 0.0
    %882 = vmatpush1.msra.mxu0 0.0
    %883 = vmatprep.subr.mxu0 0.0
    %884 = vmatpush1.msra.mxu0 0.0
    %885 = vmatprep.subr.mxu0 0.0
    %886 = vmatpush1.msra.mxu0 0.0
    %887 = vmatprep.subr.mxu0 0.0
    %888 = vmatpush1.msra.mxu0 0.0
    %889 = vmatprep.subr.mxu0 0.0
    %890 = vmatpush1.msra.mxu0 0.0
    %891 = vmatprep.subr.mxu0 0.0
    %892 = vmatpush1.msra.mxu0 0.0
    %893 = vmatprep.subr.mxu0 0.0
    %894 = vmatpush1.msra.mxu0 0.0
    %895 = vmatprep.subr.mxu0 0.0
    %896 = vmatpush1.msra.mxu0 0.0
    %897 = vmatprep.subr.mxu0 0.0
    %898 = vmatpush1.msra.mxu0 0.0
    %899 = vmatprep.subr.mxu0 0.0
    %900 = vmatpush1.msra.mxu0 0.0
    %901 = vmatprep.subr.mxu0 0.0
    %902 = vmatpush1.msra.mxu0 0.0
    %903 = vmatprep.mubr.f32.mxu0 0.0
    %v904 = vand.u32 %v123, 4294901760
    %905 = vmatmul.mubr.f32.gmra.mrb[0].mxu0 %v904
    %v906 = vpop.f32.mrb[0].mxu0
    %v907 = vadd.f32 %v730, %v906
    %v908 = vpop.f32.mrb[0].mxu0
    %v909 = vadd.f32 %v732, %v908
    %910 = vmatprep.mubr.f32.mxu0 0.0
    %v911 = vand.u32 %v124, 4294901760
    %912 = vmatmul.mubr.f32.gmra.mrb[0].mxu0 %v911
    %v913 = vpop.f32.mrb[0].mxu0
    %v914 = vadd.f32 %v739, %v913
    %v915 = vpop.f32.mrb[0].mxu0
    %v916 = vadd.f32 %v741, %v915
    %917 = vdwg.mxu0
    %v918 = vand.u32 %v60, 4294901760
    %919 = vmatprep.subr.mxu0 %v918
    %v920 = vand.u32 %v59, 4294901760
    %921 = vmatpush1.msra.mxu0 %v920
    %v922 = vand.u32 %v64, 4294901760
    %923 = vmatprep.subr.mxu0 %v922
    %v924 = vand.u32 %v63, 4294901760
    %925 = vmatpush1.msra.mxu0 %v924
    %v926 = vand.u32 %v68, 4294901760
    %927 = vmatprep.subr.mxu0 %v926
    %v928 = vand.u32 %v67, 4294901760
    %929 = vmatpush1.msra.mxu0 %v928
    %v930 = vand.u32 %v72, 4294901760
    %931 = vmatprep.subr.mxu0 %v930
    %v932 = vand.u32 %v71, 4294901760
    %933 = vmatpush1.msra.mxu0 %v932
    %v934 = vand.u32 %v76, 4294901760
    %935 = vmatprep.subr.mxu0 %v934
    %v936 = vand.u32 %v75, 4294901760
    %937 = vmatpush1.msra.mxu0 %v936
    %v938 = vand.u32 %v80, 4294901760
    %939 = vmatprep.subr.mxu0 %v938
    %v940 = vand.u32 %v79, 4294901760
    %941 = vmatpush1.msra.mxu0 %v940
    %v942 = vand.u32 %v84, 4294901760
    %943 = vmatprep.subr.mxu0 %v942
    %v944 = vand.u32 %v83, 4294901760
    %945 = vmatpush1.msra.mxu0 %v944
    %v946 = vand.u32 %v88, 4294901760
    %947 = vmatprep.subr.mxu0 %v946
    %v948 = vand.u32 %v87, 4294901760
    %949 = vmatpush1.msra.mxu0 %v948
    %v950 = vand.u32 %v92, 4294901760
    %951 = vmatprep.subr.mxu0 %v950
    %v952 = vand.u32 %v91, 4294901760
    %953 = vmatpush1.msra.mxu0 %v952
    %v954 = vand.u32 %v96, 4294901760
    %955 = vmatprep.subr.mxu0 %v954
    %v956 = vand.u32 %v95, 4294901760
    %957 = vmatpush1.msra.mxu0 %v956
    %v958 = vand.u32 %v100, 4294901760
    %959 = vmatprep.subr.mxu0 %v958
    %v960 = vand.u32 %v99, 4294901760
    %961 = vmatpush1.msra.mxu0 %v960
    %v962 = vand.u32 %v104, 4294901760
    %963 = vmatprep.subr.mxu0 %v962
    %v964 = vand.u32 %v103, 4294901760
    %965 = vmatpush1.msra.mxu0 %v964
    %v966 = vand.u32 %v108, 4294901760
    %967 = vmatprep.subr.mxu0 %v966
    %v968 = vand.u32 %v107, 4294901760
    %969 = vmatpush1.msra.mxu0 %v968
    %v970 = vand.u32 %v112, 4294901760
    %971 = vmatprep.subr.mxu0 %v970
    %v972 = vand.u32 %v111, 4294901760
    %973 = vmatpush1.msra.mxu0 %v972
    %v974 = vand.u32 %v116, 4294901760
    %975 = vmatprep.subr.mxu0 %v974
    %v976 = vand.u32 %v115, 4294901760
    %977 = vmatpush1.msra.mxu0 %v976
    %v978 = vand.u32 %v120, 4294901760
    %979 = vmatprep.subr.mxu0 %v978
    %v980 = vand.u32 %v119, 4294901760
    %981 = vmatpush1.msra.mxu0 %v980
    %982 = vmatprep.subr.mxu0 0.0
    %983 = vmatpush1.msra.mxu0 0.0
    %984 = vmatprep.subr.mxu0 0.0
    %985 = vmatpush1.msra.mxu0 0.0
    %986 = vmatprep.subr.mxu0 0.0
    %987 = vmatpush1.msra.mxu0 0.0
    %988 = vmatprep.subr.mxu0 0.0
    %989 = vmatpush1.msra.mxu0 0.0
    %990 = vmatprep.subr.mxu0 0.0
    %991 = vmatpush1.msra.mxu0 0.0
    %992 = vmatprep.subr.mxu0 0.0
    %993 = vmatpush1.msra.mxu0 0.0
    %994 = vmatprep.subr.mxu0 0.0
    %995 = vmatpush1.msra.mxu0 0.0
    %996 = vmatprep.subr.mxu0 0.0
    %997 = vmatpush1.msra.mxu0 0.0
    %998 = vmatprep.subr.mxu0 0.0
    %999 = vmatpush1.msra.mxu0 0.0
    %1000 = vmatprep.subr.mxu0 0.0
    %1001 = vmatpush1.msra.mxu0 0.0
    %1002 = vmatprep.subr.mxu0 0.0
    %1003 = vmatpush1.msra.mxu0 0.0
    %1004 = vmatprep.subr.mxu0 0.0
    %1005 = vmatpush1.msra.mxu0 0.0
    %1006 = vmatprep.subr.mxu0 0.0
    %1007 = vmatpush1.msra.mxu0 0.0
    %1008 = vmatprep.subr.mxu0 0.0
    %1009 = vmatpush1.msra.mxu0 0.0
    %1010 = vmatprep.subr.mxu0 0.0
    %1011 = vmatpush1.msra.mxu0 0.0
    %1012 = vmatprep.subr.mxu0 0.0
    %1013 = vmatpush1.msra.mxu0 0.0
    %1014 = vmatprep.mubr.f32.mxu0 0.0
    %v1015 = vand.u32 %v123, 4294901760
    %1016 = vmatmul.mubr.f32.gmra.mrb[0].mxu0 %v1015
    %v1017 = vpop.f32.mrb[0].mxu0
    %v1018 = vadd.f32 %v907, %v1017
    %v1019 = vpop.f32.mrb[0].mxu0
    %v1020 = vadd.f32 %v909, %v1019
    %1021 = vmatprep.mubr.f32.mxu0 0.0
    %v1022 = vand.u32 %v124, 4294901760
    %1023 = vmatmul.mubr.f32.gmra.mrb[0].mxu0 %v1022
    %v1024 = vpop.f32.mrb[0].mxu0
    %v1025 = vadd.f32 %v914, %v1024
    %v1026 = vpop.f32.mrb[0].mxu0
    %v1027 = vadd.f32 %v916, %v1026
    %1028 = vdwg.mxu0
    %v1029 = vand.u32 %v62, 4294901760
    %1030 = vmatprep.subr.mxu0 %v1029
    %v1031 = vand.u32 %v61, 4294901760
    %1032 = vmatpush1.msra.mxu0 %v1031
    %v1033 = vand.u32 %v66, 4294901760
    %1034 = vmatprep.subr.mxu0 %v1033
    %v1035 = vand.u32 %v65, 4294901760
    %1036 = vmatpush1.msra.mxu0 %v1035
    %v1037 = vand.u32 %v70, 4294901760
    %1038 = vmatprep.subr.mxu0 %v1037
    %v1039 = vand.u32 %v69, 4294901760
    %1040 = vmatpush1.msra.mxu0 %v1039
    %v1041 = vand.u32 %v74, 4294901760
    %1042 = vmatprep.subr.mxu0 %v1041
    %v1043 = vand.u32 %v73, 4294901760
    %1044 = vmatpush1.msra.mxu0 %v1043
    %v1045 = vand.u32 %v78, 4294901760
    %1046 = vmatprep.subr.mxu0 %v1045
    %v1047 = vand.u32 %v77, 4294901760
    %1048 = vmatpush1.msra.mxu0 %v1047
    %v1049 = vand.u32 %v82, 4294901760
    %1050 = vmatprep.subr.mxu0 %v1049
    %v1051 = vand.u32 %v81, 4294901760
    %1052 = vmatpush1.msra.mxu0 %v1051
    %v1053 = vand.u32 %v86, 4294901760
    %1054 = vmatprep.subr.mxu0 %v1053
    %v1055 = vand.u32 %v85, 4294901760
    %1056 = vmatpush1.msra.mxu0 %v1055
    %v1057 = vand.u32 %v90, 4294901760
    %1058 = vmatprep.subr.mxu0 %v1057
    %v1059 = vand.u32 %v89, 4294901760
    %1060 = vmatpush1.msra.mxu0 %v1059
    %v1061 = vand.u32 %v94, 4294901760
    %1062 = vmatprep.subr.mxu0 %v1061
    %v1063 = vand.u32 %v93, 4294901760
    %1064 = vmatpush1.msra.mxu0 %v1063
    %v1065 = vand.u32 %v98, 4294901760
    %1066 = vmatprep.subr.mxu0 %v1065
    %v1067 = vand.u32 %v97, 4294901760
    %1068 = vmatpush1.msra.mxu0 %v1067
    %v1069 = vand.u32 %v102, 4294901760
    %1070 = vmatprep.subr.mxu0 %v1069
    %v1071 = vand.u32 %v101, 4294901760
    %1072 = vmatpush1.msra.mxu0 %v1071
    %v1073 = vand.u32 %v106, 4294901760
    %1074 = vmatprep.subr.mxu0 %v1073
    %v1075 = vand.u32 %v105, 4294901760
    %1076 = vmatpush1.msra.mxu0 %v1075
    %v1077 = vand.u32 %v110, 4294901760
    %1078 = vmatprep.subr.mxu0 %v1077
    %v1079 = vand.u32 %v109, 4294901760
    %1080 = vmatpush1.msra.mxu0 %v1079
    %v1081 = vand.u32 %v114, 4294901760
    %1082 = vmatprep.subr.mxu0 %v1081
    %v1083 = vand.u32 %v113, 4294901760
    %1084 = vmatpush1.msra.mxu0 %v1083
    %v1085 = vand.u32 %v118, 4294901760
    %1086 = vmatprep.subr.mxu0 %v1085
    %v1087 = vand.u32 %v117, 4294901760
    %1088 = vmatpush1.msra.mxu0 %v1087
    %v1089 = vand.u32 %v122, 4294901760
    %1090 = vmatprep.subr.mxu0 %v1089
    %v1091 = vand.u32 %v121, 4294901760
    %1092 = vmatpush1.msra.mxu0 %v1091
    %1093 = vmatprep.subr.mxu0 0.0
    %1094 = vmatpush1.msra.mxu0 0.0
    %1095 = vmatprep.subr.mxu0 0.0
    %1096 = vmatpush1.msra.mxu0 0.0
    %1097 = vmatprep.subr.mxu0 0.0
    %1098 = vmatpush1.msra.mxu0 0.0
    %1099 = vmatprep.subr.mxu0 0.0
    %1100 = vmatpush1.msra.mxu0 0.0
    %1101 = vmatprep.subr.mxu0 0.0
    %1102 = vmatpush1.msra.mxu0 0.0
    %1103 = vmatprep.subr.mxu0 0.0
    %1104 = vmatpush1.msra.mxu0 0.0
    %1105 = vmatprep.subr.mxu0 0.0
    %1106 = vmatpush1.msra.mxu0 0.0
    %1107 = vmatprep.subr.mxu0 0.0
    %1108 = vmatpush1.msra.mxu0 0.0
    %1109 = vmatprep.subr.mxu0 0.0
    %1110 = vmatpush1.msra.mxu0 0.0
    %1111 = vmatprep.subr.mxu0 0.0
    %1112 = vmatpush1.msra.mxu0 0.0
    %1113 = vmatprep.subr.mxu0 0.0
    %1114 = vmatpush1.msra.mxu0 0.0
    %1115 = vmatprep.subr.mxu0 0.0
    %1116 = vmatpush1.msra.mxu0 0.0
    %1117 = vmatprep.subr.mxu0 0.0
    %1118 = vmatpush1.msra.mxu0 0.0
    %1119 = vmatprep.subr.mxu0 0.0
    %1120 = vmatpush1.msra.mxu0 0.0
    %1121 = vmatprep.subr.mxu0 0.0
    %1122 = vmatpush1.msra.mxu0 0.0
    %1123 = vmatprep.subr.mxu0 0.0
    %1124 = vmatpush1.msra.mxu0 0.0
    %1125 = vmatprep.mubr.f32.mxu0 0.0
    %v1126 = vand.u32 %v123, 4294901760
    %v1127 = vsub.f32 %v123, %v1126
    %v1128 = vand.u32 %v1127, 4294901760
    %v1129 = vsub.f32 %v1127, %v1128
    %v1130 = vand.u32 %v1129, 4294901760
    %1131 = vmatmul.mubr.f32.gmra.mrb[0].mxu0 %v1130
    %v1132 = vpop.f32.mrb[0].mxu0
    %v1133 = vadd.f32 0.0, %v1132
    %v1134 = vpop.f32.mrb[0].mxu0
    %v1135 = vadd.f32 0.0, %v1134
    %1136 = vmatprep.mubr.f32.mxu0 0.0
    %v1137 = vand.u32 %v124, 4294901760
    %v1138 = vsub.f32 %v124, %v1137
    %v1139 = vand.u32 %v1138, 4294901760
    %v1140 = vsub.f32 %v1138, %v1139
    %v1141 = vand.u32 %v1140, 4294901760
    %1142 = vmatmul.mubr.f32.gmra.mrb[0].mxu0 %v1141
    %v1143 = vpop.f32.mrb[0].mxu0
    %v1144 = vadd.f32 0.0, %v1143
    %v1145 = vpop.f32.mrb[0].mxu0
    %v1146 = vadd.f32 0.0, %v1145
    %1147 = vdwg.mxu0
    %v1148 = vand.u32 %v62, 4294901760
    %v1149 = vsub.f32 %v62, %v1148
    %v1150 = vand.u32 %v1149, 4294901760
    %v1151 = vsub.f32 %v1149, %v1150
    %v1152 = vand.u32 %v1151, 4294901760
    %1153 = vmatprep.subr.mxu0 %v1152
    %v1154 = vand.u32 %v61, 4294901760
    %v1155 = vsub.f32 %v61, %v1154
    %v1156 = vand.u32 %v1155, 4294901760
    %v1157 = vsub.f32 %v1155, %v1156
    %v1158 = vand.u32 %v1157, 4294901760
    %1159 = vmatpush1.msra.mxu0 %v1158
    %v1160 = vand.u32 %v66, 4294901760
    %v1161 = vsub.f32 %v66, %v1160
    %v1162 = vand.u32 %v1161, 4294901760
    %v1163 = vsub.f32 %v1161, %v1162
    %v1164 = vand.u32 %v1163, 4294901760
    %1165 = vmatprep.subr.mxu0 %v1164
    %v1166 = vand.u32 %v65, 4294901760
    %v1167 = vsub.f32 %v65, %v1166
    %v1168 = vand.u32 %v1167, 4294901760
    %v1169 = vsub.f32 %v1167, %v1168
    %v1170 = vand.u32 %v1169, 4294901760
    %1171 = vmatpush1.msra.mxu0 %v1170
    %v1172 = vand.u32 %v70, 4294901760
    %v1173 = vsub.f32 %v70, %v1172
    %v1174 = vand.u32 %v1173, 4294901760
    %v1175 = vsub.f32 %v1173, %v1174
    %v1176 = vand.u32 %v1175, 4294901760
    %1177 = vmatprep.subr.mxu0 %v1176
    %v1178 = vand.u32 %v69, 4294901760
    %v1179 = vsub.f32 %v69, %v1178
    %v1180 = vand.u32 %v1179, 4294901760
    %v1181 = vsub.f32 %v1179, %v1180
    %v1182 = vand.u32 %v1181, 4294901760
    %1183 = vmatpush1.msra.mxu0 %v1182
    %v1184 = vand.u32 %v74, 4294901760
    %v1185 = vsub.f32 %v74, %v1184
    %v1186 = vand.u32 %v1185, 4294901760
    %v1187 = vsub.f32 %v1185, %v1186
    %v1188 = vand.u32 %v1187, 4294901760
    %1189 = vmatprep.subr.mxu0 %v1188
    %v1190 = vand.u32 %v73, 4294901760
    %v1191 = vsub.f32 %v73, %v1190
    %v1192 = vand.u32 %v1191, 4294901760
    %v1193 = vsub.f32 %v1191, %v1192
    %v1194 = vand.u32 %v1193, 4294901760
    %1195 = vmatpush1.msra.mxu0 %v1194
    %v1196 = vand.u32 %v78, 4294901760
    %v1197 = vsub.f32 %v78, %v1196
    %v1198 = vand.u32 %v1197, 4294901760
    %v1199 = vsub.f32 %v1197, %v1198
    %v1200 = vand.u32 %v1199, 4294901760
    %1201 = vmatprep.subr.mxu0 %v1200
    %v1202 = vand.u32 %v77, 4294901760
    %v1203 = vsub.f32 %v77, %v1202
    %v1204 = vand.u32 %v1203, 4294901760
    %v1205 = vsub.f32 %v1203, %v1204
    %v1206 = vand.u32 %v1205, 4294901760
    %1207 = vmatpush1.msra.mxu0 %v1206
    %v1208 = vand.u32 %v82, 4294901760
    %v1209 = vsub.f32 %v82, %v1208
    %v1210 = vand.u32 %v1209, 4294901760
    %v1211 = vsub.f32 %v1209, %v1210
    %v1212 = vand.u32 %v1211, 4294901760
    %1213 = vmatprep.subr.mxu0 %v1212
    %v1214 = vand.u32 %v81, 4294901760
    %v1215 = vsub.f32 %v81, %v1214
    %v1216 = vand.u32 %v1215, 4294901760
    %v1217 = vsub.f32 %v1215, %v1216
    %v1218 = vand.u32 %v1217, 4294901760
    %1219 = vmatpush1.msra.mxu0 %v1218
    %v1220 = vand.u32 %v86, 4294901760
    %v1221 = vsub.f32 %v86, %v1220
    %v1222 = vand.u32 %v1221, 4294901760
    %v1223 = vsub.f32 %v1221, %v1222
    %v1224 = vand.u32 %v1223, 4294901760
    %1225 = vmatprep.subr.mxu0 %v1224
    %v1226 = vand.u32 %v85, 4294901760
    %v1227 = vsub.f32 %v85, %v1226
    %v1228 = vand.u32 %v1227, 4294901760
    %v1229 = vsub.f32 %v1227, %v1228
    %v1230 = vand.u32 %v1229, 4294901760
    %1231 = vmatpush1.msra.mxu0 %v1230
    %v1232 = vand.u32 %v90, 4294901760
    %v1233 = vsub.f32 %v90, %v1232
    %v1234 = vand.u32 %v1233, 4294901760
    %v1235 = vsub.f32 %v1233, %v1234
    %v1236 = vand.u32 %v1235, 4294901760
    %1237 = vmatprep.subr.mxu0 %v1236
    %v1238 = vand.u32 %v89, 4294901760
    %v1239 = vsub.f32 %v89, %v1238
    %v1240 = vand.u32 %v1239, 4294901760
    %v1241 = vsub.f32 %v1239, %v1240
    %v1242 = vand.u32 %v1241, 4294901760
    %1243 = vmatpush1.msra.mxu0 %v1242
    %v1244 = vand.u32 %v94, 4294901760
    %v1245 = vsub.f32 %v94, %v1244
    %v1246 = vand.u32 %v1245, 4294901760
    %v1247 = vsub.f32 %v1245, %v1246
    %v1248 = vand.u32 %v1247, 4294901760
    %1249 = vmatprep.subr.mxu0 %v1248
    %v1250 = vand.u32 %v93, 4294901760
    %v1251 = vsub.f32 %v93, %v1250
    %v1252 = vand.u32 %v1251, 4294901760
    %v1253 = vsub.f32 %v1251, %v1252
    %v1254 = vand.u32 %v1253, 4294901760
    %1255 = vmatpush1.msra.mxu0 %v1254
    %v1256 = vand.u32 %v98, 4294901760
    %v1257 = vsub.f32 %v98, %v1256
    %v1258 = vand.u32 %v1257, 4294901760
    %v1259 = vsub.f32 %v1257, %v1258
    %v1260 = vand.u32 %v1259, 4294901760
    %1261 = vmatprep.subr.mxu0 %v1260
    %v1262 = vand.u32 %v97, 4294901760
    %v1263 = vsub.f32 %v97, %v1262
    %v1264 = vand.u32 %v1263, 4294901760
    %v1265 = vsub.f32 %v1263, %v1264
    %v1266 = vand.u32 %v1265, 4294901760
    %1267 = vmatpush1.msra.mxu0 %v1266
    %v1268 = vand.u32 %v102, 4294901760
    %v1269 = vsub.f32 %v102, %v1268
    %v1270 = vand.u32 %v1269, 4294901760
    %v1271 = vsub.f32 %v1269, %v1270
    %v1272 = vand.u32 %v1271, 4294901760
    %1273 = vmatprep.subr.mxu0 %v1272
    %v1274 = vand.u32 %v101, 4294901760
    %v1275 = vsub.f32 %v101, %v1274
    %v1276 = vand.u32 %v1275, 4294901760
    %v1277 = vsub.f32 %v1275, %v1276
    %v1278 = vand.u32 %v1277, 4294901760
    %1279 = vmatpush1.msra.mxu0 %v1278
    %v1280 = vand.u32 %v106, 4294901760
    %v1281 = vsub.f32 %v106, %v1280
    %v1282 = vand.u32 %v1281, 4294901760
    %v1283 = vsub.f32 %v1281, %v1282
    %v1284 = vand.u32 %v1283, 4294901760
    %1285 = vmatprep.subr.mxu0 %v1284
    %v1286 = vand.u32 %v105, 4294901760
    %v1287 = vsub.f32 %v105, %v1286
    %v1288 = vand.u32 %v1287, 4294901760
    %v1289 = vsub.f32 %v1287, %v1288
    %v1290 = vand.u32 %v1289, 4294901760
    %1291 = vmatpush1.msra.mxu0 %v1290
    %v1292 = vand.u32 %v110, 4294901760
    %v1293 = vsub.f32 %v110, %v1292
    %v1294 = vand.u32 %v1293, 4294901760
    %v1295 = vsub.f32 %v1293, %v1294
    %v1296 = vand.u32 %v1295, 4294901760
    %1297 = vmatprep.subr.mxu0 %v1296
    %v1298 = vand.u32 %v109, 4294901760
    %v1299 = vsub.f32 %v109, %v1298
    %v1300 = vand.u32 %v1299, 4294901760
    %v1301 = vsub.f32 %v1299, %v1300
    %v1302 = vand.u32 %v1301, 4294901760
    %1303 = vmatpush1.msra.mxu0 %v1302
    %v1304 = vand.u32 %v114, 4294901760
    %v1305 = vsub.f32 %v114, %v1304
    %v1306 = vand.u32 %v1305, 4294901760
    %v1307 = vsub.f32 %v1305, %v1306
    %v1308 = vand.u32 %v1307, 4294901760
    %1309 = vmatprep.subr.mxu0 %v1308
    %v1310 = vand.u32 %v113, 4294901760
    %v1311 = vsub.f32 %v113, %v1310
    %v1312 = vand.u32 %v1311, 4294901760
    %v1313 = vsub.f32 %v1311, %v1312
    %v1314 = vand.u32 %v1313, 4294901760
    %1315 = vmatpush1.msra.mxu0 %v1314
    %v1316 = vand.u32 %v118, 4294901760
    %v1317 = vsub.f32 %v118, %v1316
    %v1318 = vand.u32 %v1317, 4294901760
    %v1319 = vsub.f32 %v1317, %v1318
    %v1320 = vand.u32 %v1319, 4294901760
    %1321 = vmatprep.subr.mxu0 %v1320
    %v1322 = vand.u32 %v117, 4294901760
    %v1323 = vsub.f32 %v117, %v1322
    %v1324 = vand.u32 %v1323, 4294901760
    %v1325 = vsub.f32 %v1323, %v1324
    %v1326 = vand.u32 %v1325, 4294901760
    %1327 = vmatpush1.msra.mxu0 %v1326
    %v1328 = vand.u32 %v122, 4294901760
    %v1329 = vsub.f32 %v122, %v1328
    %v1330 = vand.u32 %v1329, 4294901760
    %v1331 = vsub.f32 %v1329, %v1330
    %v1332 = vand.u32 %v1331, 4294901760
    %1333 = vmatprep.subr.mxu0 %v1332
    %v1334 = vand.u32 %v121, 4294901760
    %v1335 = vsub.f32 %v121, %v1334
    %v1336 = vand.u32 %v1335, 4294901760
    %v1337 = vsub.f32 %v1335, %v1336
    %v1338 = vand.u32 %v1337, 4294901760
    %1339 = vmatpush1.msra.mxu0 %v1338
    %1340 = vmatprep.subr.mxu0 0.0
    %1341 = vmatpush1.msra.mxu0 0.0
    %1342 = vmatprep.subr.mxu0 0.0
    %1343 = vmatpush1.msra.mxu0 0.0
    %1344 = vmatprep.subr.mxu0 0.0
    %1345 = vmatpush1.msra.mxu0 0.0
    %1346 = vmatprep.subr.mxu0 0.0
    %1347 = vmatpush1.msra.mxu0 0.0
    %1348 = vmatprep.subr.mxu0 0.0
    %1349 = vmatpush1.msra.mxu0 0.0
    %1350 = vmatprep.subr.mxu0 0.0
    %1351 = vmatpush1.msra.mxu0 0.0
    %1352 = vmatprep.subr.mxu0 0.0
    %1353 = vmatpush1.msra.mxu0 0.0
    %1354 = vmatprep.subr.mxu0 0.0
    %1355 = vmatpush1.msra.mxu0 0.0
    %1356 = vmatprep.subr.mxu0 0.0
    %1357 = vmatpush1.msra.mxu0 0.0
    %1358 = vmatprep.subr.mxu0 0.0
    %1359 = vmatpush1.msra.mxu0 0.0
    %1360 = vmatprep.subr.mxu0 0.0
    %1361 = vmatpush1.msra.mxu0 0.0
    %1362 = vmatprep.subr.mxu0 0.0
    %1363 = vmatpush1.msra.mxu0 0.0
    %1364 = vmatprep.subr.mxu0 0.0
    %1365 = vmatpush1.msra.mxu0 0.0
    %1366 = vmatprep.subr.mxu0 0.0
    %1367 = vmatpush1.msra.mxu0 0.0
    %1368 = vmatprep.subr.mxu0 0.0
    %1369 = vmatpush1.msra.mxu0 0.0
    %1370 = vmatprep.subr.mxu0 0.0
    %1371 = vmatpush1.msra.mxu0 0.0
    %1372 = vmatprep.mubr.f32.mxu0 0.0
    %v1373 = vand.u32 %v123, 4294901760
    %1374 = vmatmul.mubr.f32.gmra.mrb[0].mxu0 %v1373
    %v1375 = vpop.f32.mrb[0].mxu0
    %v1376 = vadd.f32 %v1133, %v1375
    %v1377 = vpop.f32.mrb[0].mxu0
    %v1378 = vadd.f32 %v1135, %v1377
    %1379 = vmatprep.mubr.f32.mxu0 0.0
    %v1380 = vand.u32 %v124, 4294901760
    %1381 = vmatmul.mubr.f32.gmra.mrb[0].mxu0 %v1380
    %v1382 = vpop.f32.mrb[0].mxu0
    %v1383 = vadd.f32 %v1144, %v1382
    %v1384 = vpop.f32.mrb[0].mxu0
    %v1385 = vadd.f32 %v1146, %v1384
    %1386 = vdwg.mxu0
    %v1387 = vand.u32 %v62, 4294901760
    %v1388 = vsub.f32 %v62, %v1387
    %1389 = vmatprep.subr.mxu0 %v1388
    %v1390 = vand.u32 %v61, 4294901760
    %v1391 = vsub.f32 %v61, %v1390
    %1392 = vmatpush1.msra.mxu0 %v1391
    %v1393 = vand.u32 %v66, 4294901760
    %v1394 = vsub.f32 %v66, %v1393
    %1395 = vmatprep.subr.mxu0 %v1394
    %v1396 = vand.u32 %v65, 4294901760
    %v1397 = vsub.f32 %v65, %v1396
    %1398 = vmatpush1.msra.mxu0 %v1397
    %v1399 = vand.u32 %v70, 4294901760
    %v1400 = vsub.f32 %v70, %v1399
    %1401 = vmatprep.subr.mxu0 %v1400
    %v1402 = vand.u32 %v69, 4294901760
    %v1403 = vsub.f32 %v69, %v1402
    %1404 = vmatpush1.msra.mxu0 %v1403
    %v1405 = vand.u32 %v74, 4294901760
    %v1406 = vsub.f32 %v74, %v1405
    %1407 = vmatprep.subr.mxu0 %v1406
    %v1408 = vand.u32 %v73, 4294901760
    %v1409 = vsub.f32 %v73, %v1408
    %1410 = vmatpush1.msra.mxu0 %v1409
    %v1411 = vand.u32 %v78, 4294901760
    %v1412 = vsub.f32 %v78, %v1411
    %1413 = vmatprep.subr.mxu0 %v1412
    %v1414 = vand.u32 %v77, 4294901760
    %v1415 = vsub.f32 %v77, %v1414
    %1416 = vmatpush1.msra.mxu0 %v1415
    %v1417 = vand.u32 %v82, 4294901760
    %v1418 = vsub.f32 %v82, %v1417
    %1419 = vmatprep.subr.mxu0 %v1418
    %v1420 = vand.u32 %v81, 4294901760
    %v1421 = vsub.f32 %v81, %v1420
    %1422 = vmatpush1.msra.mxu0 %v1421
    %v1423 = vand.u32 %v86, 4294901760
    %v1424 = vsub.f32 %v86, %v1423
    %1425 = vmatprep.subr.mxu0 %v1424
    %v1426 = vand.u32 %v85, 4294901760
    %v1427 = vsub.f32 %v85, %v1426
    %1428 = vmatpush1.msra.mxu0 %v1427
    %v1429 = vand.u32 %v90, 4294901760
    %v1430 = vsub.f32 %v90, %v1429
    %1431 = vmatprep.subr.mxu0 %v1430
    %v1432 = vand.u32 %v89, 4294901760
    %v1433 = vsub.f32 %v89, %v1432
    %1434 = vmatpush1.msra.mxu0 %v1433
    %v1435 = vand.u32 %v94, 4294901760
    %v1436 = vsub.f32 %v94, %v1435
    %1437 = vmatprep.subr.mxu0 %v1436
    %v1438 = vand.u32 %v93, 4294901760
    %v1439 = vsub.f32 %v93, %v1438
    %1440 = vmatpush1.msra.mxu0 %v1439
    %v1441 = vand.u32 %v98, 4294901760
    %v1442 = vsub.f32 %v98, %v1441
    %1443 = vmatprep.subr.mxu0 %v1442
    %v1444 = vand.u32 %v97, 4294901760
    %v1445 = vsub.f32 %v97, %v1444
    %1446 = vmatpush1.msra.mxu0 %v1445
    %v1447 = vand.u32 %v102, 4294901760
    %v1448 = vsub.f32 %v102, %v1447
    %1449 = vmatprep.subr.mxu0 %v1448
    %v1450 = vand.u32 %v101, 4294901760
    %v1451 = vsub.f32 %v101, %v1450
    %1452 = vmatpush1.msra.mxu0 %v1451
    %v1453 = vand.u32 %v106, 4294901760
    %v1454 = vsub.f32 %v106, %v1453
    %1455 = vmatprep.subr.mxu0 %v1454
    %v1456 = vand.u32 %v105, 4294901760
    %v1457 = vsub.f32 %v105, %v1456
    %1458 = vmatpush1.msra.mxu0 %v1457
    %v1459 = vand.u32 %v110, 4294901760
    %v1460 = vsub.f32 %v110, %v1459
    %1461 = vmatprep.subr.mxu0 %v1460
    %v1462 = vand.u32 %v109, 4294901760
    %v1463 = vsub.f32 %v109, %v1462
    %1464 = vmatpush1.msra.mxu0 %v1463
    %v1465 = vand.u32 %v114, 4294901760
    %v1466 = vsub.f32 %v114, %v1465
    %1467 = vmatprep.subr.mxu0 %v1466
    %v1468 = vand.u32 %v113, 4294901760
    %v1469 = vsub.f32 %v113, %v1468
    %1470 = vmatpush1.msra.mxu0 %v1469
    %v1471 = vand.u32 %v118, 4294901760
    %v1472 = vsub.f32 %v118, %v1471
    %1473 = vmatprep.subr.mxu0 %v1472
    %v1474 = vand.u32 %v117, 4294901760
    %v1475 = vsub.f32 %v117, %v1474
    %1476 = vmatpush1.msra.mxu0 %v1475
    %v1477 = vand.u32 %v122, 4294901760
    %v1478 = vsub.f32 %v122, %v1477
    %1479 = vmatprep.subr.mxu0 %v1478
    %v1480 = vand.u32 %v121, 4294901760
    %v1481 = vsub.f32 %v121, %v1480
    %1482 = vmatpush1.msra.mxu0 %v1481
    %1483 = vmatprep.subr.mxu0 0.0
    %1484 = vmatpush1.msra.mxu0 0.0
    %1485 = vmatprep.subr.mxu0 0.0
    %1486 = vmatpush1.msra.mxu0 0.0
    %1487 = vmatprep.subr.mxu0 0.0
    %1488 = vmatpush1.msra.mxu0 0.0
    %1489 = vmatprep.subr.mxu0 0.0
    %1490 = vmatpush1.msra.mxu0 0.0
    %1491 = vmatprep.subr.mxu0 0.0
    %1492 = vmatpush1.msra.mxu0 0.0
    %1493 = vmatprep.subr.mxu0 0.0
    %1494 = vmatpush1.msra.mxu0 0.0
    %1495 = vmatprep.subr.mxu0 0.0
    %1496 = vmatpush1.msra.mxu0 0.0
    %1497 = vmatprep.subr.mxu0 0.0
    %1498 = vmatpush1.msra.mxu0 0.0
    %1499 = vmatprep.subr.mxu0 0.0
    %1500 = vmatpush1.msra.mxu0 0.0
    %1501 = vmatprep.subr.mxu0 0.0
    %1502 = vmatpush1.msra.mxu0 0.0
    %1503 = vmatprep.subr.mxu0 0.0
    %1504 = vmatpush1.msra.mxu0 0.0
    %1505 = vmatprep.subr.mxu0 0.0
    %1506 = vmatpush1.msra.mxu0 0.0
    %1507 = vmatprep.subr.mxu0 0.0
    %1508 = vmatpush1.msra.mxu0 0.0
    %1509 = vmatprep.subr.mxu0 0.0
    %1510 = vmatpush1.msra.mxu0 0.0
    %1511 = vmatprep.subr.mxu0 0.0
    %1512 = vmatpush1.msra.mxu0 0.0
    %1513 = vmatprep.subr.mxu0 0.0
    %1514 = vmatpush1.msra.mxu0 0.0
    %1515 = vmatprep.mubr.f32.mxu0 0.0
    %v1516 = vand.u32 %v123, 4294901760
    %v1517 = vsub.f32 %v123, %v1516
    %1518 = vmatmul.mubr.f32.gmra.mrb[0].mxu0 %v1517
    %v1519 = vpop.f32.mrb[0].mxu0
    %v1520 = vadd.f32 %v1376, %v1519
    %v1521 = vpop.f32.mrb[0].mxu0
    %v1522 = vadd.f32 %v1378, %v1521
    %1523 = vmatprep.mubr.f32.mxu0 0.0
    %v1524 = vand.u32 %v124, 4294901760
    %v1525 = vsub.f32 %v124, %v1524
    %1526 = vmatmul.mubr.f32.gmra.mrb[0].mxu0 %v1525
    %v1527 = vpop.f32.mrb[0].mxu0
    %v1528 = vadd.f32 %v1383, %v1527
    %v1529 = vpop.f32.mrb[0].mxu0
    %v1530 = vadd.f32 %v1385, %v1529
    %1531 = vdwg.mxu0
    %v1532 = vand.u32 %v62, 4294901760
    %1533 = vmatprep.subr.mxu0 %v1532
    %v1534 = vand.u32 %v61, 4294901760
    %1535 = vmatpush1.msra.mxu0 %v1534
    %v1536 = vand.u32 %v66, 4294901760
    %1537 = vmatprep.subr.mxu0 %v1536
    %v1538 = vand.u32 %v65, 4294901760
    %1539 = vmatpush1.msra.mxu0 %v1538
    %v1540 = vand.u32 %v70, 4294901760
    %1541 = vmatprep.subr.mxu0 %v1540
    %v1542 = vand.u32 %v69, 4294901760
    %1543 = vmatpush1.msra.mxu0 %v1542
    %v1544 = vand.u32 %v74, 4294901760
    %1545 = vmatprep.subr.mxu0 %v1544
    %v1546 = vand.u32 %v73, 4294901760
    %1547 = vmatpush1.msra.mxu0 %v1546
    %v1548 = vand.u32 %v78, 4294901760
    %1549 = vmatprep.subr.mxu0 %v1548
    %v1550 = vand.u32 %v77, 4294901760
    %1551 = vmatpush1.msra.mxu0 %v1550
    %v1552 = vand.u32 %v82, 4294901760
    %1553 = vmatprep.subr.mxu0 %v1552
    %v1554 = vand.u32 %v81, 4294901760
    %1555 = vmatpush1.msra.mxu0 %v1554
    %v1556 = vand.u32 %v86, 4294901760
    %1557 = vmatprep.subr.mxu0 %v1556
    %v1558 = vand.u32 %v85, 4294901760
    %1559 = vmatpush1.msra.mxu0 %v1558
    %v1560 = vand.u32 %v90, 4294901760
    %1561 = vmatprep.subr.mxu0 %v1560
    %v1562 = vand.u32 %v89, 4294901760
    %1563 = vmatpush1.msra.mxu0 %v1562
    %v1564 = vand.u32 %v94, 4294901760
    %1565 = vmatprep.subr.mxu0 %v1564
    %v1566 = vand.u32 %v93, 4294901760
    %1567 = vmatpush1.msra.mxu0 %v1566
    %v1568 = vand.u32 %v98, 4294901760
    %1569 = vmatprep.subr.mxu0 %v1568
    %v1570 = vand.u32 %v97, 4294901760
    %1571 = vmatpush1.msra.mxu0 %v1570
    %v1572 = vand.u32 %v102, 4294901760
    %1573 = vmatprep.subr.mxu0 %v1572
    %v1574 = vand.u32 %v101, 4294901760
    %1575 = vmatpush1.msra.mxu0 %v1574
    %v1576 = vand.u32 %v106, 4294901760
    %1577 = vmatprep.subr.mxu0 %v1576
    %v1578 = vand.u32 %v105, 4294901760
    %1579 = vmatpush1.msra.mxu0 %v1578
    %v1580 = vand.u32 %v110, 4294901760
    %1581 = vmatprep.subr.mxu0 %v1580
    %v1582 = vand.u32 %v109, 4294901760
    %1583 = vmatpush1.msra.mxu0 %v1582
    %v1584 = vand.u32 %v114, 4294901760
    %1585 = vmatprep.subr.mxu0 %v1584
    %v1586 = vand.u32 %v113, 4294901760
    %1587 = vmatpush1.msra.mxu0 %v1586
    %v1588 = vand.u32 %v118, 4294901760
    %1589 = vmatprep.subr.mxu0 %v1588
    %v1590 = vand.u32 %v117, 4294901760
    %1591 = vmatpush1.msra.mxu0 %v1590
    %v1592 = vand.u32 %v122, 4294901760
    %1593 = vmatprep.subr.mxu0 %v1592
    %v1594 = vand.u32 %v121, 4294901760
    %1595 = vmatpush1.msra.mxu0 %v1594
    %1596 = vmatprep.subr.mxu0 0.0
    %1597 = vmatpush1.msra.mxu0 0.0
    %1598 = vmatprep.subr.mxu0 0.0
    %1599 = vmatpush1.msra.mxu0 0.0
    %1600 = vmatprep.subr.mxu0 0.0
    %1601 = vmatpush1.msra.mxu0 0.0
    %1602 = vmatprep.subr.mxu0 0.0
    %1603 = vmatpush1.msra.mxu0 0.0
    %1604 = vmatprep.subr.mxu0 0.0
    %1605 = vmatpush1.msra.mxu0 0.0
    %1606 = vmatprep.subr.mxu0 0.0
    %1607 = vmatpush1.msra.mxu0 0.0
    %1608 = vmatprep.subr.mxu0 0.0
    %1609 = vmatpush1.msra.mxu0 0.0
    %1610 = vmatprep.subr.mxu0 0.0
    %1611 = vmatpush1.msra.mxu0 0.0
    %1612 = vmatprep.subr.mxu0 0.0
    %1613 = vmatpush1.msra.mxu0 0.0
    %1614 = vmatprep.subr.mxu0 0.0
    %1615 = vmatpush1.msra.mxu0 0.0
    %1616 = vmatprep.subr.mxu0 0.0
    %1617 = vmatpush1.msra.mxu0 0.0
    %1618 = vmatprep.subr.mxu0 0.0
    %1619 = vmatpush1.msra.mxu0 0.0
    %1620 = vmatprep.subr.mxu0 0.0
    %1621 = vmatpush1.msra.mxu0 0.0
    %1622 = vmatprep.subr.mxu0 0.0
    %1623 = vmatpush1.msra.mxu0 0.0
    %1624 = vmatprep.subr.mxu0 0.0
    %1625 = vmatpush1.msra.mxu0 0.0
    %1626 = vmatprep.subr.mxu0 0.0
    %1627 = vmatpush1.msra.mxu0 0.0
    %1628 = vmatprep.mubr.f32.mxu0 0.0
    %v1629 = vand.u32 %v123, 4294901760
    %v1630 = vsub.f32 %v123, %v1629
    %v1631 = vand.u32 %v1630, 4294901760
    %1632 = vmatmul.mubr.f32.gmra.mrb[0].mxu0 %v1631
    %v1633 = vpop.f32.mrb[0].mxu0
    %v1634 = vadd.f32 %v1520, %v1633
    %v1635 = vpop.f32.mrb[0].mxu0
    %v1636 = vadd.f32 %v1522, %v1635
    %1637 = vmatprep.mubr.f32.mxu0 0.0
    %v1638 = vand.u32 %v124, 4294901760
    %v1639 = vsub.f32 %v124, %v1638
    %v1640 = vand.u32 %v1639, 4294901760
    %1641 = vmatmul.mubr.f32.gmra.mrb[0].mxu0 %v1640
    %v1642 = vpop.f32.mrb[0].mxu0
    %v1643 = vadd.f32 %v1528, %v1642
    %v1644 = vpop.f32.mrb[0].mxu0
    %v1645 = vadd.f32 %v1530, %v1644
    %1646 = vdwg.mxu0
    %v1647 = vand.u32 %v62, 4294901760
    %v1648 = vsub.f32 %v62, %v1647
    %v1649 = vand.u32 %v1648, 4294901760
    %1650 = vmatprep.subr.mxu0 %v1649
    %v1651 = vand.u32 %v61, 4294901760
    %v1652 = vsub.f32 %v61, %v1651
    %v1653 = vand.u32 %v1652, 4294901760
    %1654 = vmatpush1.msra.mxu0 %v1653
    %v1655 = vand.u32 %v66, 4294901760
    %v1656 = vsub.f32 %v66, %v1655
    %v1657 = vand.u32 %v1656, 4294901760
    %1658 = vmatprep.subr.mxu0 %v1657
    %v1659 = vand.u32 %v65, 4294901760
    %v1660 = vsub.f32 %v65, %v1659
    %v1661 = vand.u32 %v1660, 4294901760
    %1662 = vmatpush1.msra.mxu0 %v1661
    %v1663 = vand.u32 %v70, 4294901760
    %v1664 = vsub.f32 %v70, %v1663
    %v1665 = vand.u32 %v1664, 4294901760
    %1666 = vmatprep.subr.mxu0 %v1665
    %v1667 = vand.u32 %v69, 4294901760
    %v1668 = vsub.f32 %v69, %v1667
    %v1669 = vand.u32 %v1668, 4294901760
    %1670 = vmatpush1.msra.mxu0 %v1669
    %v1671 = vand.u32 %v74, 4294901760
    %v1672 = vsub.f32 %v74, %v1671
    %v1673 = vand.u32 %v1672, 4294901760
    %1674 = vmatprep.subr.mxu0 %v1673
    %v1675 = vand.u32 %v73, 4294901760
    %v1676 = vsub.f32 %v73, %v1675
    %v1677 = vand.u32 %v1676, 4294901760
    %1678 = vmatpush1.msra.mxu0 %v1677
    %v1679 = vand.u32 %v78, 4294901760
    %v1680 = vsub.f32 %v78, %v1679
    %v1681 = vand.u32 %v1680, 4294901760
    %1682 = vmatprep.subr.mxu0 %v1681
    %v1683 = vand.u32 %v77, 4294901760
    %v1684 = vsub.f32 %v77, %v1683
    %v1685 = vand.u32 %v1684, 4294901760
    %1686 = vmatpush1.msra.mxu0 %v1685
    %v1687 = vand.u32 %v82, 4294901760
    %v1688 = vsub.f32 %v82, %v1687
    %v1689 = vand.u32 %v1688, 4294901760
    %1690 = vmatprep.subr.mxu0 %v1689
    %v1691 = vand.u32 %v81, 4294901760
    %v1692 = vsub.f32 %v81, %v1691
    %v1693 = vand.u32 %v1692, 4294901760
    %1694 = vmatpush1.msra.mxu0 %v1693
    %v1695 = vand.u32 %v86, 4294901760
    %v1696 = vsub.f32 %v86, %v1695
    %v1697 = vand.u32 %v1696, 4294901760
    %1698 = vmatprep.subr.mxu0 %v1697
    %v1699 = vand.u32 %v85, 4294901760
    %v1700 = vsub.f32 %v85, %v1699
    %v1701 = vand.u32 %v1700, 4294901760
    %1702 = vmatpush1.msra.mxu0 %v1701
    %v1703 = vand.u32 %v90, 4294901760
    %v1704 = vsub.f32 %v90, %v1703
    %v1705 = vand.u32 %v1704, 4294901760
    %1706 = vmatprep.subr.mxu0 %v1705
    %v1707 = vand.u32 %v89, 4294901760
    %v1708 = vsub.f32 %v89, %v1707
    %v1709 = vand.u32 %v1708, 4294901760
    %1710 = vmatpush1.msra.mxu0 %v1709
    %v1711 = vand.u32 %v94, 4294901760
    %v1712 = vsub.f32 %v94, %v1711
    %v1713 = vand.u32 %v1712, 4294901760
    %1714 = vmatprep.subr.mxu0 %v1713
    %v1715 = vand.u32 %v93, 4294901760
    %v1716 = vsub.f32 %v93, %v1715
    %v1717 = vand.u32 %v1716, 4294901760
    %1718 = vmatpush1.msra.mxu0 %v1717
    %v1719 = vand.u32 %v98, 4294901760
    %v1720 = vsub.f32 %v98, %v1719
    %v1721 = vand.u32 %v1720, 4294901760
    %1722 = vmatprep.subr.mxu0 %v1721
    %v1723 = vand.u32 %v97, 4294901760
    %v1724 = vsub.f32 %v97, %v1723
    %v1725 = vand.u32 %v1724, 4294901760
    %1726 = vmatpush1.msra.mxu0 %v1725
    %v1727 = vand.u32 %v102, 4294901760
    %v1728 = vsub.f32 %v102, %v1727
    %v1729 = vand.u32 %v1728, 4294901760
    %1730 = vmatprep.subr.mxu0 %v1729
    %v1731 = vand.u32 %v101, 4294901760
    %v1732 = vsub.f32 %v101, %v1731
    %v1733 = vand.u32 %v1732, 4294901760
    %1734 = vmatpush1.msra.mxu0 %v1733
    %v1735 = vand.u32 %v106, 4294901760
    %v1736 = vsub.f32 %v106, %v1735
    %v1737 = vand.u32 %v1736, 4294901760
    %1738 = vmatprep.subr.mxu0 %v1737
    %v1739 = vand.u32 %v105, 4294901760
    %v1740 = vsub.f32 %v105, %v1739
    %v1741 = vand.u32 %v1740, 4294901760
    %1742 = vmatpush1.msra.mxu0 %v1741
    %v1743 = vand.u32 %v110, 4294901760
    %v1744 = vsub.f32 %v110, %v1743
    %v1745 = vand.u32 %v1744, 4294901760
    %1746 = vmatprep.subr.mxu0 %v1745
    %v1747 = vand.u32 %v109, 4294901760
    %v1748 = vsub.f32 %v109, %v1747
    %v1749 = vand.u32 %v1748, 4294901760
    %1750 = vmatpush1.msra.mxu0 %v1749
    %v1751 = vand.u32 %v114, 4294901760
    %v1752 = vsub.f32 %v114, %v1751
    %v1753 = vand.u32 %v1752, 4294901760
    %1754 = vmatprep.subr.mxu0 %v1753
    %v1755 = vand.u32 %v113, 4294901760
    %v1756 = vsub.f32 %v113, %v1755
    %v1757 = vand.u32 %v1756, 4294901760
    %1758 = vmatpush1.msra.mxu0 %v1757
    %v1759 = vand.u32 %v118, 4294901760
    %v1760 = vsub.f32 %v118, %v1759
    %v1761 = vand.u32 %v1760, 4294901760
    %1762 = vmatprep.subr.mxu0 %v1761
    %v1763 = vand.u32 %v117, 4294901760
    %v1764 = vsub.f32 %v117, %v1763
    %v1765 = vand.u32 %v1764, 4294901760
    %1766 = vmatpush1.msra.mxu0 %v1765
    %v1767 = vand.u32 %v122, 4294901760
    %v1768 = vsub.f32 %v122, %v1767
    %v1769 = vand.u32 %v1768, 4294901760
    %1770 = vmatprep.subr.mxu0 %v1769
    %v1771 = vand.u32 %v121, 4294901760
    %v1772 = vsub.f32 %v121, %v1771
    %v1773 = vand.u32 %v1772, 4294901760
    %1774 = vmatpush1.msra.mxu0 %v1773
    %1775 = vmatprep.subr.mxu0 0.0
    %1776 = vmatpush1.msra.mxu0 0.0
    %1777 = vmatprep.subr.mxu0 0.0
    %1778 = vmatpush1.msra.mxu0 0.0
    %1779 = vmatprep.subr.mxu0 0.0
    %1780 = vmatpush1.msra.mxu0 0.0
    %1781 = vmatprep.subr.mxu0 0.0
    %1782 = vmatpush1.msra.mxu0 0.0
    %1783 = vmatprep.subr.mxu0 0.0
    %1784 = vmatpush1.msra.mxu0 0.0
    %1785 = vmatprep.subr.mxu0 0.0
    %1786 = vmatpush1.msra.mxu0 0.0
    %1787 = vmatprep.subr.mxu0 0.0
    %1788 = vmatpush1.msra.mxu0 0.0
    %1789 = vmatprep.subr.mxu0 0.0
    %1790 = vmatpush1.msra.mxu0 0.0
    %1791 = vmatprep.subr.mxu0 0.0
    %1792 = vmatpush1.msra.mxu0 0.0
    %1793 = vmatprep.subr.mxu0 0.0
    %1794 = vmatpush1.msra.mxu0 0.0
    %1795 = vmatprep.subr.mxu0 0.0
    %1796 = vmatpush1.msra.mxu0 0.0
    %1797 = vmatprep.subr.mxu0 0.0
    %1798 = vmatpush1.msra.mxu0 0.0
    %1799 = vmatprep.subr.mxu0 0.0
    %1800 = vmatpush1.msra.mxu0 0.0
    %1801 = vmatprep.subr.mxu0 0.0
    %1802 = vmatpush1.msra.mxu0 0.0
    %1803 = vmatprep.subr.mxu0 0.0
    %1804 = vmatpush1.msra.mxu0 0.0
    %1805 = vmatprep.subr.mxu0 0.0
    %1806 = vmatpush1.msra.mxu0 0.0
    %1807 = vmatprep.mubr.f32.mxu0 0.0
    %v1808 = vand.u32 %v123, 4294901760
    %1809 = vmatmul.mubr.f32.gmra.mrb[0].mxu0 %v1808
    %v1810 = vpop.f32.mrb[0].mxu0
    %v1811 = vadd.f32 %v1634, %v1810
    %v1812 = vpop.f32.mrb[0].mxu0
    %v1813 = vadd.f32 %v1636, %v1812
    %1814 = vmatprep.mubr.f32.mxu0 0.0
    %v1815 = vand.u32 %v124, 4294901760
    %1816 = vmatmul.mubr.f32.gmra.mrb[0].mxu0 %v1815
    %v1817 = vpop.f32.mrb[0].mxu0
    %v1818 = vadd.f32 %v1643, %v1817
    %v1819 = vpop.f32.mrb[0].mxu0
    %v1820 = vadd.f32 %v1645, %v1819
    %1821 = vdwg.mxu0
    %v1822 = vand.u32 %v62, 4294901760
    %1823 = vmatprep.subr.mxu0 %v1822
    %v1824 = vand.u32 %v61, 4294901760
    %1825 = vmatpush1.msra.mxu0 %v1824
    %v1826 = vand.u32 %v66, 4294901760
    %1827 = vmatprep.subr.mxu0 %v1826
    %v1828 = vand.u32 %v65, 4294901760
    %1829 = vmatpush1.msra.mxu0 %v1828
    %v1830 = vand.u32 %v70, 4294901760
    %1831 = vmatprep.subr.mxu0 %v1830
    %v1832 = vand.u32 %v69, 4294901760
    %1833 = vmatpush1.msra.mxu0 %v1832
    %v1834 = vand.u32 %v74, 4294901760
    %1835 = vmatprep.subr.mxu0 %v1834
    %v1836 = vand.u32 %v73, 4294901760
    %1837 = vmatpush1.msra.mxu0 %v1836
    %v1838 = vand.u32 %v78, 4294901760
    %1839 = vmatprep.subr.mxu0 %v1838
    %v1840 = vand.u32 %v77, 4294901760
    %1841 = vmatpush1.msra.mxu0 %v1840
    %v1842 = vand.u32 %v82, 4294901760
    %1843 = vmatprep.subr.mxu0 %v1842
    %v1844 = vand.u32 %v81, 4294901760
    %1845 = vmatpush1.msra.mxu0 %v1844
    %v1846 = vand.u32 %v86, 4294901760
    %1847 = vmatprep.subr.mxu0 %v1846
    %v1848 = vand.u32 %v85, 4294901760
    %1849 = vmatpush1.msra.mxu0 %v1848
    %v1850 = vand.u32 %v90, 4294901760
    %1851 = vmatprep.subr.mxu0 %v1850
    %v1852 = vand.u32 %v89, 4294901760
    %1853 = vmatpush1.msra.mxu0 %v1852
    %v1854 = vand.u32 %v94, 4294901760
    %1855 = vmatprep.subr.mxu0 %v1854
    %v1856 = vand.u32 %v93, 4294901760
    %1857 = vmatpush1.msra.mxu0 %v1856
    %v1858 = vand.u32 %v98, 4294901760
    %1859 = vmatprep.subr.mxu0 %v1858
    %v1860 = vand.u32 %v97, 4294901760
    %1861 = vmatpush1.msra.mxu0 %v1860
    %v1862 = vand.u32 %v102, 4294901760
    %1863 = vmatprep.subr.mxu0 %v1862
    %v1864 = vand.u32 %v101, 4294901760
    %1865 = vmatpush1.msra.mxu0 %v1864
    %v1866 = vand.u32 %v106, 4294901760
    %1867 = vmatprep.subr.mxu0 %v1866
    %v1868 = vand.u32 %v105, 4294901760
    %1869 = vmatpush1.msra.mxu0 %v1868
    %v1870 = vand.u32 %v110, 4294901760
    %1871 = vmatprep.subr.mxu0 %v1870
    %v1872 = vand.u32 %v109, 4294901760
    %1873 = vmatpush1.msra.mxu0 %v1872
    %v1874 = vand.u32 %v114, 4294901760
    %1875 = vmatprep.subr.mxu0 %v1874
    %v1876 = vand.u32 %v113, 4294901760
    %1877 = vmatpush1.msra.mxu0 %v1876
    %v1878 = vand.u32 %v118, 4294901760
    %1879 = vmatprep.subr.mxu0 %v1878
    %v1880 = vand.u32 %v117, 4294901760
    %1881 = vmatpush1.msra.mxu0 %v1880
    %v1882 = vand.u32 %v122, 4294901760
    %1883 = vmatprep.subr.mxu0 %v1882
    %v1884 = vand.u32 %v121, 4294901760
    %1885 = vmatpush1.msra.mxu0 %v1884
    %1886 = vmatprep.subr.mxu0 0.0
    %1887 = vmatpush1.msra.mxu0 0.0
    %1888 = vmatprep.subr.mxu0 0.0
    %1889 = vmatpush1.msra.mxu0 0.0
    %1890 = vmatprep.subr.mxu0 0.0
    %1891 = vmatpush1.msra.mxu0 0.0
    %1892 = vmatprep.subr.mxu0 0.0
    %1893 = vmatpush1.msra.mxu0 0.0
    %1894 = vmatprep.subr.mxu0 0.0
    %1895 = vmatpush1.msra.mxu0 0.0
    %1896 = vmatprep.subr.mxu0 0.0
    %1897 = vmatpush1.msra.mxu0 0.0
    %1898 = vmatprep.subr.mxu0 0.0
    %1899 = vmatpush1.msra.mxu0 0.0
    %1900 = vmatprep.subr.mxu0 0.0
    %1901 = vmatpush1.msra.mxu0 0.0
    %1902 = vmatprep.subr.mxu0 0.0
    %1903 = vmatpush1.msra.mxu0 0.0
    %1904 = vmatprep.subr.mxu0 0.0
    %1905 = vmatpush1.msra.mxu0 0.0
    %1906 = vmatprep.subr.mxu0 0.0
    %1907 = vmatpush1.msra.mxu0 0.0
    %1908 = vmatprep.subr.mxu0 0.0
    %1909 = vmatpush1.msra.mxu0 0.0
    %1910 = vmatprep.subr.mxu0 0.0
    %1911 = vmatpush1.msra.mxu0 0.0
    %1912 = vmatprep.subr.mxu0 0.0
    %1913 = vmatpush1.msra.mxu0 0.0
    %1914 = vmatprep.subr.mxu0 0.0
    %1915 = vmatpush1.msra.mxu0 0.0
    %1916 = vmatprep.subr.mxu0 0.0
    %1917 = vmatpush1.msra.mxu0 0.0
    %1918 = vmatprep.mubr.f32.mxu0 0.0
    %v1919 = vand.u32 %v123, 4294901760
    %1920 = vmatmul.mubr.f32.gmra.mrb[0].mxu0 %v1919
    %v1921 = vpop.f32.mrb[0].mxu0
    %v1922 = vadd.f32 %v1811, %v1921
    %v1923 = vpop.f32.mrb[0].mxu0
    %v1924 = vadd.f32 %v1813, %v1923
    %1925 = vmatprep.mubr.f32.mxu0 0.0
    %v1926 = vand.u32 %v124, 4294901760
    %1927 = vmatmul.mubr.f32.gmra.mrb[0].mxu0 %v1926
    %v1928 = vpop.f32.mrb[0].mxu0
    %v1929 = vadd.f32 %v1818, %v1928
    %v1930 = vpop.f32.mrb[0].mxu0
    %v1931 = vadd.f32 %v1820, %v1930
    %1932 = vdwg.mxu0
    %1933 = vst [vmem:[#allocation8] sm:$0xff] %v1018
    %1934 = vst [vmem:[#allocation8 + $0x8] sm:$0xff] %v1020
    %1935 = vst [vmem:[#allocation8 + $0x10] sm:$0xff] %v1922
    %1936 = vst [vmem:[#allocation8 + $0x18] sm:$0xff] %v1924
    %1937 = vst [vmem:[#allocation8 + $0x20] sm:$0xff] %v1025
    %1938 = vst [vmem:[#allocation8 + $0x28] sm:$0xff] %v1027
    %1939 = vst [vmem:[#allocation8 + $0x30] sm:$0xff] %v1929
    %1940 = vst [vmem:[#allocation8 + $0x38] sm:$0xff] %v1931
    %v1941 = vld [vmem:[#allocation7] sm:$0xff]
    %v1942 = vld [vmem:[#allocation7 + $0x8] sm:$0xff]
    %v1943 = vand.u32 %v60, 4294901760
    %1944 = vmatprep.subr.mxu0 %v1943
    %v1945 = vand.u32 %v59, 4294901760
    %1946 = vmatpush1.msra.mxu0 %v1945
    %v1947 = vand.u32 %v64, 4294901760
    %1948 = vmatprep.subr.mxu0 %v1947
    %v1949 = vand.u32 %v63, 4294901760
    %1950 = vmatpush1.msra.mxu0 %v1949
    %v1951 = vand.u32 %v68, 4294901760
    %1952 = vmatprep.subr.mxu0 %v1951
    %v1953 = vand.u32 %v67, 4294901760
    %1954 = vmatpush1.msra.mxu0 %v1953
    %v1955 = vand.u32 %v72, 4294901760
    %1956 = vmatprep.subr.mxu0 %v1955
    %v1957 = vand.u32 %v71, 4294901760
    %1958 = vmatpush1.msra.mxu0 %v1957
    %v1959 = vand.u32 %v76, 4294901760
    %1960 = vmatprep.subr.mxu0 %v1959
    %v1961 = vand.u32 %v75, 4294901760
    %1962 = vmatpush1.msra.mxu0 %v1961
    %v1963 = vand.u32 %v80, 4294901760
    %1964 = vmatprep.subr.mxu0 %v1963
    %v1965 = vand.u32 %v79, 4294901760
    %1966 = vmatpush1.msra.mxu0 %v1965
    %v1967 = vand.u32 %v84, 4294901760
    %1968 = vmatprep.subr.mxu0 %v1967
    %v1969 = vand.u32 %v83, 4294901760
    %1970 = vmatpush1.msra.mxu0 %v1969
    %v1971 = vand.u32 %v88, 4294901760
    %1972 = vmatprep.subr.mxu0 %v1971
    %v1973 = vand.u32 %v87, 4294901760
    %1974 = vmatpush1.msra.mxu0 %v1973
    %v1975 = vand.u32 %v92, 4294901760
    %1976 = vmatprep.subr.mxu0 %v1975
    %v1977 = vand.u32 %v91, 4294901760
    %1978 = vmatpush1.msra.mxu0 %v1977
    %v1979 = vand.u32 %v96, 4294901760
    %1980 = vmatprep.subr.mxu0 %v1979
    %v1981 = vand.u32 %v95, 4294901760
    %1982 = vmatpush1.msra.mxu0 %v1981
    %v1983 = vand.u32 %v100, 4294901760
    %1984 = vmatprep.subr.mxu0 %v1983
    %v1985 = vand.u32 %v99, 4294901760
    %1986 = vmatpush1.msra.mxu0 %v1985
    %v1987 = vand.u32 %v104, 4294901760
    %1988 = vmatprep.subr.mxu0 %v1987
    %v1989 = vand.u32 %v103, 4294901760
    %1990 = vmatpush1.msra.mxu0 %v1989
    %v1991 = vand.u32 %v108, 4294901760
    %1992 = vmatprep.subr.mxu0 %v1991
    %v1993 = vand.u32 %v107, 4294901760
    %1994 = vmatpush1.msra.mxu0 %v1993
    %v1995 = vand.u32 %v112, 4294901760
    %1996 = vmatprep.subr.mxu0 %v1995
    %v1997 = vand.u32 %v111, 4294901760
    %1998 = vmatpush1.msra.mxu0 %v1997
    %v1999 = vand.u32 %v116, 4294901760
    %2000 = vmatprep.subr.mxu0 %v1999
    %v2001 = vand.u32 %v115, 4294901760
    %2002 = vmatpush1.msra.mxu0 %v2001
    %v2003 = vand.u32 %v120, 4294901760
    %2004 = vmatprep.subr.mxu0 %v2003
    %v2005 = vand.u32 %v119, 4294901760
    %2006 = vmatpush1.msra.mxu0 %v2005
    %2007 = vmatprep.subr.mxu0 0.0
    %2008 = vmatpush1.msra.mxu0 0.0
    %2009 = vmatprep.subr.mxu0 0.0
    %2010 = vmatpush1.msra.mxu0 0.0
    %2011 = vmatprep.subr.mxu0 0.0
    %2012 = vmatpush1.msra.mxu0 0.0
    %2013 = vmatprep.subr.mxu0 0.0
    %2014 = vmatpush1.msra.mxu0 0.0
    %2015 = vmatprep.subr.mxu0 0.0
    %2016 = vmatpush1.msra.mxu0 0.0
    %2017 = vmatprep.subr.mxu0 0.0
    %2018 = vmatpush1.msra.mxu0 0.0
    %2019 = vmatprep.subr.mxu0 0.0
    %2020 = vmatpush1.msra.mxu0 0.0
    %2021 = vmatprep.subr.mxu0 0.0
    %2022 = vmatpush1.msra.mxu0 0.0
    %2023 = vmatprep.subr.mxu0 0.0
    %2024 = vmatpush1.msra.mxu0 0.0
    %2025 = vmatprep.subr.mxu0 0.0
    %2026 = vmatpush1.msra.mxu0 0.0
    %2027 = vmatprep.subr.mxu0 0.0
    %2028 = vmatpush1.msra.mxu0 0.0
    %2029 = vmatprep.subr.mxu0 0.0
    %2030 = vmatpush1.msra.mxu0 0.0
    %2031 = vmatprep.subr.mxu0 0.0
    %2032 = vmatpush1.msra.mxu0 0.0
    %2033 = vmatprep.subr.mxu0 0.0
    %2034 = vmatpush1.msra.mxu0 0.0
    %2035 = vmatprep.subr.mxu0 0.0
    %2036 = vmatpush1.msra.mxu0 0.0
    %2037 = vmatprep.subr.mxu0 0.0
    %2038 = vmatpush1.msra.mxu0 0.0
    %2039 = vmatprep.mubr.f32.mxu0 0.0
    %v2040 = vand.u32 %v1941, 4294901760
    %v2041 = vsub.f32 %v1941, %v2040
    %v2042 = vand.u32 %v2041, 4294901760
    %v2043 = vsub.f32 %v2041, %v2042
    %v2044 = vand.u32 %v2043, 4294901760
    %2045 = vmatmul.mubr.f32.gmra.mrb[0].mxu0 %v2044
    %v2046 = vpop.f32.mrb[0].mxu0
    %v2047 = vadd.f32 0.0, %v2046
    %v2048 = vpop.f32.mrb[0].mxu0
    %v2049 = vadd.f32 0.0, %v2048
    %2050 = vmatprep.mubr.f32.mxu0 0.0
    %v2051 = vand.u32 %v1942, 4294901760
    %v2052 = vsub.f32 %v1942, %v2051
    %v2053 = vand.u32 %v2052, 4294901760
    %v2054 = vsub.f32 %v2052, %v2053
    %v2055 = vand.u32 %v2054, 4294901760
    %2056 = vmatmul.mubr.f32.gmra.mrb[0].mxu0 %v2055
    %v2057 = vpop.f32.mrb[0].mxu0
    %v2058 = vadd.f32 0.0, %v2057
    %v2059 = vpop.f32.mrb[0].mxu0
    %v2060 = vadd.f32 0.0, %v2059
    %2061 = vdwg.mxu0
    %v2062 = vand.u32 %v60, 4294901760
    %v2063 = vsub.f32 %v60, %v2062
    %v2064 = vand.u32 %v2063, 4294901760
    %v2065 = vsub.f32 %v2063, %v2064
    %v2066 = vand.u32 %v2065, 4294901760
    %2067 = vmatprep.subr.mxu0 %v2066
    %v2068 = vand.u32 %v59, 4294901760
    %v2069 = vsub.f32 %v59, %v2068
    %v2070 = vand.u32 %v2069, 4294901760
    %v2071 = vsub.f32 %v2069, %v2070
    %v2072 = vand.u32 %v2071, 4294901760
    %2073 = vmatpush1.msra.mxu0 %v2072
    %v2074 = vand.u32 %v64, 4294901760
    %v2075 = vsub.f32 %v64, %v2074
    %v2076 = vand.u32 %v2075, 4294901760
    %v2077 = vsub.f32 %v2075, %v2076
    %v2078 = vand.u32 %v2077, 4294901760
    %2079 = vmatprep.subr.mxu0 %v2078
    %v2080 = vand.u32 %v63, 4294901760
    %v2081 = vsub.f32 %v63, %v2080
    %v2082 = vand.u32 %v2081, 4294901760
    %v2083 = vsub.f32 %v2081, %v2082
    %v2084 = vand.u32 %v2083, 4294901760
    %2085 = vmatpush1.msra.mxu0 %v2084
    %v2086 = vand.u32 %v68, 4294901760
    %v2087 = vsub.f32 %v68, %v2086
    %v2088 = vand.u32 %v2087, 4294901760
    %v2089 = vsub.f32 %v2087, %v2088
    %v2090 = vand.u32 %v2089, 4294901760
    %2091 = vmatprep.subr.mxu0 %v2090
    %v2092 = vand.u32 %v67, 4294901760
    %v2093 = vsub.f32 %v67, %v2092
    %v2094 = vand.u32 %v2093, 4294901760
    %v2095 = vsub.f32 %v2093, %v2094
    %v2096 = vand.u32 %v2095, 4294901760
    %2097 = vmatpush1.msra.mxu0 %v2096
    %v2098 = vand.u32 %v72, 4294901760
    %v2099 = vsub.f32 %v72, %v2098
    %v2100 = vand.u32 %v2099, 4294901760
    %v2101 = vsub.f32 %v2099, %v2100
    %v2102 = vand.u32 %v2101, 4294901760
    %2103 = vmatprep.subr.mxu0 %v2102
    %v2104 = vand.u32 %v71, 4294901760
    %v2105 = vsub.f32 %v71, %v2104
    %v2106 = vand.u32 %v2105, 4294901760
    %v2107 = vsub.f32 %v2105, %v2106
    %v2108 = vand.u32 %v2107, 4294901760
    %2109 = vmatpush1.msra.mxu0 %v2108
    %v2110 = vand.u32 %v76, 4294901760
    %v2111 = vsub.f32 %v76, %v2110
    %v2112 = vand.u32 %v2111, 4294901760
    %v2113 = vsub.f32 %v2111, %v2112
    %v2114 = vand.u32 %v2113, 4294901760
    %2115 = vmatprep.subr.mxu0 %v2114
    %v2116 = vand.u32 %v75, 4294901760
    %v2117 = vsub.f32 %v75, %v2116
    %v2118 = vand.u32 %v2117, 4294901760
    %v2119 = vsub.f32 %v2117, %v2118
    %v2120 = vand.u32 %v2119, 4294901760
    %2121 = vmatpush1.msra.mxu0 %v2120
    %v2122 = vand.u32 %v80, 4294901760
    %v2123 = vsub.f32 %v80, %v2122
    %v2124 = vand.u32 %v2123, 4294901760
    %v2125 = vsub.f32 %v2123, %v2124
    %v2126 = vand.u32 %v2125, 4294901760
    %2127 = vmatprep.subr.mxu0 %v2126
    %v2128 = vand.u32 %v79, 4294901760
    %v2129 = vsub.f32 %v79, %v2128
    %v2130 = vand.u32 %v2129, 4294901760
    %v2131 = vsub.f32 %v2129, %v2130
    %v2132 = vand.u32 %v2131, 4294901760
    %2133 = vmatpush1.msra.mxu0 %v2132
    %v2134 = vand.u32 %v84, 4294901760
    %v2135 = vsub.f32 %v84, %v2134
    %v2136 = vand.u32 %v2135, 4294901760
    %v2137 = vsub.f32 %v2135, %v2136
    %v2138 = vand.u32 %v2137, 4294901760
    %2139 = vmatprep.subr.mxu0 %v2138
    %v2140 = vand.u32 %v83, 4294901760
    %v2141 = vsub.f32 %v83, %v2140
    %v2142 = vand.u32 %v2141, 4294901760
    %v2143 = vsub.f32 %v2141, %v2142
    %v2144 = vand.u32 %v2143, 4294901760
    %2145 = vmatpush1.msra.mxu0 %v2144
    %v2146 = vand.u32 %v88, 4294901760
    %v2147 = vsub.f32 %v88, %v2146
    %v2148 = vand.u32 %v2147, 4294901760
    %v2149 = vsub.f32 %v2147, %v2148
    %v2150 = vand.u32 %v2149, 4294901760
    %2151 = vmatprep.subr.mxu0 %v2150
    %v2152 = vand.u32 %v87, 4294901760
    %v2153 = vsub.f32 %v87, %v2152
    %v2154 = vand.u32 %v2153, 4294901760
    %v2155 = vsub.f32 %v2153, %v2154
    %v2156 = vand.u32 %v2155, 4294901760
    %2157 = vmatpush1.msra.mxu0 %v2156
    %v2158 = vand.u32 %v92, 4294901760
    %v2159 = vsub.f32 %v92, %v2158
    %v2160 = vand.u32 %v2159, 4294901760
    %v2161 = vsub.f32 %v2159, %v2160
    %v2162 = vand.u32 %v2161, 4294901760
    %2163 = vmatprep.subr.mxu0 %v2162
    %v2164 = vand.u32 %v91, 4294901760
    %v2165 = vsub.f32 %v91, %v2164
    %v2166 = vand.u32 %v2165, 4294901760
    %v2167 = vsub.f32 %v2165, %v2166
    %v2168 = vand.u32 %v2167, 4294901760
    %2169 = vmatpush1.msra.mxu0 %v2168
    %v2170 = vand.u32 %v96, 4294901760
    %v2171 = vsub.f32 %v96, %v2170
    %v2172 = vand.u32 %v2171, 4294901760
    %v2173 = vsub.f32 %v2171, %v2172
    %v2174 = vand.u32 %v2173, 4294901760
    %2175 = vmatprep.subr.mxu0 %v2174
    %v2176 = vand.u32 %v95, 4294901760
    %v2177 = vsub.f32 %v95, %v2176
    %v2178 = vand.u32 %v2177, 4294901760
    %v2179 = vsub.f32 %v2177, %v2178
    %v2180 = vand.u32 %v2179, 4294901760
    %2181 = vmatpush1.msra.mxu0 %v2180
    %v2182 = vand.u32 %v100, 4294901760
    %v2183 = vsub.f32 %v100, %v2182
    %v2184 = vand.u32 %v2183, 4294901760
    %v2185 = vsub.f32 %v2183, %v2184
    %v2186 = vand.u32 %v2185, 4294901760
    %2187 = vmatprep.subr.mxu0 %v2186
    %v2188 = vand.u32 %v99, 4294901760
    %v2189 = vsub.f32 %v99, %v2188
    %v2190 = vand.u32 %v2189, 4294901760
    %v2191 = vsub.f32 %v2189, %v2190
    %v2192 = vand.u32 %v2191, 4294901760
    %2193 = vmatpush1.msra.mxu0 %v2192
    %v2194 = vand.u32 %v104, 4294901760
    %v2195 = vsub.f32 %v104, %v2194
    %v2196 = vand.u32 %v2195, 4294901760
    %v2197 = vsub.f32 %v2195, %v2196
    %v2198 = vand.u32 %v2197, 4294901760
    %2199 = vmatprep.subr.mxu0 %v2198
    %v2200 = vand.u32 %v103, 4294901760
    %v2201 = vsub.f32 %v103, %v2200
    %v2202 = vand.u32 %v2201, 4294901760
    %v2203 = vsub.f32 %v2201, %v2202
    %v2204 = vand.u32 %v2203, 4294901760
    %2205 = vmatpush1.msra.mxu0 %v2204
    %v2206 = vand.u32 %v108, 4294901760
    %v2207 = vsub.f32 %v108, %v2206
    %v2208 = vand.u32 %v2207, 4294901760
    %v2209 = vsub.f32 %v2207, %v2208
    %v2210 = vand.u32 %v2209, 4294901760
    %2211 = vmatprep.subr.mxu0 %v2210
    %v2212 = vand.u32 %v107, 4294901760
    %v2213 = vsub.f32 %v107, %v2212
    %v2214 = vand.u32 %v2213, 4294901760
    %v2215 = vsub.f32 %v2213, %v2214
    %v2216 = vand.u32 %v2215, 4294901760
    %2217 = vmatpush1.msra.mxu0 %v2216
    %v2218 = vand.u32 %v112, 4294901760
    %v2219 = vsub.f32 %v112, %v2218
    %v2220 = vand.u32 %v2219, 4294901760
    %v2221 = vsub.f32 %v2219, %v2220
    %v2222 = vand.u32 %v2221, 4294901760
    %2223 = vmatprep.subr.mxu0 %v2222
    %v2224 = vand.u32 %v111, 4294901760
    %v2225 = vsub.f32 %v111, %v2224
    %v2226 = vand.u32 %v2225, 4294901760
    %v2227 = vsub.f32 %v2225, %v2226
    %v2228 = vand.u32 %v2227, 4294901760
    %2229 = vmatpush1.msra.mxu0 %v2228
    %v2230 = vand.u32 %v116, 4294901760
    %v2231 = vsub.f32 %v116, %v2230
    %v2232 = vand.u32 %v2231, 4294901760
    %v2233 = vsub.f32 %v2231, %v2232
    %v2234 = vand.u32 %v2233, 4294901760
    %2235 = vmatprep.subr.mxu0 %v2234
    %v2236 = vand.u32 %v115, 4294901760
    %v2237 = vsub.f32 %v115, %v2236
    %v2238 = vand.u32 %v2237, 4294901760
    %v2239 = vsub.f32 %v2237, %v2238
    %v2240 = vand.u32 %v2239, 4294901760
    %2241 = vmatpush1.msra.mxu0 %v2240
    %v2242 = vand.u32 %v120, 4294901760
    %v2243 = vsub.f32 %v120, %v2242
    %v2244 = vand.u32 %v2243, 4294901760
    %v2245 = vsub.f32 %v2243, %v2244
    %v2246 = vand.u32 %v2245, 4294901760
    %2247 = vmatprep.subr.mxu0 %v2246
    %v2248 = vand.u32 %v119, 4294901760
    %v2249 = vsub.f32 %v119, %v2248
    %v2250 = vand.u32 %v2249, 4294901760
    %v2251 = vsub.f32 %v2249, %v2250
    %v2252 = vand.u32 %v2251, 4294901760
    %2253 = vmatpush1.msra.mxu0 %v2252
    %2254 = vmatprep.subr.mxu0 0.0
    %2255 = vmatpush1.msra.mxu0 0.0
    %2256 = vmatprep.subr.mxu0 0.0
    %2257 = vmatpush1.msra.mxu0 0.0
    %2258 = vmatprep.subr.mxu0 0.0
    %2259 = vmatpush1.msra.mxu0 0.0
    %2260 = vmatprep.subr.mxu0 0.0
    %2261 = vmatpush1.msra.mxu0 0.0
    %2262 = vmatprep.subr.mxu0 0.0
    %2263 = vmatpush1.msra.mxu0 0.0
    %2264 = vmatprep.subr.mxu0 0.0
    %2265 = vmatpush1.msra.mxu0 0.0
    %2266 = vmatprep.subr.mxu0 0.0
    %2267 = vmatpush1.msra.mxu0 0.0
    %2268 = vmatprep.subr.mxu0 0.0
    %2269 = vmatpush1.msra.mxu0 0.0
    %2270 = vmatprep.subr.mxu0 0.0
    %2271 = vmatpush1.msra.mxu0 0.0
    %2272 = vmatprep.subr.mxu0 0.0
    %2273 = vmatpush1.msra.mxu0 0.0
    %2274 = vmatprep.subr.mxu0 0.0
    %2275 = vmatpush1.msra.mxu0 0.0
    %2276 = vmatprep.subr.mxu0 0.0
    %2277 = vmatpush1.msra.mxu0 0.0
    %2278 = vmatprep.subr.mxu0 0.0
    %2279 = vmatpush1.msra.mxu0 0.0
    %2280 = vmatprep.subr.mxu0 0.0
    %2281 = vmatpush1.msra.mxu0 0.0
    %2282 = vmatprep.subr.mxu0 0.0
    %2283 = vmatpush1.msra.mxu0 0.0
    %2284 = vmatprep.subr.mxu0 0.0
    %2285 = vmatpush1.msra.mxu0 0.0
    %2286 = vmatprep.mubr.f32.mxu0 0.0
    %v2287 = vand.u32 %v1941, 4294901760
    %2288 = vmatmul.mubr.f32.gmra.mrb[0].mxu0 %v2287
    %v2289 = vpop.f32.mrb[0].mxu0
    %v2290 = vadd.f32 %v2047, %v2289
    %v2291 = vpop.f32.mrb[0].mxu0
    %v2292 = vadd.f32 %v2049, %v2291
    %2293 = vmatprep.mubr.f32.mxu0 0.0
    %v2294 = vand.u32 %v1942, 4294901760
    %2295 = vmatmul.mubr.f32.gmra.mrb[0].mxu0 %v2294
    %v2296 = vpop.f32.mrb[0].mxu0
    %v2297 = vadd.f32 %v2058, %v2296
    %v2298 = vpop.f32.mrb[0].mxu0
    %v2299 = vadd.f32 %v2060, %v2298
    %2300 = vdwg.mxu0
    %v2301 = vand.u32 %v60, 4294901760
    %v2302 = vsub.f32 %v60, %v2301
    %2303 = vmatprep.subr.mxu0 %v2302
    %v2304 = vand.u32 %v59, 4294901760
    %v2305 = vsub.f32 %v59, %v2304
    %2306 = vmatpush1.msra.mxu0 %v2305
    %v2307 = vand.u32 %v64, 4294901760
    %v2308 = vsub.f32 %v64, %v2307
    %2309 = vmatprep.subr.mxu0 %v2308
    %v2310 = vand.u32 %v63, 4294901760
    %v2311 = vsub.f32 %v63, %v2310
    %2312 = vmatpush1.msra.mxu0 %v2311
    %v2313 = vand.u32 %v68, 4294901760
    %v2314 = vsub.f32 %v68, %v2313
    %2315 = vmatprep.subr.mxu0 %v2314
    %v2316 = vand.u32 %v67, 4294901760
    %v2317 = vsub.f32 %v67, %v2316
    %2318 = vmatpush1.msra.mxu0 %v2317
    %v2319 = vand.u32 %v72, 4294901760
    %v2320 = vsub.f32 %v72, %v2319
    %2321 = vmatprep.subr.mxu0 %v2320
    %v2322 = vand.u32 %v71, 4294901760
    %v2323 = vsub.f32 %v71, %v2322
    %2324 = vmatpush1.msra.mxu0 %v2323
    %v2325 = vand.u32 %v76, 4294901760
    %v2326 = vsub.f32 %v76, %v2325
    %2327 = vmatprep.subr.mxu0 %v2326
    %v2328 = vand.u32 %v75, 4294901760
    %v2329 = vsub.f32 %v75, %v2328
    %2330 = vmatpush1.msra.mxu0 %v2329
    %v2331 = vand.u32 %v80, 4294901760
    %v2332 = vsub.f32 %v80, %v2331
    %2333 = vmatprep.subr.mxu0 %v2332
    %v2334 = vand.u32 %v79, 4294901760
    %v2335 = vsub.f32 %v79, %v2334
    %2336 = vmatpush1.msra.mxu0 %v2335
    %v2337 = vand.u32 %v84, 4294901760
    %v2338 = vsub.f32 %v84, %v2337
    %2339 = vmatprep.subr.mxu0 %v2338
    %v2340 = vand.u32 %v83, 4294901760
    %v2341 = vsub.f32 %v83, %v2340
    %2342 = vmatpush1.msra.mxu0 %v2341
    %v2343 = vand.u32 %v88, 4294901760
    %v2344 = vsub.f32 %v88, %v2343
    %2345 = vmatprep.subr.mxu0 %v2344
    %v2346 = vand.u32 %v87, 4294901760
    %v2347 = vsub.f32 %v87, %v2346
    %2348 = vmatpush1.msra.mxu0 %v2347
    %v2349 = vand.u32 %v92, 4294901760
    %v2350 = vsub.f32 %v92, %v2349
    %2351 = vmatprep.subr.mxu0 %v2350
    %v2352 = vand.u32 %v91, 4294901760
    %v2353 = vsub.f32 %v91, %v2352
    %2354 = vmatpush1.msra.mxu0 %v2353
    %v2355 = vand.u32 %v96, 4294901760
    %v2356 = vsub.f32 %v96, %v2355
    %2357 = vmatprep.subr.mxu0 %v2356
    %v2358 = vand.u32 %v95, 4294901760
    %v2359 = vsub.f32 %v95, %v2358
    %2360 = vmatpush1.msra.mxu0 %v2359
    %v2361 = vand.u32 %v100, 4294901760
    %v2362 = vsub.f32 %v100, %v2361
    %2363 = vmatprep.subr.mxu0 %v2362
    %v2364 = vand.u32 %v99, 4294901760
    %v2365 = vsub.f32 %v99, %v2364
    %2366 = vmatpush1.msra.mxu0 %v2365
    %v2367 = vand.u32 %v104, 4294901760
    %v2368 = vsub.f32 %v104, %v2367
    %2369 = vmatprep.subr.mxu0 %v2368
    %v2370 = vand.u32 %v103, 4294901760
    %v2371 = vsub.f32 %v103, %v2370
    %2372 = vmatpush1.msra.mxu0 %v2371
    %v2373 = vand.u32 %v108, 4294901760
    %v2374 = vsub.f32 %v108, %v2373
    %2375 = vmatprep.subr.mxu0 %v2374
    %v2376 = vand.u32 %v107, 4294901760
    %v2377 = vsub.f32 %v107, %v2376
    %2378 = vmatpush1.msra.mxu0 %v2377
    %v2379 = vand.u32 %v112, 4294901760
    %v2380 = vsub.f32 %v112, %v2379
    %2381 = vmatprep.subr.mxu0 %v2380
    %v2382 = vand.u32 %v111, 4294901760
    %v2383 = vsub.f32 %v111, %v2382
    %2384 = vmatpush1.msra.mxu0 %v2383
    %v2385 = vand.u32 %v116, 4294901760
    %v2386 = vsub.f32 %v116, %v2385
    %2387 = vmatprep.subr.mxu0 %v2386
    %v2388 = vand.u32 %v115, 4294901760
    %v2389 = vsub.f32 %v115, %v2388
    %2390 = vmatpush1.msra.mxu0 %v2389
    %v2391 = vand.u32 %v120, 4294901760
    %v2392 = vsub.f32 %v120, %v2391
    %2393 = vmatprep.subr.mxu0 %v2392
    %v2394 = vand.u32 %v119, 4294901760
    %v2395 = vsub.f32 %v119, %v2394
    %2396 = vmatpush1.msra.mxu0 %v2395
    %2397 = vmatprep.subr.mxu0 0.0
    %2398 = vmatpush1.msra.mxu0 0.0
    %2399 = vmatprep.subr.mxu0 0.0
    %2400 = vmatpush1.msra.mxu0 0.0
    %2401 = vmatprep.subr.mxu0 0.0
    %2402 = vmatpush1.msra.mxu0 0.0
    %2403 = vmatprep.subr.mxu0 0.0
    %2404 = vmatpush1.msra.mxu0 0.0
    %2405 = vmatprep.subr.mxu0 0.0
    %2406 = vmatpush1.msra.mxu0 0.0
    %2407 = vmatprep.subr.mxu0 0.0
    %2408 = vmatpush1.msra.mxu0 0.0
    %2409 = vmatprep.subr.mxu0 0.0
    %2410 = vmatpush1.msra.mxu0 0.0
    %2411 = vmatprep.subr.mxu0 0.0
    %2412 = vmatpush1.msra.mxu0 0.0
    %2413 = vmatprep.subr.mxu0 0.0
    %2414 = vmatpush1.msra.mxu0 0.0
    %2415 = vmatprep.subr.mxu0 0.0
    %2416 = vmatpush1.msra.mxu0 0.0
    %2417 = vmatprep.subr.mxu0 0.0
    %2418 = vmatpush1.msra.mxu0 0.0
    %2419 = vmatprep.subr.mxu0 0.0
    %2420 = vmatpush1.msra.mxu0 0.0
    %2421 = vmatprep.subr.mxu0 0.0
    %2422 = vmatpush1.msra.mxu0 0.0
    %2423 = vmatprep.subr.mxu0 0.0
    %2424 = vmatpush1.msra.mxu0 0.0
    %2425 = vmatprep.subr.mxu0 0.0
    %2426 = vmatpush1.msra.mxu0 0.0
    %2427 = vmatprep.subr.mxu0 0.0
    %2428 = vmatpush1.msra.mxu0 0.0
    %2429 = vmatprep.mubr.f32.mxu0 0.0
    %v2430 = vand.u32 %v1941, 4294901760
    %v2431 = vsub.f32 %v1941, %v2430
    %2432 = vmatmul.mubr.f32.gmra.mrb[0].mxu0 %v2431
    %v2433 = vpop.f32.mrb[0].mxu0
    %v2434 = vadd.f32 %v2290, %v2433
    %v2435 = vpop.f32.mrb[0].mxu0
    %v2436 = vadd.f32 %v2292, %v2435
    %2437 = vmatprep.mubr.f32.mxu0 0.0
    %v2438 = vand.u32 %v1942, 4294901760
    %v2439 = vsub.f32 %v1942, %v2438
    %2440 = vmatmul.mubr.f32.gmra.mrb[0].mxu0 %v2439
    %v2441 = vpop.f32.mrb[0].mxu0
    %v2442 = vadd.f32 %v2297, %v2441
    %v2443 = vpop.f32.mrb[0].mxu0
    %v2444 = vadd.f32 %v2299, %v2443
    %2445 = vdwg.mxu0
    %v2446 = vand.u32 %v60, 4294901760
    %2447 = vmatprep.subr.mxu0 %v2446
    %v2448 = vand.u32 %v59, 4294901760
    %2449 = vmatpush1.msra.mxu0 %v2448
    %v2450 = vand.u32 %v64, 4294901760
    %2451 = vmatprep.subr.mxu0 %v2450
    %v2452 = vand.u32 %v63, 4294901760
    %2453 = vmatpush1.msra.mxu0 %v2452
    %v2454 = vand.u32 %v68, 4294901760
    %2455 = vmatprep.subr.mxu0 %v2454
    %v2456 = vand.u32 %v67, 4294901760
    %2457 = vmatpush1.msra.mxu0 %v2456
    %v2458 = vand.u32 %v72, 4294901760
    %2459 = vmatprep.subr.mxu0 %v2458
    %v2460 = vand.u32 %v71, 4294901760
    %2461 = vmatpush1.msra.mxu0 %v2460
    %v2462 = vand.u32 %v76, 4294901760
    %2463 = vmatprep.subr.mxu0 %v2462
    %v2464 = vand.u32 %v75, 4294901760
    %2465 = vmatpush1.msra.mxu0 %v2464
    %v2466 = vand.u32 %v80, 4294901760
    %2467 = vmatprep.subr.mxu0 %v2466
    %v2468 = vand.u32 %v79, 4294901760
    %2469 = vmatpush1.msra.mxu0 %v2468
    %v2470 = vand.u32 %v84, 4294901760
    %2471 = vmatprep.subr.mxu0 %v2470
    %v2472 = vand.u32 %v83, 4294901760
    %2473 = vmatpush1.msra.mxu0 %v2472
    %v2474 = vand.u32 %v88, 4294901760
    %2475 = vmatprep.subr.mxu0 %v2474
    %v2476 = vand.u32 %v87, 4294901760
    %2477 = vmatpush1.msra.mxu0 %v2476
    %v2478 = vand.u32 %v92, 4294901760
    %2479 = vmatprep.subr.mxu0 %v2478
    %v2480 = vand.u32 %v91, 4294901760
    %2481 = vmatpush1.msra.mxu0 %v2480
    %v2482 = vand.u32 %v96, 4294901760
    %2483 = vmatprep.subr.mxu0 %v2482
    %v2484 = vand.u32 %v95, 4294901760
    %2485 = vmatpush1.msra.mxu0 %v2484
    %v2486 = vand.u32 %v100, 4294901760
    %2487 = vmatprep.subr.mxu0 %v2486
    %v2488 = vand.u32 %v99, 4294901760
    %2489 = vmatpush1.msra.mxu0 %v2488
    %v2490 = vand.u32 %v104, 4294901760
    %2491 = vmatprep.subr.mxu0 %v2490
    %v2492 = vand.u32 %v103, 4294901760
    %2493 = vmatpush1.msra.mxu0 %v2492
    %v2494 = vand.u32 %v108, 4294901760
    %2495 = vmatprep.subr.mxu0 %v2494
    %v2496 = vand.u32 %v107, 4294901760
    %2497 = vmatpush1.msra.mxu0 %v2496
    %v2498 = vand.u32 %v112, 4294901760
    %2499 = vmatprep.subr.mxu0 %v2498
    %v2500 = vand.u32 %v111, 4294901760
    %2501 = vmatpush1.msra.mxu0 %v2500
    %v2502 = vand.u32 %v116, 4294901760
    %2503 = vmatprep.subr.mxu0 %v2502
    %v2504 = vand.u32 %v115, 4294901760
    %2505 = vmatpush1.msra.mxu0 %v2504
    %v2506 = vand.u32 %v120, 4294901760
    %2507 = vmatprep.subr.mxu0 %v2506
    %v2508 = vand.u32 %v119, 4294901760
    %2509 = vmatpush1.msra.mxu0 %v2508
    %2510 = vmatprep.subr.mxu0 0.0
    %2511 = vmatpush1.msra.mxu0 0.0
    %2512 = vmatprep.subr.mxu0 0.0
    %2513 = vmatpush1.msra.mxu0 0.0
    %2514 = vmatprep.subr.mxu0 0.0
    %2515 = vmatpush1.msra.mxu0 0.0
    %2516 = vmatprep.subr.mxu0 0.0
    %2517 = vmatpush1.msra.mxu0 0.0
    %2518 = vmatprep.subr.mxu0 0.0
    %2519 = vmatpush1.msra.mxu0 0.0
    %2520 = vmatprep.subr.mxu0 0.0
    %2521 = vmatpush1.msra.mxu0 0.0
    %2522 = vmatprep.subr.mxu0 0.0
    %2523 = vmatpush1.msra.mxu0 0.0
    %2524 = vmatprep.subr.mxu0 0.0
    %2525 = vmatpush1.msra.mxu0 0.0
    %2526 = vmatprep.subr.mxu0 0.0
    %2527 = vmatpush1.msra.mxu0 0.0
    %2528 = vmatprep.subr.mxu0 0.0
    %2529 = vmatpush1.msra.mxu0 0.0
    %2530 = vmatprep.subr.mxu0 0.0
    %2531 = vmatpush1.msra.mxu0 0.0
    %2532 = vmatprep.subr.mxu0 0.0
    %2533 = vmatpush1.msra.mxu0 0.0
    %2534 = vmatprep.subr.mxu0 0.0
    %2535 = vmatpush1.msra.mxu0 0.0
    %2536 = vmatprep.subr.mxu0 0.0
    %2537 = vmatpush1.msra.mxu0 0.0
    %2538 = vmatprep.subr.mxu0 0.0
    %2539 = vmatpush1.msra.mxu0 0.0
    %2540 = vmatprep.subr.mxu0 0.0
    %2541 = vmatpush1.msra.mxu0 0.0
    %2542 = vmatprep.mubr.f32.mxu0 0.0
    %v2543 = vand.u32 %v1941, 4294901760
    %v2544 = vsub.f32 %v1941, %v2543
    %v2545 = vand.u32 %v2544, 4294901760
    %2546 = vmatmul.mubr.f32.gmra.mrb[0].mxu0 %v2545
    %v2547 = vpop.f32.mrb[0].mxu0
    %v2548 = vadd.f32 %v2434, %v2547
    %v2549 = vpop.f32.mrb[0].mxu0
    %v2550 = vadd.f32 %v2436, %v2549
    %2551 = vmatprep.mubr.f32.mxu0 0.0
    %v2552 = vand.u32 %v1942, 4294901760
    %v2553 = vsub.f32 %v1942, %v2552
    %v2554 = vand.u32 %v2553, 4294901760
    %2555 = vmatmul.mubr.f32.gmra.mrb[0].mxu0 %v2554
    %v2556 = vpop.f32.mrb[0].mxu0
    %v2557 = vadd.f32 %v2442, %v2556
    %v2558 = vpop.f32.mrb[0].mxu0
    %v2559 = vadd.f32 %v2444, %v2558
    %2560 = vdwg.mxu0
    %v2561 = vand.u32 %v60, 4294901760
    %v2562 = vsub.f32 %v60, %v2561
    %v2563 = vand.u32 %v2562, 4294901760
    %2564 = vmatprep.subr.mxu0 %v2563
    %v2565 = vand.u32 %v59, 4294901760
    %v2566 = vsub.f32 %v59, %v2565
    %v2567 = vand.u32 %v2566, 4294901760
    %2568 = vmatpush1.msra.mxu0 %v2567
    %v2569 = vand.u32 %v64, 4294901760
    %v2570 = vsub.f32 %v64, %v2569
    %v2571 = vand.u32 %v2570, 4294901760
    %2572 = vmatprep.subr.mxu0 %v2571
    %v2573 = vand.u32 %v63, 4294901760
    %v2574 = vsub.f32 %v63, %v2573
    %v2575 = vand.u32 %v2574, 4294901760
    %2576 = vmatpush1.msra.mxu0 %v2575
    %v2577 = vand.u32 %v68, 4294901760
    %v2578 = vsub.f32 %v68, %v2577
    %v2579 = vand.u32 %v2578, 4294901760
    %2580 = vmatprep.subr.mxu0 %v2579
    %v2581 = vand.u32 %v67, 4294901760
    %v2582 = vsub.f32 %v67, %v2581
    %v2583 = vand.u32 %v2582, 4294901760
    %2584 = vmatpush1.msra.mxu0 %v2583
    %v2585 = vand.u32 %v72, 4294901760
    %v2586 = vsub.f32 %v72, %v2585
    %v2587 = vand.u32 %v2586, 4294901760
    %2588 = vmatprep.subr.mxu0 %v2587
    %v2589 = vand.u32 %v71, 4294901760
    %v2590 = vsub.f32 %v71, %v2589
    %v2591 = vand.u32 %v2590, 4294901760
    %2592 = vmatpush1.msra.mxu0 %v2591
    %v2593 = vand.u32 %v76, 4294901760
    %v2594 = vsub.f32 %v76, %v2593
    %v2595 = vand.u32 %v2594, 4294901760
    %2596 = vmatprep.subr.mxu0 %v2595
    %v2597 = vand.u32 %v75, 4294901760
    %v2598 = vsub.f32 %v75, %v2597
    %v2599 = vand.u32 %v2598, 4294901760
    %2600 = vmatpush1.msra.mxu0 %v2599
    %v2601 = vand.u32 %v80, 4294901760
    %v2602 = vsub.f32 %v80, %v2601
    %v2603 = vand.u32 %v2602, 4294901760
    %2604 = vmatprep.subr.mxu0 %v2603
    %v2605 = vand.u32 %v79, 4294901760
    %v2606 = vsub.f32 %v79, %v2605
    %v2607 = vand.u32 %v2606, 4294901760
    %2608 = vmatpush1.msra.mxu0 %v2607
    %v2609 = vand.u32 %v84, 4294901760
    %v2610 = vsub.f32 %v84, %v2609
    %v2611 = vand.u32 %v2610, 4294901760
    %2612 = vmatprep.subr.mxu0 %v2611
    %v2613 = vand.u32 %v83, 4294901760
    %v2614 = vsub.f32 %v83, %v2613
    %v2615 = vand.u32 %v2614, 4294901760
    %2616 = vmatpush1.msra.mxu0 %v2615
    %v2617 = vand.u32 %v88, 4294901760
    %v2618 = vsub.f32 %v88, %v2617
    %v2619 = vand.u32 %v2618, 4294901760
    %2620 = vmatprep.subr.mxu0 %v2619
    %v2621 = vand.u32 %v87, 4294901760
    %v2622 = vsub.f32 %v87, %v2621
    %v2623 = vand.u32 %v2622, 4294901760
    %2624 = vmatpush1.msra.mxu0 %v2623
    %v2625 = vand.u32 %v92, 4294901760
    %v2626 = vsub.f32 %v92, %v2625
    %v2627 = vand.u32 %v2626, 4294901760
    %2628 = vmatprep.subr.mxu0 %v2627
    %v2629 = vand.u32 %v91, 4294901760
    %v2630 = vsub.f32 %v91, %v2629
    %v2631 = vand.u32 %v2630, 4294901760
    %2632 = vmatpush1.msra.mxu0 %v2631
    %v2633 = vand.u32 %v96, 4294901760
    %v2634 = vsub.f32 %v96, %v2633
    %v2635 = vand.u32 %v2634, 4294901760
    %2636 = vmatprep.subr.mxu0 %v2635
    %v2637 = vand.u32 %v95, 4294901760
    %v2638 = vsub.f32 %v95, %v2637
    %v2639 = vand.u32 %v2638, 4294901760
    %2640 = vmatpush1.msra.mxu0 %v2639
    %v2641 = vand.u32 %v100, 4294901760
    %v2642 = vsub.f32 %v100, %v2641
    %v2643 = vand.u32 %v2642, 4294901760
    %2644 = vmatprep.subr.mxu0 %v2643
    %v2645 = vand.u32 %v99, 4294901760
    %v2646 = vsub.f32 %v99, %v2645
    %v2647 = vand.u32 %v2646, 4294901760
    %2648 = vmatpush1.msra.mxu0 %v2647
    %v2649 = vand.u32 %v104, 4294901760
    %v2650 = vsub.f32 %v104, %v2649
    %v2651 = vand.u32 %v2650, 4294901760
    %2652 = vmatprep.subr.mxu0 %v2651
    %v2653 = vand.u32 %v103, 4294901760
    %v2654 = vsub.f32 %v103, %v2653
    %v2655 = vand.u32 %v2654, 4294901760
    %2656 = vmatpush1.msra.mxu0 %v2655
    %v2657 = vand.u32 %v108, 4294901760
    %v2658 = vsub.f32 %v108, %v2657
    %v2659 = vand.u32 %v2658, 4294901760
    %2660 = vmatprep.subr.mxu0 %v2659
    %v2661 = vand.u32 %v107, 4294901760
    %v2662 = vsub.f32 %v107, %v2661
    %v2663 = vand.u32 %v2662, 4294901760
    %2664 = vmatpush1.msra.mxu0 %v2663
    %v2665 = vand.u32 %v112, 4294901760
    %v2666 = vsub.f32 %v112, %v2665
    %v2667 = vand.u32 %v2666, 4294901760
    %2668 = vmatprep.subr.mxu0 %v2667
    %v2669 = vand.u32 %v111, 4294901760
    %v2670 = vsub.f32 %v111, %v2669
    %v2671 = vand.u32 %v2670, 4294901760
    %2672 = vmatpush1.msra.mxu0 %v2671
    %v2673 = vand.u32 %v116, 4294901760
    %v2674 = vsub.f32 %v116, %v2673
    %v2675 = vand.u32 %v2674, 4294901760
    %2676 = vmatprep.subr.mxu0 %v2675
    %v2677 = vand.u32 %v115, 4294901760
    %v2678 = vsub.f32 %v115, %v2677
    %v2679 = vand.u32 %v2678, 4294901760
    %2680 = vmatpush1.msra.mxu0 %v2679
    %v2681 = vand.u32 %v120, 4294901760
    %v2682 = vsub.f32 %v120, %v2681
    %v2683 = vand.u32 %v2682, 4294901760
    %2684 = vmatprep.subr.mxu0 %v2683
    %v2685 = vand.u32 %v119, 4294901760
    %v2686 = vsub.f32 %v119, %v2685
    %v2687 = vand.u32 %v2686, 4294901760
    %2688 = vmatpush1.msra.mxu0 %v2687
    %2689 = vmatprep.subr.mxu0 0.0
    %2690 = vmatpush1.msra.mxu0 0.0
    %2691 = vmatprep.subr.mxu0 0.0
    %2692 = vmatpush1.msra.mxu0 0.0
    %2693 = vmatprep.subr.mxu0 0.0
    %2694 = vmatpush1.msra.mxu0 0.0
    %2695 = vmatprep.subr.mxu0 0.0
    %2696 = vmatpush1.msra.mxu0 0.0
    %2697 = vmatprep.subr.mxu0 0.0
    %2698 = vmatpush1.msra.mxu0 0.0
    %2699 = vmatprep.subr.mxu0 0.0
    %2700 = vmatpush1.msra.mxu0 0.0
    %2701 = vmatprep.subr.mxu0 0.0
    %2702 = vmatpush1.msra.mxu0 0.0
    %2703 = vmatprep.subr.mxu0 0.0
    %2704 = vmatpush1.msra.mxu0 0.0
    %2705 = vmatprep.subr.mxu0 0.0
    %2706 = vmatpush1.msra.mxu0 0.0
    %2707 = vmatprep.subr.mxu0 0.0
    %2708 = vmatpush1.msra.mxu0 0.0
    %2709 = vmatprep.subr.mxu0 0.0
    %2710 = vmatpush1.msra.mxu0 0.0
    %2711 = vmatprep.subr.mxu0 0.0
    %2712 = vmatpush1.msra.mxu0 0.0
    %2713 = vmatprep.subr.mxu0 0.0
    %2714 = vmatpush1.msra.mxu0 0.0
    %2715 = vmatprep.subr.mxu0 0.0
    %2716 = vmatpush1.msra.mxu0 0.0
    %2717 = vmatprep.subr.mxu0 0.0
    %2718 = vmatpush1.msra.mxu0 0.0
    %2719 = vmatprep.subr.mxu0 0.0
    %2720 = vmatpush1.msra.mxu0 0.0
    %2721 = vmatprep.mubr.f32.mxu0 0.0
    %v2722 = vand.u32 %v1941, 4294901760
    %2723 = vmatmul.mubr.f32.gmra.mrb[0].mxu0 %v2722
    %v2724 = vpop.f32.mrb[0].mxu0
    %v2725 = vadd.f32 %v2548, %v2724
    %v2726 = vpop.f32.mrb[0].mxu0
    %v2727 = vadd.f32 %v2550, %v2726
    %2728 = vmatprep.mubr.f32.mxu0 0.0
    %v2729 = vand.u32 %v1942, 4294901760
    %2730 = vmatmul.mubr.f32.gmra.mrb[0].mxu0 %v2729
    %v2731 = vpop.f32.mrb[0].mxu0
    %v2732 = vadd.f32 %v2557, %v2731
    %v2733 = vpop.f32.mrb[0].mxu0
    %v2734 = vadd.f32 %v2559, %v2733
    %2735 = vdwg.mxu0
    %v2736 = vand.u32 %v60, 4294901760
    %2737 = vmatprep.subr.mxu0 %v2736
    %v2738 = vand.u32 %v59, 4294901760
    %2739 = vmatpush1.msra.mxu0 %v2738
    %v2740 = vand.u32 %v64, 4294901760
    %2741 = vmatprep.subr.mxu0 %v2740
    %v2742 = vand.u32 %v63, 4294901760
    %2743 = vmatpush1.msra.mxu0 %v2742
    %v2744 = vand.u32 %v68, 4294901760
    %2745 = vmatprep.subr.mxu0 %v2744
    %v2746 = vand.u32 %v67, 4294901760
    %2747 = vmatpush1.msra.mxu0 %v2746
    %v2748 = vand.u32 %v72, 4294901760
    %2749 = vmatprep.subr.mxu0 %v2748
    %v2750 = vand.u32 %v71, 4294901760
    %2751 = vmatpush1.msra.mxu0 %v2750
    %v2752 = vand.u32 %v76, 4294901760
    %2753 = vmatprep.subr.mxu0 %v2752
    %v2754 = vand.u32 %v75, 4294901760
    %2755 = vmatpush1.msra.mxu0 %v2754
    %v2756 = vand.u32 %v80, 4294901760
    %2757 = vmatprep.subr.mxu0 %v2756
    %v2758 = vand.u32 %v79, 4294901760
    %2759 = vmatpush1.msra.mxu0 %v2758
    %v2760 = vand.u32 %v84, 4294901760
    %2761 = vmatprep.subr.mxu0 %v2760
    %v2762 = vand.u32 %v83, 4294901760
    %2763 = vmatpush1.msra.mxu0 %v2762
    %v2764 = vand.u32 %v88, 4294901760
    %2765 = vmatprep.subr.mxu0 %v2764
    %v2766 = vand.u32 %v87, 4294901760
    %2767 = vmatpush1.msra.mxu0 %v2766
    %v2768 = vand.u32 %v92, 4294901760
    %2769 = vmatprep.subr.mxu0 %v2768
    %v2770 = vand.u32 %v91, 4294901760
    %2771 = vmatpush1.msra.mxu0 %v2770
    %v2772 = vand.u32 %v96, 4294901760
    %2773 = vmatprep.subr.mxu0 %v2772
    %v2774 = vand.u32 %v95, 4294901760
    %2775 = vmatpush1.msra.mxu0 %v2774
    %v2776 = vand.u32 %v100, 4294901760
    %2777 = vmatprep.subr.mxu0 %v2776
    %v2778 = vand.u32 %v99, 4294901760
    %2779 = vmatpush1.msra.mxu0 %v2778
    %v2780 = vand.u32 %v104, 4294901760
    %2781 = vmatprep.subr.mxu0 %v2780
    %v2782 = vand.u32 %v103, 4294901760
    %2783 = vmatpush1.msra.mxu0 %v2782
    %v2784 = vand.u32 %v108, 4294901760
    %2785 = vmatprep.subr.mxu0 %v2784
    %v2786 = vand.u32 %v107, 4294901760
    %2787 = vmatpush1.msra.mxu0 %v2786
    %v2788 = vand.u32 %v112, 4294901760
    %2789 = vmatprep.subr.mxu0 %v2788
    %v2790 = vand.u32 %v111, 4294901760
    %2791 = vmatpush1.msra.mxu0 %v2790
    %v2792 = vand.u32 %v116, 4294901760
    %2793 = vmatprep.subr.mxu0 %v2792
    %v2794 = vand.u32 %v115, 4294901760
    %2795 = vmatpush1.msra.mxu0 %v2794
    %v2796 = vand.u32 %v120, 4294901760
    %2797 = vmatprep.subr.mxu0 %v2796
    %v2798 = vand.u32 %v119, 4294901760
    %2799 = vmatpush1.msra.mxu0 %v2798
    %2800 = vmatprep.subr.mxu0 0.0
    %2801 = vmatpush1.msra.mxu0 0.0
    %2802 = vmatprep.subr.mxu0 0.0
    %2803 = vmatpush1.msra.mxu0 0.0
    %2804 = vmatprep.subr.mxu0 0.0
    %2805 = vmatpush1.msra.mxu0 0.0
    %2806 = vmatprep.subr.mxu0 0.0
    %2807 = vmatpush1.msra.mxu0 0.0
    %2808 = vmatprep.subr.mxu0 0.0
    %2809 = vmatpush1.msra.mxu0 0.0
    %2810 = vmatprep.subr.mxu0 0.0
    %2811 = vmatpush1.msra.mxu0 0.0
    %2812 = vmatprep.subr.mxu0 0.0
    %2813 = vmatpush1.msra.mxu0 0.0
    %2814 = vmatprep.subr.mxu0 0.0
    %2815 = vmatpush1.msra.mxu0 0.0
    %2816 = vmatprep.subr.mxu0 0.0
    %2817 = vmatpush1.msra.mxu0 0.0
    %2818 = vmatprep.subr.mxu0 0.0
    %2819 = vmatpush1.msra.mxu0 0.0
    %2820 = vmatprep.subr.mxu0 0.0
    %2821 = vmatpush1.msra.mxu0 0.0
    %2822 = vmatprep.subr.mxu0 0.0
    %2823 = vmatpush1.msra.mxu0 0.0
    %2824 = vmatprep.subr.mxu0 0.0
    %2825 = vmatpush1.msra.mxu0 0.0
    %2826 = vmatprep.subr.mxu0 0.0
    %2827 = vmatpush1.msra.mxu0 0.0
    %2828 = vmatprep.subr.mxu0 0.0
    %2829 = vmatpush1.msra.mxu0 0.0
    %2830 = vmatprep.subr.mxu0 0.0
    %2831 = vmatpush1.msra.mxu0 0.0
    %2832 = vmatprep.mubr.f32.mxu0 0.0
    %v2833 = vand.u32 %v1941, 4294901760
    %2834 = vmatmul.mubr.f32.gmra.mrb[0].mxu0 %v2833
    %v2835 = vpop.f32.mrb[0].mxu0
    %v2836 = vadd.f32 %v2725, %v2835
    %v2837 = vpop.f32.mrb[0].mxu0
    %v2838 = vadd.f32 %v2727, %v2837
    %2839 = vmatprep.mubr.f32.mxu0 0.0
    %v2840 = vand.u32 %v1942, 4294901760
    %2841 = vmatmul.mubr.f32.gmra.mrb[0].mxu0 %v2840
    %v2842 = vpop.f32.mrb[0].mxu0
    %v2843 = vadd.f32 %v2732, %v2842
    %v2844 = vpop.f32.mrb[0].mxu0
    %v2845 = vadd.f32 %v2734, %v2844
    %2846 = vdwg.mxu0
    %v2847 = vand.u32 %v62, 4294901760
    %2848 = vmatprep.subr.mxu0 %v2847
    %v2849 = vand.u32 %v61, 4294901760
    %2850 = vmatpush1.msra.mxu0 %v2849
    %v2851 = vand.u32 %v66, 4294901760
    %2852 = vmatprep.subr.mxu0 %v2851
    %v2853 = vand.u32 %v65, 4294901760
    %2854 = vmatpush1.msra.mxu0 %v2853
    %v2855 = vand.u32 %v70, 4294901760
    %2856 = vmatprep.subr.mxu0 %v2855
    %v2857 = vand.u32 %v69, 4294901760
    %2858 = vmatpush1.msra.mxu0 %v2857
    %v2859 = vand.u32 %v74, 4294901760
    %2860 = vmatprep.subr.mxu0 %v2859
    %v2861 = vand.u32 %v73, 4294901760
    %2862 = vmatpush1.msra.mxu0 %v2861
    %v2863 = vand.u32 %v78, 4294901760
    %2864 = vmatprep.subr.mxu0 %v2863
    %v2865 = vand.u32 %v77, 4294901760
    %2866 = vmatpush1.msra.mxu0 %v2865
    %v2867 = vand.u32 %v82, 4294901760
    %2868 = vmatprep.subr.mxu0 %v2867
    %v2869 = vand.u32 %v81, 4294901760
    %2870 = vmatpush1.msra.mxu0 %v2869
    %v2871 = vand.u32 %v86, 4294901760
    %2872 = vmatprep.subr.mxu0 %v2871
    %v2873 = vand.u32 %v85, 4294901760
    %2874 = vmatpush1.msra.mxu0 %v2873
    %v2875 = vand.u32 %v90, 4294901760
    %2876 = vmatprep.subr.mxu0 %v2875
    %v2877 = vand.u32 %v89, 4294901760
    %2878 = vmatpush1.msra.mxu0 %v2877
    %v2879 = vand.u32 %v94, 4294901760
    %2880 = vmatprep.subr.mxu0 %v2879
    %v2881 = vand.u32 %v93, 4294901760
    %2882 = vmatpush1.msra.mxu0 %v2881
    %v2883 = vand.u32 %v98, 4294901760
    %2884 = vmatprep.subr.mxu0 %v2883
    %v2885 = vand.u32 %v97, 4294901760
    %2886 = vmatpush1.msra.mxu0 %v2885
    %v2887 = vand.u32 %v102, 4294901760
    %2888 = vmatprep.subr.mxu0 %v2887
    %v2889 = vand.u32 %v101, 4294901760
    %2890 = vmatpush1.msra.mxu0 %v2889
    %v2891 = vand.u32 %v106, 4294901760
    %2892 = vmatprep.subr.mxu0 %v2891
    %v2893 = vand.u32 %v105, 4294901760
    %2894 = vmatpush1.msra.mxu0 %v2893
    %v2895 = vand.u32 %v110, 4294901760
    %2896 = vmatprep.subr.mxu0 %v2895
    %v2897 = vand.u32 %v109, 4294901760
    %2898 = vmatpush1.msra.mxu0 %v2897
    %v2899 = vand.u32 %v114, 4294901760
    %2900 = vmatprep.subr.mxu0 %v2899
    %v2901 = vand.u32 %v113, 4294901760
    %2902 = vmatpush1.msra.mxu0 %v2901
    %v2903 = vand.u32 %v118, 4294901760
    %2904 = vmatprep.subr.mxu0 %v2903
    %v2905 = vand.u32 %v117, 4294901760
    %2906 = vmatpush1.msra.mxu0 %v2905
    %v2907 = vand.u32 %v122, 4294901760
    %2908 = vmatprep.subr.mxu0 %v2907
    %v2909 = vand.u32 %v121, 4294901760
    %2910 = vmatpush1.msra.mxu0 %v2909
    %2911 = vmatprep.subr.mxu0 0.0
    %2912 = vmatpush1.msra.mxu0 0.0
    %2913 = vmatprep.subr.mxu0 0.0
    %2914 = vmatpush1.msra.mxu0 0.0
    %2915 = vmatprep.subr.mxu0 0.0
    %2916 = vmatpush1.msra.mxu0 0.0
    %2917 = vmatprep.subr.mxu0 0.0
    %2918 = vmatpush1.msra.mxu0 0.0
    %2919 = vmatprep.subr.mxu0 0.0
    %2920 = vmatpush1.msra.mxu0 0.0
    %2921 = vmatprep.subr.mxu0 0.0
    %2922 = vmatpush1.msra.mxu0 0.0
    %2923 = vmatprep.subr.mxu0 0.0
    %2924 = vmatpush1.msra.mxu0 0.0
    %2925 = vmatprep.subr.mxu0 0.0
    %2926 = vmatpush1.msra.mxu0 0.0
    %2927 = vmatprep.subr.mxu0 0.0
    %2928 = vmatpush1.msra.mxu0 0.0
    %2929 = vmatprep.subr.mxu0 0.0
    %2930 = vmatpush1.msra.mxu0 0.0
    %2931 = vmatprep.subr.mxu0 0.0
    %2932 = vmatpush1.msra.mxu0 0.0
    %2933 = vmatprep.subr.mxu0 0.0
    %2934 = vmatpush1.msra.mxu0 0.0
    %2935 = vmatprep.subr.mxu0 0.0
    %2936 = vmatpush1.msra.mxu0 0.0
    %2937 = vmatprep.subr.mxu0 0.0
    %2938 = vmatpush1.msra.mxu0 0.0
    %2939 = vmatprep.subr.mxu0 0.0
    %2940 = vmatpush1.msra.mxu0 0.0
    %2941 = vmatprep.subr.mxu0 0.0
    %2942 = vmatpush1.msra.mxu0 0.0
    %2943 = vmatprep.mubr.f32.mxu0 0.0
    %v2944 = vand.u32 %v1941, 4294901760
    %v2945 = vsub.f32 %v1941, %v2944
    %v2946 = vand.u32 %v2945, 4294901760
    %v2947 = vsub.f32 %v2945, %v2946
    %v2948 = vand.u32 %v2947, 4294901760
    %2949 = vmatmul.mubr.f32.gmra.mrb[0].mxu0 %v2948
    %v2950 = vpop.f32.mrb[0].mxu0
    %v2951 = vadd.f32 0.0, %v2950
    %v2952 = vpop.f32.mrb[0].mxu0
    %v2953 = vadd.f32 0.0, %v2952
    %2954 = vmatprep.mubr.f32.mxu0 0.0
    %v2955 = vand.u32 %v1942, 4294901760
    %v2956 = vsub.f32 %v1942, %v2955
    %v2957 = vand.u32 %v2956, 4294901760
    %v2958 = vsub.f32 %v2956, %v2957
    %v2959 = vand.u32 %v2958, 4294901760
    %2960 = vmatmul.mubr.f32.gmra.mrb[0].mxu0 %v2959
    %v2961 = vpop.f32.mrb[0].mxu0
    %v2962 = vadd.f32 0.0, %v2961
    %v2963 = vpop.f32.mrb[0].mxu0
    %v2964 = vadd.f32 0.0, %v2963
    %2965 = vdwg.mxu0
    %v2966 = vand.u32 %v62, 4294901760
    %v2967 = vsub.f32 %v62, %v2966
    %v2968 = vand.u32 %v2967, 4294901760
    %v2969 = vsub.f32 %v2967, %v2968
    %v2970 = vand.u32 %v2969, 4294901760
    %2971 = vmatprep.subr.mxu0 %v2970
    %v2972 = vand.u32 %v61, 4294901760
    %v2973 = vsub.f32 %v61, %v2972
    %v2974 = vand.u32 %v2973, 4294901760
    %v2975 = vsub.f32 %v2973, %v2974
    %v2976 = vand.u32 %v2975, 4294901760
    %2977 = vmatpush1.msra.mxu0 %v2976
    %v2978 = vand.u32 %v66, 4294901760
    %v2979 = vsub.f32 %v66, %v2978
    %v2980 = vand.u32 %v2979, 4294901760
    %v2981 = vsub.f32 %v2979, %v2980
    %v2982 = vand.u32 %v2981, 4294901760
    %2983 = vmatprep.subr.mxu0 %v2982
    %v2984 = vand.u32 %v65, 4294901760
    %v2985 = vsub.f32 %v65, %v2984
    %v2986 = vand.u32 %v2985, 4294901760
    %v2987 = vsub.f32 %v2985, %v2986
    %v2988 = vand.u32 %v2987, 4294901760
    %2989 = vmatpush1.msra.mxu0 %v2988
    %v2990 = vand.u32 %v70, 4294901760
    %v2991 = vsub.f32 %v70, %v2990
    %v2992 = vand.u32 %v2991, 4294901760
    %v2993 = vsub.f32 %v2991, %v2992
    %v2994 = vand.u32 %v2993, 4294901760
    %2995 = vmatprep.subr.mxu0 %v2994
    %v2996 = vand.u32 %v69, 4294901760
    %v2997 = vsub.f32 %v69, %v2996
    %v2998 = vand.u32 %v2997, 4294901760
    %v2999 = vsub.f32 %v2997, %v2998
    %v3000 = vand.u32 %v2999, 4294901760
    %3001 = vmatpush1.msra.mxu0 %v3000
    %v3002 = vand.u32 %v74, 4294901760
    %v3003 = vsub.f32 %v74, %v3002
    %v3004 = vand.u32 %v3003, 4294901760
    %v3005 = vsub.f32 %v3003, %v3004
    %v3006 = vand.u32 %v3005, 4294901760
    %3007 = vmatprep.subr.mxu0 %v3006
    %v3008 = vand.u32 %v73, 4294901760
    %v3009 = vsub.f32 %v73, %v3008
    %v3010 = vand.u32 %v3009, 4294901760
    %v3011 = vsub.f32 %v3009, %v3010
    %v3012 = vand.u32 %v3011, 4294901760
    %3013 = vmatpush1.msra.mxu0 %v3012
    %v3014 = vand.u32 %v78, 4294901760
    %v3015 = vsub.f32 %v78, %v3014
    %v3016 = vand.u32 %v3015, 4294901760
    %v3017 = vsub.f32 %v3015, %v3016
    %v3018 = vand.u32 %v3017, 4294901760
    %3019 = vmatprep.subr.mxu0 %v3018
    %v3020 = vand.u32 %v77, 4294901760
    %v3021 = vsub.f32 %v77, %v3020
    %v3022 = vand.u32 %v3021, 4294901760
    %v3023 = vsub.f32 %v3021, %v3022
    %v3024 = vand.u32 %v3023, 4294901760
    %3025 = vmatpush1.msra.mxu0 %v3024
    %v3026 = vand.u32 %v82, 4294901760
    %v3027 = vsub.f32 %v82, %v3026
    %v3028 = vand.u32 %v3027, 4294901760
    %v3029 = vsub.f32 %v3027, %v3028
    %v3030 = vand.u32 %v3029, 4294901760
    %3031 = vmatprep.subr.mxu0 %v3030
    %v3032 = vand.u32 %v81, 4294901760
    %v3033 = vsub.f32 %v81, %v3032
    %v3034 = vand.u32 %v3033, 4294901760
    %v3035 = vsub.f32 %v3033, %v3034
    %v3036 = vand.u32 %v3035, 4294901760
    %3037 = vmatpush1.msra.mxu0 %v3036
    %v3038 = vand.u32 %v86, 4294901760
    %v3039 = vsub.f32 %v86, %v3038
    %v3040 = vand.u32 %v3039, 4294901760
    %v3041 = vsub.f32 %v3039, %v3040
    %v3042 = vand.u32 %v3041, 4294901760
    %3043 = vmatprep.subr.mxu0 %v3042
    %v3044 = vand.u32 %v85, 4294901760
    %v3045 = vsub.f32 %v85, %v3044
    %v3046 = vand.u32 %v3045, 4294901760
    %v3047 = vsub.f32 %v3045, %v3046
    %v3048 = vand.u32 %v3047, 4294901760
    %3049 = vmatpush1.msra.mxu0 %v3048
    %v3050 = vand.u32 %v90, 4294901760
    %v3051 = vsub.f32 %v90, %v3050
    %v3052 = vand.u32 %v3051, 4294901760
    %v3053 = vsub.f32 %v3051, %v3052
    %v3054 = vand.u32 %v3053, 4294901760
    %3055 = vmatprep.subr.mxu0 %v3054
    %v3056 = vand.u32 %v89, 4294901760
    %v3057 = vsub.f32 %v89, %v3056
    %v3058 = vand.u32 %v3057, 4294901760
    %v3059 = vsub.f32 %v3057, %v3058
    %v3060 = vand.u32 %v3059, 4294901760
    %3061 = vmatpush1.msra.mxu0 %v3060
    %v3062 = vand.u32 %v94, 4294901760
    %v3063 = vsub.f32 %v94, %v3062
    %v3064 = vand.u32 %v3063, 4294901760
    %v3065 = vsub.f32 %v3063, %v3064
    %v3066 = vand.u32 %v3065, 4294901760
    %3067 = vmatprep.subr.mxu0 %v3066
    %v3068 = vand.u32 %v93, 4294901760
    %v3069 = vsub.f32 %v93, %v3068
    %v3070 = vand.u32 %v3069, 4294901760
    %v3071 = vsub.f32 %v3069, %v3070
    %v3072 = vand.u32 %v3071, 4294901760
    %3073 = vmatpush1.msra.mxu0 %v3072
    %v3074 = vand.u32 %v98, 4294901760
    %v3075 = vsub.f32 %v98, %v3074
    %v3076 = vand.u32 %v3075, 4294901760
    %v3077 = vsub.f32 %v3075, %v3076
    %v3078 = vand.u32 %v3077, 4294901760
    %3079 = vmatprep.subr.mxu0 %v3078
    %v3080 = vand.u32 %v97, 4294901760
    %v3081 = vsub.f32 %v97, %v3080
    %v3082 = vand.u32 %v3081, 4294901760
    %v3083 = vsub.f32 %v3081, %v3082
    %v3084 = vand.u32 %v3083, 4294901760
    %3085 = vmatpush1.msra.mxu0 %v3084
    %v3086 = vand.u32 %v102, 4294901760
    %v3087 = vsub.f32 %v102, %v3086
    %v3088 = vand.u32 %v3087, 4294901760
    %v3089 = vsub.f32 %v3087, %v3088
    %v3090 = vand.u32 %v3089, 4294901760
    %3091 = vmatprep.subr.mxu0 %v3090
    %v3092 = vand.u32 %v101, 4294901760
    %v3093 = vsub.f32 %v101, %v3092
    %v3094 = vand.u32 %v3093, 4294901760
    %v3095 = vsub.f32 %v3093, %v3094
    %v3096 = vand.u32 %v3095, 4294901760
    %3097 = vmatpush1.msra.mxu0 %v3096
    %v3098 = vand.u32 %v106, 4294901760
    %v3099 = vsub.f32 %v106, %v3098
    %v3100 = vand.u32 %v3099, 4294901760
    %v3101 = vsub.f32 %v3099, %v3100
    %v3102 = vand.u32 %v3101, 4294901760
    %3103 = vmatprep.subr.mxu0 %v3102
    %v3104 = vand.u32 %v105, 4294901760
    %v3105 = vsub.f32 %v105, %v3104
    %v3106 = vand.u32 %v3105, 4294901760
    %v3107 = vsub.f32 %v3105, %v3106
    %v3108 = vand.u32 %v3107, 4294901760
    %3109 = vmatpush1.msra.mxu0 %v3108
    %v3110 = vand.u32 %v110, 4294901760
    %v3111 = vsub.f32 %v110, %v3110
    %v3112 = vand.u32 %v3111, 4294901760
    %v3113 = vsub.f32 %v3111, %v3112
    %v3114 = vand.u32 %v3113, 4294901760
    %3115 = vmatprep.subr.mxu0 %v3114
    %v3116 = vand.u32 %v109, 4294901760
    %v3117 = vsub.f32 %v109, %v3116
    %v3118 = vand.u32 %v3117, 4294901760
    %v3119 = vsub.f32 %v3117, %v3118
    %v3120 = vand.u32 %v3119, 4294901760
    %3121 = vmatpush1.msra.mxu0 %v3120
    %v3122 = vand.u32 %v114, 4294901760
    %v3123 = vsub.f32 %v114, %v3122
    %v3124 = vand.u32 %v3123, 4294901760
    %v3125 = vsub.f32 %v3123, %v3124
    %v3126 = vand.u32 %v3125, 4294901760
    %3127 = vmatprep.subr.mxu0 %v3126
    %v3128 = vand.u32 %v113, 4294901760
    %v3129 = vsub.f32 %v113, %v3128
    %v3130 = vand.u32 %v3129, 4294901760
    %v3131 = vsub.f32 %v3129, %v3130
    %v3132 = vand.u32 %v3131, 4294901760
    %3133 = vmatpush1.msra.mxu0 %v3132
    %v3134 = vand.u32 %v118, 4294901760
    %v3135 = vsub.f32 %v118, %v3134
    %v3136 = vand.u32 %v3135, 4294901760
    %v3137 = vsub.f32 %v3135, %v3136
    %v3138 = vand.u32 %v3137, 4294901760
    %3139 = vmatprep.subr.mxu0 %v3138
    %v3140 = vand.u32 %v117, 4294901760
    %v3141 = vsub.f32 %v117, %v3140
    %v3142 = vand.u32 %v3141, 4294901760
    %v3143 = vsub.f32 %v3141, %v3142
    %v3144 = vand.u32 %v3143, 4294901760
    %3145 = vmatpush1.msra.mxu0 %v3144
    %v3146 = vand.u32 %v122, 4294901760
    %v3147 = vsub.f32 %v122, %v3146
    %v3148 = vand.u32 %v3147, 4294901760
    %v3149 = vsub.f32 %v3147, %v3148
    %v3150 = vand.u32 %v3149, 4294901760
    %3151 = vmatprep.subr.mxu0 %v3150
    %v3152 = vand.u32 %v121, 4294901760
    %v3153 = vsub.f32 %v121, %v3152
    %v3154 = vand.u32 %v3153, 4294901760
    %v3155 = vsub.f32 %v3153, %v3154
    %v3156 = vand.u32 %v3155, 4294901760
    %3157 = vmatpush1.msra.mxu0 %v3156
    %3158 = vmatprep.subr.mxu0 0.0
    %3159 = vmatpush1.msra.mxu0 0.0
    %3160 = vmatprep.subr.mxu0 0.0
    %3161 = vmatpush1.msra.mxu0 0.0
    %3162 = vmatprep.subr.mxu0 0.0
    %3163 = vmatpush1.msra.mxu0 0.0
    %3164 = vmatprep.subr.mxu0 0.0
    %3165 = vmatpush1.msra.mxu0 0.0
    %3166 = vmatprep.subr.mxu0 0.0
    %3167 = vmatpush1.msra.mxu0 0.0
    %3168 = vmatprep.subr.mxu0 0.0
    %3169 = vmatpush1.msra.mxu0 0.0
    %3170 = vmatprep.subr.mxu0 0.0
    %3171 = vmatpush1.msra.mxu0 0.0
    %3172 = vmatprep.subr.mxu0 0.0
    %3173 = vmatpush1.msra.mxu0 0.0
    %3174 = vmatprep.subr.mxu0 0.0
    %3175 = vmatpush1.msra.mxu0 0.0
    %3176 = vmatprep.subr.mxu0 0.0
    %3177 = vmatpush1.msra.mxu0 0.0
    %3178 = vmatprep.subr.mxu0 0.0
    %3179 = vmatpush1.msra.mxu0 0.0
    %3180 = vmatprep.subr.mxu0 0.0
    %3181 = vmatpush1.msra.mxu0 0.0
    %3182 = vmatprep.subr.mxu0 0.0
    %3183 = vmatpush1.msra.mxu0 0.0
    %3184 = vmatprep.subr.mxu0 0.0
    %3185 = vmatpush1.msra.mxu0 0.0
    %3186 = vmatprep.subr.mxu0 0.0
    %3187 = vmatpush1.msra.mxu0 0.0
    %3188 = vmatprep.subr.mxu0 0.0
    %3189 = vmatpush1.msra.mxu0 0.0
    %3190 = vmatprep.mubr.f32.mxu0 0.0
    %v3191 = vand.u32 %v1941, 4294901760
    %3192 = vmatmul.mubr.f32.gmra.mrb[0].mxu0 %v3191
    %v3193 = vpop.f32.mrb[0].mxu0
    %v3194 = vadd.f32 %v2951, %v3193
    %v3195 = vpop.f32.mrb[0].mxu0
    %v3196 = vadd.f32 %v2953, %v3195
    %3197 = vmatprep.mubr.f32.mxu0 0.0
    %v3198 = vand.u32 %v1942, 4294901760
    %3199 = vmatmul.mubr.f32.gmra.mrb[0].mxu0 %v3198
    %v3200 = vpop.f32.mrb[0].mxu0
    %v3201 = vadd.f32 %v2962, %v3200
    %v3202 = vpop.f32.mrb[0].mxu0
    %v3203 = vadd.f32 %v2964, %v3202
    %3204 = vdwg.mxu0
    %v3205 = vand.u32 %v62, 4294901760
    %v3206 = vsub.f32 %v62, %v3205
    %3207 = vmatprep.subr.mxu0 %v3206
    %v3208 = vand.u32 %v61, 4294901760
    %v3209 = vsub.f32 %v61, %v3208
    %3210 = vmatpush1.msra.mxu0 %v3209
    %v3211 = vand.u32 %v66, 4294901760
    %v3212 = vsub.f32 %v66, %v3211
    %3213 = vmatprep.subr.mxu0 %v3212
    %v3214 = vand.u32 %v65, 4294901760
    %v3215 = vsub.f32 %v65, %v3214
    %3216 = vmatpush1.msra.mxu0 %v3215
    %v3217 = vand.u32 %v70, 4294901760
    %v3218 = vsub.f32 %v70, %v3217
    %3219 = vmatprep.subr.mxu0 %v3218
    %v3220 = vand.u32 %v69, 4294901760
    %v3221 = vsub.f32 %v69, %v3220
    %3222 = vmatpush1.msra.mxu0 %v3221
    %v3223 = vand.u32 %v74, 4294901760
    %v3224 = vsub.f32 %v74, %v3223
    %3225 = vmatprep.subr.mxu0 %v3224
    %v3226 = vand.u32 %v73, 4294901760
    %v3227 = vsub.f32 %v73, %v3226
    %3228 = vmatpush1.msra.mxu0 %v3227
    %v3229 = vand.u32 %v78, 4294901760
    %v3230 = vsub.f32 %v78, %v3229
    %3231 = vmatprep.subr.mxu0 %v3230
    %v3232 = vand.u32 %v77, 4294901760
    %v3233 = vsub.f32 %v77, %v3232
    %3234 = vmatpush1.msra.mxu0 %v3233
    %v3235 = vand.u32 %v82, 4294901760
    %v3236 = vsub.f32 %v82, %v3235
    %3237 = vmatprep.subr.mxu0 %v3236
    %v3238 = vand.u32 %v81, 4294901760
    %v3239 = vsub.f32 %v81, %v3238
    %3240 = vmatpush1.msra.mxu0 %v3239
    %v3241 = vand.u32 %v86, 4294901760
    %v3242 = vsub.f32 %v86, %v3241
    %3243 = vmatprep.subr.mxu0 %v3242
    %v3244 = vand.u32 %v85, 4294901760
    %v3245 = vsub.f32 %v85, %v3244
    %3246 = vmatpush1.msra.mxu0 %v3245
    %v3247 = vand.u32 %v90, 4294901760
    %v3248 = vsub.f32 %v90, %v3247
    %3249 = vmatprep.subr.mxu0 %v3248
    %v3250 = vand.u32 %v89, 4294901760
    %v3251 = vsub.f32 %v89, %v3250
    %3252 = vmatpush1.msra.mxu0 %v3251
    %v3253 = vand.u32 %v94, 4294901760
    %v3254 = vsub.f32 %v94, %v3253
    %3255 = vmatprep.subr.mxu0 %v3254
    %v3256 = vand.u32 %v93, 4294901760
    %v3257 = vsub.f32 %v93, %v3256
    %3258 = vmatpush1.msra.mxu0 %v3257
    %v3259 = vand.u32 %v98, 4294901760
    %v3260 = vsub.f32 %v98, %v3259
    %3261 = vmatprep.subr.mxu0 %v3260
    %v3262 = vand.u32 %v97, 4294901760
    %v3263 = vsub.f32 %v97, %v3262
    %3264 = vmatpush1.msra.mxu0 %v3263
    %v3265 = vand.u32 %v102, 4294901760
    %v3266 = vsub.f32 %v102, %v3265
    %3267 = vmatprep.subr.mxu0 %v3266
    %v3268 = vand.u32 %v101, 4294901760
    %v3269 = vsub.f32 %v101, %v3268
    %3270 = vmatpush1.msra.mxu0 %v3269
    %v3271 = vand.u32 %v106, 4294901760
    %v3272 = vsub.f32 %v106, %v3271
    %3273 = vmatprep.subr.mxu0 %v3272
    %v3274 = vand.u32 %v105, 4294901760
    %v3275 = vsub.f32 %v105, %v3274
    %3276 = vmatpush1.msra.mxu0 %v3275
    %v3277 = vand.u32 %v110, 4294901760
    %v3278 = vsub.f32 %v110, %v3277
    %3279 = vmatprep.subr.mxu0 %v3278
    %v3280 = vand.u32 %v109, 4294901760
    %v3281 = vsub.f32 %v109, %v3280
    %3282 = vmatpush1.msra.mxu0 %v3281
    %v3283 = vand.u32 %v114, 4294901760
    %v3284 = vsub.f32 %v114, %v3283
    %3285 = vmatprep.subr.mxu0 %v3284
    %v3286 = vand.u32 %v113, 4294901760
    %v3287 = vsub.f32 %v113, %v3286
    %3288 = vmatpush1.msra.mxu0 %v3287
    %v3289 = vand.u32 %v118, 4294901760
    %v3290 = vsub.f32 %v118, %v3289
    %3291 = vmatprep.subr.mxu0 %v3290
    %v3292 = vand.u32 %v117, 4294901760
    %v3293 = vsub.f32 %v117, %v3292
    %3294 = vmatpush1.msra.mxu0 %v3293
    %v3295 = vand.u32 %v122, 4294901760
    %v3296 = vsub.f32 %v122, %v3295
    %3297 = vmatprep.subr.mxu0 %v3296
    %v3298 = vand.u32 %v121, 4294901760
    %v3299 = vsub.f32 %v121, %v3298
    %3300 = vmatpush1.msra.mxu0 %v3299
    %3301 = vmatprep.subr.mxu0 0.0
    %3302 = vmatpush1.msra.mxu0 0.0
    %3303 = vmatprep.subr.mxu0 0.0
    %3304 = vmatpush1.msra.mxu0 0.0
    %3305 = vmatprep.subr.mxu0 0.0
    %3306 = vmatpush1.msra.mxu0 0.0
    %3307 = vmatprep.subr.mxu0 0.0
    %3308 = vmatpush1.msra.mxu0 0.0
    %3309 = vmatprep.subr.mxu0 0.0
    %3310 = vmatpush1.msra.mxu0 0.0
    %3311 = vmatprep.subr.mxu0 0.0
    %3312 = vmatpush1.msra.mxu0 0.0
    %3313 = vmatprep.subr.mxu0 0.0
    %3314 = vmatpush1.msra.mxu0 0.0
    %3315 = vmatprep.subr.mxu0 0.0
    %3316 = vmatpush1.msra.mxu0 0.0
    %3317 = vmatprep.subr.mxu0 0.0
    %3318 = vmatpush1.msra.mxu0 0.0
    %3319 = vmatprep.subr.mxu0 0.0
    %3320 = vmatpush1.msra.mxu0 0.0
    %3321 = vmatprep.subr.mxu0 0.0
    %3322 = vmatpush1.msra.mxu0 0.0
    %3323 = vmatprep.subr.mxu0 0.0
    %3324 = vmatpush1.msra.mxu0 0.0
    %3325 = vmatprep.subr.mxu0 0.0
    %3326 = vmatpush1.msra.mxu0 0.0
    %3327 = vmatprep.subr.mxu0 0.0
    %3328 = vmatpush1.msra.mxu0 0.0
    %3329 = vmatprep.subr.mxu0 0.0
    %3330 = vmatpush1.msra.mxu0 0.0
    %3331 = vmatprep.subr.mxu0 0.0
    %3332 = vmatpush1.msra.mxu0 0.0
    %3333 = vmatprep.mubr.f32.mxu0 0.0
    %v3334 = vand.u32 %v1941, 4294901760
    %v3335 = vsub.f32 %v1941, %v3334
    %3336 = vmatmul.mubr.f32.gmra.mrb[0].mxu0 %v3335
    %v3337 = vpop.f32.mrb[0].mxu0
    %v3338 = vadd.f32 %v3194, %v3337
    %v3339 = vpop.f32.mrb[0].mxu0
    %v3340 = vadd.f32 %v3196, %v3339
    %3341 = vmatprep.mubr.f32.mxu0 0.0
    %v3342 = vand.u32 %v1942, 4294901760
    %v3343 = vsub.f32 %v1942, %v3342
    %3344 = vmatmul.mubr.f32.gmra.mrb[0].mxu0 %v3343
    %v3345 = vpop.f32.mrb[0].mxu0
    %v3346 = vadd.f32 %v3201, %v3345
    %v3347 = vpop.f32.mrb[0].mxu0
    %v3348 = vadd.f32 %v3203, %v3347
    %3349 = vdwg.mxu0
    %v3350 = vand.u32 %v62, 4294901760
    %3351 = vmatprep.subr.mxu0 %v3350
    %v3352 = vand.u32 %v61, 4294901760
    %3353 = vmatpush1.msra.mxu0 %v3352
    %v3354 = vand.u32 %v66, 4294901760
    %3355 = vmatprep.subr.mxu0 %v3354
    %v3356 = vand.u32 %v65, 4294901760
    %3357 = vmatpush1.msra.mxu0 %v3356
    %v3358 = vand.u32 %v70, 4294901760
    %3359 = vmatprep.subr.mxu0 %v3358
    %v3360 = vand.u32 %v69, 4294901760
    %3361 = vmatpush1.msra.mxu0 %v3360
    %v3362 = vand.u32 %v74, 4294901760
    %3363 = vmatprep.subr.mxu0 %v3362
    %v3364 = vand.u32 %v73, 4294901760
    %3365 = vmatpush1.msra.mxu0 %v3364
    %v3366 = vand.u32 %v78, 4294901760
    %3367 = vmatprep.subr.mxu0 %v3366
    %v3368 = vand.u32 %v77, 4294901760
    %3369 = vmatpush1.msra.mxu0 %v3368
    %v3370 = vand.u32 %v82, 4294901760
    %3371 = vmatprep.subr.mxu0 %v3370
    %v3372 = vand.u32 %v81, 4294901760
    %3373 = vmatpush1.msra.mxu0 %v3372
    %v3374 = vand.u32 %v86, 4294901760
    %3375 = vmatprep.subr.mxu0 %v3374
    %v3376 = vand.u32 %v85, 4294901760
    %3377 = vmatpush1.msra.mxu0 %v3376
    %v3378 = vand.u32 %v90, 4294901760
    %3379 = vmatprep.subr.mxu0 %v3378
    %v3380 = vand.u32 %v89, 4294901760
    %3381 = vmatpush1.msra.mxu0 %v3380
    %v3382 = vand.u32 %v94, 4294901760
    %3383 = vmatprep.subr.mxu0 %v3382
    %v3384 = vand.u32 %v93, 4294901760
    %3385 = vmatpush1.msra.mxu0 %v3384
    %v3386 = vand.u32 %v98, 4294901760
    %3387 = vmatprep.subr.mxu0 %v3386
    %v3388 = vand.u32 %v97, 4294901760
    %3389 = vmatpush1.msra.mxu0 %v3388
    %v3390 = vand.u32 %v102, 4294901760
    %3391 = vmatprep.subr.mxu0 %v3390
    %v3392 = vand.u32 %v101, 4294901760
    %3393 = vmatpush1.msra.mxu0 %v3392
    %v3394 = vand.u32 %v106, 4294901760
    %3395 = vmatprep.subr.mxu0 %v3394
    %v3396 = vand.u32 %v105, 4294901760
    %3397 = vmatpush1.msra.mxu0 %v3396
    %v3398 = vand.u32 %v110, 4294901760
    %3399 = vmatprep.subr.mxu0 %v3398
    %v3400 = vand.u32 %v109, 4294901760
    %3401 = vmatpush1.msra.mxu0 %v3400
    %v3402 = vand.u32 %v114, 4294901760
    %3403 = vmatprep.subr.mxu0 %v3402
    %v3404 = vand.u32 %v113, 4294901760
    %3405 = vmatpush1.msra.mxu0 %v3404
    %v3406 = vand.u32 %v118, 4294901760
    %3407 = vmatprep.subr.mxu0 %v3406
    %v3408 = vand.u32 %v117, 4294901760
    %3409 = vmatpush1.msra.mxu0 %v3408
    %v3410 = vand.u32 %v122, 4294901760
    %3411 = vmatprep.subr.mxu0 %v3410
    %v3412 = vand.u32 %v121, 4294901760
    %3413 = vmatpush1.msra.mxu0 %v3412
    %3414 = vmatprep.subr.mxu0 0.0
    %3415 = vmatpush1.msra.mxu0 0.0
    %3416 = vmatprep.subr.mxu0 0.0
    %3417 = vmatpush1.msra.mxu0 0.0
    %3418 = vmatprep.subr.mxu0 0.0
    %3419 = vmatpush1.msra.mxu0 0.0
    %3420 = vmatprep.subr.mxu0 0.0
    %3421 = vmatpush1.msra.mxu0 0.0
    %3422 = vmatprep.subr.mxu0 0.0
    %3423 = vmatpush1.msra.mxu0 0.0
    %3424 = vmatprep.subr.mxu0 0.0
    %3425 = vmatpush1.msra.mxu0 0.0
    %3426 = vmatprep.subr.mxu0 0.0
    %3427 = vmatpush1.msra.mxu0 0.0
    %3428 = vmatprep.subr.mxu0 0.0
    %3429 = vmatpush1.msra.mxu0 0.0
    %3430 = vmatprep.subr.mxu0 0.0
    %3431 = vmatpush1.msra.mxu0 0.0
    %3432 = vmatprep.subr.mxu0 0.0
    %3433 = vmatpush1.msra.mxu0 0.0
    %3434 = vmatprep.subr.mxu0 0.0
    %3435 = vmatpush1.msra.mxu0 0.0
    %3436 = vmatprep.subr.mxu0 0.0
    %3437 = vmatpush1.msra.mxu0 0.0
    %3438 = vmatprep.subr.mxu0 0.0
    %3439 = vmatpush1.msra.mxu0 0.0
    %3440 = vmatprep.subr.mxu0 0.0
    %3441 = vmatpush1.msra.mxu0 0.0
    %3442 = vmatprep.subr.mxu0 0.0
    %3443 = vmatpush1.msra.mxu0 0.0
    %3444 = vmatprep.subr.mxu0 0.0
    %3445 = vmatpush1.msra.mxu0 0.0
    %3446 = vmatprep.mubr.f32.mxu0 0.0
    %v3447 = vand.u32 %v1941, 4294901760
    %v3448 = vsub.f32 %v1941, %v3447
    %v3449 = vand.u32 %v3448, 4294901760
    %3450 = vmatmul.mubr.f32.gmra.mrb[0].mxu0 %v3449
    %v3451 = vpop.f32.mrb[0].mxu0
    %v3452 = vadd.f32 %v3338, %v3451
    %v3453 = vpop.f32.mrb[0].mxu0
    %v3454 = vadd.f32 %v3340, %v3453
    %3455 = vmatprep.mubr.f32.mxu0 0.0
    %v3456 = vand.u32 %v1942, 4294901760
    %v3457 = vsub.f32 %v1942, %v3456
    %v3458 = vand.u32 %v3457, 4294901760
    %3459 = vmatmul.mubr.f32.gmra.mrb[0].mxu0 %v3458
    %v3460 = vpop.f32.mrb[0].mxu0
    %v3461 = vadd.f32 %v3346, %v3460
    %v3462 = vpop.f32.mrb[0].mxu0
    %v3463 = vadd.f32 %v3348, %v3462
    %3464 = vdwg.mxu0
    %v3465 = vand.u32 %v62, 4294901760
    %v3466 = vsub.f32 %v62, %v3465
    %v3467 = vand.u32 %v3466, 4294901760
    %3468 = vmatprep.subr.mxu0 %v3467
    %v3469 = vand.u32 %v61, 4294901760
    %v3470 = vsub.f32 %v61, %v3469
    %v3471 = vand.u32 %v3470, 4294901760
    %3472 = vmatpush1.msra.mxu0 %v3471
    %v3473 = vand.u32 %v66, 4294901760
    %v3474 = vsub.f32 %v66, %v3473
    %v3475 = vand.u32 %v3474, 4294901760
    %3476 = vmatprep.subr.mxu0 %v3475
    %v3477 = vand.u32 %v65, 4294901760
    %v3478 = vsub.f32 %v65, %v3477
    %v3479 = vand.u32 %v3478, 4294901760
    %3480 = vmatpush1.msra.mxu0 %v3479
    %v3481 = vand.u32 %v70, 4294901760
    %v3482 = vsub.f32 %v70, %v3481
    %v3483 = vand.u32 %v3482, 4294901760
    %3484 = vmatprep.subr.mxu0 %v3483
    %v3485 = vand.u32 %v69, 4294901760
    %v3486 = vsub.f32 %v69, %v3485
    %v3487 = vand.u32 %v3486, 4294901760
    %3488 = vmatpush1.msra.mxu0 %v3487
    %v3489 = vand.u32 %v74, 4294901760
    %v3490 = vsub.f32 %v74, %v3489
    %v3491 = vand.u32 %v3490, 4294901760
    %3492 = vmatprep.subr.mxu0 %v3491
    %v3493 = vand.u32 %v73, 4294901760
    %v3494 = vsub.f32 %v73, %v3493
    %v3495 = vand.u32 %v3494, 4294901760
    %3496 = vmatpush1.msra.mxu0 %v3495
    %v3497 = vand.u32 %v78, 4294901760
    %v3498 = vsub.f32 %v78, %v3497
    %v3499 = vand.u32 %v3498, 4294901760
    %3500 = vmatprep.subr.mxu0 %v3499
    %v3501 = vand.u32 %v77, 4294901760
    %v3502 = vsub.f32 %v77, %v3501
    %v3503 = vand.u32 %v3502, 4294901760
    %3504 = vmatpush1.msra.mxu0 %v3503
    %v3505 = vand.u32 %v82, 4294901760
    %v3506 = vsub.f32 %v82, %v3505
    %v3507 = vand.u32 %v3506, 4294901760
    %3508 = vmatprep.subr.mxu0 %v3507
    %v3509 = vand.u32 %v81, 4294901760
    %v3510 = vsub.f32 %v81, %v3509
    %v3511 = vand.u32 %v3510, 4294901760
    %3512 = vmatpush1.msra.mxu0 %v3511
    %v3513 = vand.u32 %v86, 4294901760
    %v3514 = vsub.f32 %v86, %v3513
    %v3515 = vand.u32 %v3514, 4294901760
    %3516 = vmatprep.subr.mxu0 %v3515
    %v3517 = vand.u32 %v85, 4294901760
    %v3518 = vsub.f32 %v85, %v3517
    %v3519 = vand.u32 %v3518, 4294901760
    %3520 = vmatpush1.msra.mxu0 %v3519
    %v3521 = vand.u32 %v90, 4294901760
    %v3522 = vsub.f32 %v90, %v3521
    %v3523 = vand.u32 %v3522, 4294901760
    %3524 = vmatprep.subr.mxu0 %v3523
    %v3525 = vand.u32 %v89, 4294901760
    %v3526 = vsub.f32 %v89, %v3525
    %v3527 = vand.u32 %v3526, 4294901760
    %3528 = vmatpush1.msra.mxu0 %v3527
    %v3529 = vand.u32 %v94, 4294901760
    %v3530 = vsub.f32 %v94, %v3529
    %v3531 = vand.u32 %v3530, 4294901760
    %3532 = vmatprep.subr.mxu0 %v3531
    %v3533 = vand.u32 %v93, 4294901760
    %v3534 = vsub.f32 %v93, %v3533
    %v3535 = vand.u32 %v3534, 4294901760
    %3536 = vmatpush1.msra.mxu0 %v3535
    %v3537 = vand.u32 %v98, 4294901760
    %v3538 = vsub.f32 %v98, %v3537
    %v3539 = vand.u32 %v3538, 4294901760
    %3540 = vmatprep.subr.mxu0 %v3539
    %v3541 = vand.u32 %v97, 4294901760
    %v3542 = vsub.f32 %v97, %v3541
    %v3543 = vand.u32 %v3542, 4294901760
    %3544 = vmatpush1.msra.mxu0 %v3543
    %v3545 = vand.u32 %v102, 4294901760
    %v3546 = vsub.f32 %v102, %v3545
    %v3547 = vand.u32 %v3546, 4294901760
    %3548 = vmatprep.subr.mxu0 %v3547
    %v3549 = vand.u32 %v101, 4294901760
    %v3550 = vsub.f32 %v101, %v3549
    %v3551 = vand.u32 %v3550, 4294901760
    %3552 = vmatpush1.msra.mxu0 %v3551
    %v3553 = vand.u32 %v106, 4294901760
    %v3554 = vsub.f32 %v106, %v3553
    %v3555 = vand.u32 %v3554, 4294901760
    %3556 = vmatprep.subr.mxu0 %v3555
    %v3557 = vand.u32 %v105, 4294901760
    %v3558 = vsub.f32 %v105, %v3557
    %v3559 = vand.u32 %v3558, 4294901760
    %3560 = vmatpush1.msra.mxu0 %v3559
    %v3561 = vand.u32 %v110, 4294901760
    %v3562 = vsub.f32 %v110, %v3561
    %v3563 = vand.u32 %v3562, 4294901760
    %3564 = vmatprep.subr.mxu0 %v3563
    %v3565 = vand.u32 %v109, 4294901760
    %v3566 = vsub.f32 %v109, %v3565
    %v3567 = vand.u32 %v3566, 4294901760
    %3568 = vmatpush1.msra.mxu0 %v3567
    %v3569 = vand.u32 %v114, 4294901760
    %v3570 = vsub.f32 %v114, %v3569
    %v3571 = vand.u32 %v3570, 4294901760
    %3572 = vmatprep.subr.mxu0 %v3571
    %v3573 = vand.u32 %v113, 4294901760
    %v3574 = vsub.f32 %v113, %v3573
    %v3575 = vand.u32 %v3574, 4294901760
    %3576 = vmatpush1.msra.mxu0 %v3575
    %v3577 = vand.u32 %v118, 4294901760
    %v3578 = vsub.f32 %v118, %v3577
    %v3579 = vand.u32 %v3578, 4294901760
    %3580 = vmatprep.subr.mxu0 %v3579
    %v3581 = vand.u32 %v117, 4294901760
    %v3582 = vsub.f32 %v117, %v3581
    %v3583 = vand.u32 %v3582, 4294901760
    %3584 = vmatpush1.msra.mxu0 %v3583
    %v3585 = vand.u32 %v122, 4294901760
    %v3586 = vsub.f32 %v122, %v3585
    %v3587 = vand.u32 %v3586, 4294901760
    %3588 = vmatprep.subr.mxu0 %v3587
    %v3589 = vand.u32 %v121, 4294901760
    %v3590 = vsub.f32 %v121, %v3589
    %v3591 = vand.u32 %v3590, 4294901760
    %3592 = vmatpush1.msra.mxu0 %v3591
    %3593 = vmatprep.subr.mxu0 0.0
    %3594 = vmatpush1.msra.mxu0 0.0
    %3595 = vmatprep.subr.mxu0 0.0
    %3596 = vmatpush1.msra.mxu0 0.0
    %3597 = vmatprep.subr.mxu0 0.0
    %3598 = vmatpush1.msra.mxu0 0.0
    %3599 = vmatprep.subr.mxu0 0.0
    %3600 = vmatpush1.msra.mxu0 0.0
    %3601 = vmatprep.subr.mxu0 0.0
    %3602 = vmatpush1.msra.mxu0 0.0
    %3603 = vmatprep.subr.mxu0 0.0
    %3604 = vmatpush1.msra.mxu0 0.0
    %3605 = vmatprep.subr.mxu0 0.0
    %3606 = vmatpush1.msra.mxu0 0.0
    %3607 = vmatprep.subr.mxu0 0.0
    %3608 = vmatpush1.msra.mxu0 0.0
    %3609 = vmatprep.subr.mxu0 0.0
    %3610 = vmatpush1.msra.mxu0 0.0
    %3611 = vmatprep.subr.mxu0 0.0
    %3612 = vmatpush1.msra.mxu0 0.0
    %3613 = vmatprep.subr.mxu0 0.0
    %3614 = vmatpush1.msra.mxu0 0.0
    %3615 = vmatprep.subr.mxu0 0.0
    %3616 = vmatpush1.msra.mxu0 0.0
    %3617 = vmatprep.subr.mxu0 0.0
    %3618 = vmatpush1.msra.mxu0 0.0
    %3619 = vmatprep.subr.mxu0 0.0
    %3620 = vmatpush1.msra.mxu0 0.0
    %3621 = vmatprep.subr.mxu0 0.0
    %3622 = vmatpush1.msra.mxu0 0.0
    %3623 = vmatprep.subr.mxu0 0.0
    %3624 = vmatpush1.msra.mxu0 0.0
    %3625 = vmatprep.mubr.f32.mxu0 0.0
    %v3626 = vand.u32 %v1941, 4294901760
    %3627 = vmatmul.mubr.f32.gmra.mrb[0].mxu0 %v3626
    %v3628 = vpop.f32.mrb[0].mxu0
    %v3629 = vadd.f32 %v3452, %v3628
    %v3630 = vpop.f32.mrb[0].mxu0
    %v3631 = vadd.f32 %v3454, %v3630
    %3632 = vmatprep.mubr.f32.mxu0 0.0
    %v3633 = vand.u32 %v1942, 4294901760
    %3634 = vmatmul.mubr.f32.gmra.mrb[0].mxu0 %v3633
    %v3635 = vpop.f32.mrb[0].mxu0
    %v3636 = vadd.f32 %v3461, %v3635
    %v3637 = vpop.f32.mrb[0].mxu0
    %v3638 = vadd.f32 %v3463, %v3637
    %3639 = vdwg.mxu0
    %v3640 = vand.u32 %v62, 4294901760
    %3641 = vmatprep.subr.mxu0 %v3640
    %v3642 = vand.u32 %v61, 4294901760
    %3643 = vmatpush1.msra.mxu0 %v3642
    %v3644 = vand.u32 %v66, 4294901760
    %3645 = vmatprep.subr.mxu0 %v3644
    %v3646 = vand.u32 %v65, 4294901760
    %3647 = vmatpush1.msra.mxu0 %v3646
    %v3648 = vand.u32 %v70, 4294901760
    %3649 = vmatprep.subr.mxu0 %v3648
    %v3650 = vand.u32 %v69, 4294901760
    %3651 = vmatpush1.msra.mxu0 %v3650
    %v3652 = vand.u32 %v74, 4294901760
    %3653 = vmatprep.subr.mxu0 %v3652
    %v3654 = vand.u32 %v73, 4294901760
    %3655 = vmatpush1.msra.mxu0 %v3654
    %v3656 = vand.u32 %v78, 4294901760
    %3657 = vmatprep.subr.mxu0 %v3656
    %v3658 = vand.u32 %v77, 4294901760
    %3659 = vmatpush1.msra.mxu0 %v3658
    %v3660 = vand.u32 %v82, 4294901760
    %3661 = vmatprep.subr.mxu0 %v3660
    %v3662 = vand.u32 %v81, 4294901760
    %3663 = vmatpush1.msra.mxu0 %v3662
    %v3664 = vand.u32 %v86, 4294901760
    %3665 = vmatprep.subr.mxu0 %v3664
    %v3666 = vand.u32 %v85, 4294901760
    %3667 = vmatpush1.msra.mxu0 %v3666
    %v3668 = vand.u32 %v90, 4294901760
    %3669 = vmatprep.subr.mxu0 %v3668
    %v3670 = vand.u32 %v89, 4294901760
    %3671 = vmatpush1.msra.mxu0 %v3670
    %v3672 = vand.u32 %v94, 4294901760
    %3673 = vmatprep.subr.mxu0 %v3672
    %v3674 = vand.u32 %v93, 4294901760
    %3675 = vmatpush1.msra.mxu0 %v3674
    %v3676 = vand.u32 %v98, 4294901760
    %3677 = vmatprep.subr.mxu0 %v3676
    %v3678 = vand.u32 %v97, 4294901760
    %3679 = vmatpush1.msra.mxu0 %v3678
    %v3680 = vand.u32 %v102, 4294901760
    %3681 = vmatprep.subr.mxu0 %v3680
    %v3682 = vand.u32 %v101, 4294901760
    %3683 = vmatpush1.msra.mxu0 %v3682
    %v3684 = vand.u32 %v106, 4294901760
    %3685 = vmatprep.subr.mxu0 %v3684
    %v3686 = vand.u32 %v105, 4294901760
    %3687 = vmatpush1.msra.mxu0 %v3686
    %v3688 = vand.u32 %v110, 4294901760
    %3689 = vmatprep.subr.mxu0 %v3688
    %v3690 = vand.u32 %v109, 4294901760
    %3691 = vmatpush1.msra.mxu0 %v3690
    %v3692 = vand.u32 %v114, 4294901760
    %3693 = vmatprep.subr.mxu0 %v3692
    %v3694 = vand.u32 %v113, 4294901760
    %3695 = vmatpush1.msra.mxu0 %v3694
    %v3696 = vand.u32 %v118, 4294901760
    %3697 = vmatprep.subr.mxu0 %v3696
    %v3698 = vand.u32 %v117, 4294901760
    %3699 = vmatpush1.msra.mxu0 %v3698
    %v3700 = vand.u32 %v122, 4294901760
    %3701 = vmatprep.subr.mxu0 %v3700
    %v3702 = vand.u32 %v121, 4294901760
    %3703 = vmatpush1.msra.mxu0 %v3702
    %3704 = vmatprep.subr.mxu0 0.0
    %3705 = vmatpush1.msra.mxu0 0.0
    %3706 = vmatprep.subr.mxu0 0.0
    %3707 = vmatpush1.msra.mxu0 0.0
    %3708 = vmatprep.subr.mxu0 0.0
    %3709 = vmatpush1.msra.mxu0 0.0
    %3710 = vmatprep.subr.mxu0 0.0
    %3711 = vmatpush1.msra.mxu0 0.0
    %3712 = vmatprep.subr.mxu0 0.0
    %3713 = vmatpush1.msra.mxu0 0.0
    %3714 = vmatprep.subr.mxu0 0.0
    %3715 = vmatpush1.msra.mxu0 0.0
    %3716 = vmatprep.subr.mxu0 0.0
    %3717 = vmatpush1.msra.mxu0 0.0
    %3718 = vmatprep.subr.mxu0 0.0
    %3719 = vmatpush1.msra.mxu0 0.0
    %3720 = vmatprep.subr.mxu0 0.0
    %3721 = vmatpush1.msra.mxu0 0.0
    %3722 = vmatprep.subr.mxu0 0.0
    %3723 = vmatpush1.msra.mxu0 0.0
    %3724 = vmatprep.subr.mxu0 0.0
    %3725 = vmatpush1.msra.mxu0 0.0
    %3726 = vmatprep.subr.mxu0 0.0
    %3727 = vmatpush1.msra.mxu0 0.0
    %3728 = vmatprep.subr.mxu0 0.0
    %3729 = vmatpush1.msra.mxu0 0.0
    %3730 = vmatprep.subr.mxu0 0.0
    %3731 = vmatpush1.msra.mxu0 0.0
    %3732 = vmatprep.subr.mxu0 0.0
    %3733 = vmatpush1.msra.mxu0 0.0
    %3734 = vmatprep.subr.mxu0 0.0
    %3735 = vmatpush1.msra.mxu0 0.0
    %3736 = vmatprep.mubr.f32.mxu0 0.0
    %v3737 = vand.u32 %v1941, 4294901760
    %3738 = vmatmul.mubr.f32.gmra.mrb[0].mxu0 %v3737
    %v3739 = vpop.f32.mrb[0].mxu0
    %v3740 = vadd.f32 %v3629, %v3739
    %v3741 = vpop.f32.mrb[0].mxu0
    %v3742 = vadd.f32 %v3631, %v3741
    %3743 = vmatprep.mubr.f32.mxu0 0.0
    %v3744 = vand.u32 %v1942, 4294901760
    %3745 = vmatmul.mubr.f32.gmra.mrb[0].mxu0 %v3744
    %v3746 = vpop.f32.mrb[0].mxu0
    %v3747 = vadd.f32 %v3636, %v3746
    %v3748 = vpop.f32.mrb[0].mxu0
    %v3749 = vadd.f32 %v3638, %v3748
    %3750 = vdwg.mxu0
    %3751 = vst [vmem:[#allocation9] sm:$0xff] %v2836
    %3752 = vst [vmem:[#allocation9 + $0x8] sm:$0xff] %v2838
    %3753 = vst [vmem:[#allocation9 + $0x10] sm:$0xff] %v3740
    %3754 = vst [vmem:[#allocation9 + $0x18] sm:$0xff] %v3742
    %3755 = vst [vmem:[#allocation9 + $0x20] sm:$0xff] %v2843
    %3756 = vst [vmem:[#allocation9 + $0x28] sm:$0xff] %v2845
    %3757 = vst [vmem:[#allocation9 + $0x30] sm:$0xff] %v3747
    %3758 = vst [vmem:[#allocation9 + $0x38] sm:$0xff] %v3749
    // Predicated region
    $region26: #{tpu_custom_call.1} parent=1 // pred_check
      _
    $region27: #{tpu_custom_call.1} parent=1 // pred_check_branch
      %3760 = sbr.rel (0) target = $region29
    $region28: #{tpu_custom_call.1} parent=1 // pred_region
      %s3762 = ssub.s32 1024, 1024
      %3763 = vsyncadd [#allocation4], %s3762
      %s3764 = sshll.u32 [#allocation8], 4
      %s3765 = int_to_ptr.vmem [resolvable:$true] %s3764
      %3770 = dma.vmem_to_hbm [thread:$0]  %s3765, 1024, %s3, [#allocation4], 512, 512, 32
    $region29: #{tpu_custom_call.1} parent=1 // pred_fallthru
      _
    // Predicated region
    $region30: #{tpu_custom_call.1} parent=1 // pred_check
      _
    $region31: #{tpu_custom_call.1} parent=1 // pred_check_branch
      %3772 = sbr.rel (0) target = $region33
    $region32: #{tpu_custom_call.1} parent=1 // pred_region
      %s3774 = ssub.s32 1024, 1024
      %3775 = vsyncadd [#allocation10], %s3774
      %s3776 = sshll.u32 [#allocation9], 4
      %s3777 = int_to_ptr.vmem [resolvable:$true] %s3776
      %3782 = dma.vmem_to_hbm [thread:$0]  %s3777, 1024, %s4, [#allocation10], 512, 512, 32
    $region33: #{tpu_custom_call.1} parent=1 // pred_fallthru
      _
    // Predicated region
    $region34: #{tpu_custom_call.1} parent=1 // pred_check
      _
    $region35: #{tpu_custom_call.1} parent=1 // pred_check_branch
      %3784 = sbr.rel (0) target = $region37
    $region36: #{tpu_custom_call.1} parent=1 // pred_region
      %3785 = dma.done [#allocation4], 1024
    $region37: #{tpu_custom_call.1} parent=1 // pred_fallthru
      _
    // Predicated region
    $region38: #{tpu_custom_call.1} parent=1 // pred_check
      _
    $region39: #{tpu_custom_call.1} parent=1 // pred_check_branch
      %3787 = sbr.rel (0) target = $region41
    $region40: #{tpu_custom_call.1} parent=1 // pred_region
      %3788 = dma.done [#allocation10], 1024
    $region41: #{tpu_custom_call.1} parent=1 // pred_fallthru
      _
    %3789 = vsyncpa [#allocation3], 1
    %3790 = vsyncpa [#allocation6], 1
    %3791 = vsyncpa [#allocation4], 1
    %3792 = vsyncpa [#allocation10], 1

</llo_original>
